<compile_context>
chip_gen: v7x
topology: tpu7x:2x2x1
jax: 0.10.0
libtpu: 0.0.40
codegen_flags: <defaults>
</compile_context>

<pallas_src>
from functools import partial

import numpy as np
import jax
import jax.numpy as jnp
from jax import lax
from jax.experimental import pallas as pl
from jax.experimental.pallas import tpu as pltpu

# ---------------- hyper-parameters (match the PyTorch module __init__) --------
C   = 4                      # in_planes (features per joint) == Conv1d channels
HID = 2                      # hidden_size -> H = int(in_planes * hidden_size)
H   = int(C * HID)
K1  = 5                      # first conv kernel (odd)
K2  = 3                      # second conv kernel
PAD = (K1 - 1) // 2 + 1      # ReplicationPad1d pad_l == pad_r == 3
L   = 8                      # joints per group (len(list_left) etc.)
L1  = L + 2 * PAD - K1 + 1   # = 10 after pad + conv1
L2  = L1 - K2 + 1            # = 8  after conv2 (== L)
NJ  = 22                     # joints referenced by the index lists
GRP = C * L                  # 32, one flattened joint-group
DTYPE = jnp.float32

LIST_LEFT  = [2, 5, 8, 11, 14, 17, 19, 21]
LIST_RIGHT = [3, 4, 7, 10, 13, 16, 18, 20]
LIST_UP    = [13, 14, 16, 17, 18, 19, 20, 21]
LIST_DOWN  = [1, 2, 4, 5, 7, 8, 10, 11]

# conv-stack slots inside one Interactor
PHI, PSI, U_IDX, P_IDX = 0, 1, 2, 3

LANE_UNIT = 256    # lane-tile quantum: >= v6e/v7x MXU N-width, multiple of 128
TB_MAX    = 1024   # lane-tile cap (peak in-kernel VMEM stays ~4 MiB)


# ---------------- static (param-independent) structure matrices ---------------
def _static_structs():
    # pad+conv1 tap structure: p1[l, k, j] = 1 iff padded tap (l+k) reads x[:, j]
    p1 = np.zeros((L1, K1, L), np.float32)
    for l in range(L1):
        for k in range(K1):
            p1[l, k, min(max(l + k - PAD, 0), L - 1)] += 1.0
    # conv2 tap structure (no padding)
    p2 = np.zeros((L2, K2, L1), np.float32)
    for m in range(L2):
        for k in range(K2):
            p2[m, k, m + k] = 1.0

    pos_l = {j: i for i, j in enumerate(LIST_LEFT)}
    pos_r = {j: i for i, j in enumerate(LIST_RIGHT)}
    pos_u = {j: i for i, j in enumerate(LIST_UP)}
    pos_d = {j: i for i, j in enumerate(LIST_DOWN)}

    # x_full(88) -> [x_left; x_right] (64), flattened as ch*L + group_pos
    g1 = np.zeros((2 * GRP, NJ * C), np.float32)
    for half, lst in enumerate((LIST_LEFT, LIST_RIGHT)):
        for l, j in enumerate(lst):
            for ch in range(C):
                g1[half * GRP + ch * L + l, j * C + ch] = 1.0

    # assemble [x_up; x_down] from interact_1 outputs ([new_left; new_right])
    # and the untouched joints of the original x (scatter + re-gather fused).
    g2a = np.zeros((2 * GRP, 2 * GRP), np.float32)
    g2b = np.zeros((2 * GRP, NJ * C), np.float32)
    for half, lst in enumerate((LIST_UP, LIST_DOWN)):
        for l, j in enumerate(lst):
            for ch in range(C):
                dst = half * GRP + ch * L + l
                if j in pos_l:
                    g2a[dst, ch * L + pos_l[j]] = 1.0
                elif j in pos_r:
                    g2a[dst, GRP + ch * L + pos_r[j]] = 1.0
                else:
                    g2b[dst, j * C + ch] = 1.0

    # final scatter back to the (22*C) layout: up/down overwrite left/right,
    # joints in no list keep the original values.
    f1 = np.zeros((NJ * C, 2 * GRP), np.float32)   # from [new_up; new_down]
    f2 = np.zeros((NJ * C, 2 * GRP), np.float32)   # from [new_left; new_right]
    f3 = np.zeros((NJ * C, NJ * C), np.float32)    # untouched joints
    for j in range(NJ):
        for ch in range(C):
            dst = j * C + ch
            if j in pos_u:
                f1[dst, ch * L + pos_u[j]] = 1.0
            elif j in pos_d:
                f1[dst, GRP + ch * L + pos_d[j]] = 1.0
            elif j in pos_l:
                f2[dst, ch * L + pos_l[j]] = 1.0
            elif j in pos_r:
                f2[dst, GRP + ch * L + pos_r[j]] = 1.0
            else:
                f3[dst, dst] = 1.0
    return tuple(jnp.asarray(a) for a in (p1, p2, g1, g2a, g2b, f1, f2, f3))


(_P1, _P2, _G1, _G2A, _G2B, _F1, _F2, _F3) = _static_structs()


# ---------------- fold one Interactor's params into dense matrices ------------
def _block_diag(a, b):
    return jnp.concatenate(
        [jnp.concatenate([a, jnp.zeros((a.shape[0], b.shape[1]), DTYPE)], 1),
         jnp.concatenate([jnp.zeros((b.shape[0], a.shape[1]), DTYPE), b], 1)], 0)


def _interactor_mats(p, cdt):
    """Fold pad+conv1 / conv2 / choose into dense matrices on flattened
    (channel*L) group vectors.

    Stage A is anti-block-diagonal so that ea = [psi(x2); phi(x1)] and
    dc = xg * exp(ea) = [c; d] directly (no half-swap in the kernel).
    Stage B is block-diag(P, U) so up = [P(c); U(d)].
    The two choose Linears are one (64,128) matmul on [dc; up]."""
    m1 = [jnp.einsum('hck,lkj->hlcj', p['w1'][s], _P1).reshape(H * L1, GRP)
          for s in range(4)]
    m2 = [jnp.einsum('chk,mkj->cmhj', p['w2'][s], _P2).reshape(C * L2, H * L1)
          for s in range(4)]
    b1r = [jnp.repeat(p['b1'][s], L1)[:, None] for s in range(4)]
    b2r = [jnp.repeat(p['b2'][s], L2)[:, None] for s in range(4)]

    zh = jnp.zeros((H * L1, GRP), DTYPE)
    w1a = jnp.concatenate([jnp.concatenate([zh, m1[PSI]], 1),
                           jnp.concatenate([m1[PHI], zh], 1)], 0)      # (160,64)
    w2a = _block_diag(m2[PSI], m2[PHI])                                # (64,160)
    w1b = _block_diag(m1[P_IDX], m1[U_IDX])                            # (160,64)
    w2b = _block_diag(m2[P_IDX], m2[U_IDX])                            # (64,160)
    b1a = jnp.concatenate([b1r[PSI], b1r[PHI]])
    b2a = jnp.concatenate([b2r[PSI], b2r[PHI]])
    b1b = jnp.concatenate([b1r[P_IDX], b1r[U_IDX]])
    b2b = jnp.concatenate([b2r[P_IDX], b2r[U_IDX]])

    eye_c = jnp.eye(C, dtype=DTYPE)
    k1a = jnp.kron(eye_c, p['cw'][0][:, :L])   # choose_1 on c
    k1b = jnp.kron(eye_c, p['cw'][0][:, L:])   # choose_1 on U(d)
    k2a = jnp.kron(eye_c, p['cw'][1][:, :L])   # choose_2 on d
    k2b = jnp.kron(eye_c, p['cw'][1][:, L:])   # choose_2 on P(c)
    z = jnp.zeros((GRP, GRP), DTYPE)
    # dcup = [c; d; P(c); U(d)]  ->  [o1; o2] = wch @ dcup + bch
    wch = jnp.concatenate([jnp.concatenate([k1a, z, z, k1b], 1),
                           jnp.concatenate([z, k2a, k2b, z], 1)], 0)   # (64,128)
    bch = jnp.concatenate([jnp.tile(p['cb'][0], C),
                           jnp.tile(p['cb'][1], C)])[:, None]          # (64,1)

    w1 = jnp.stack([w1a, w1b]).astype(cdt)          # (2,160,64)
    w2 = jnp.stack([w2a, w2b]).astype(cdt)          # (2,64,160)
    b1 = jnp.stack([b1a, b1b])                      # (2,160,1) f32
    b2 = jnp.stack([b2a, b2b, bch])                 # (3,64,1)  f32 (slot 2 = choose)
    return w1, b1, w2, b2, wch.astype(cdt)


# ------------------------------- Pallas kernel --------------------------------
def _encoder_kernel(x_ref, w1_ref, b1_ref, w2_ref, b2_ref, wch_ref,
                    g1_ref, g2_ref, ff_ref, o_ref):
    cdt = g1_ref.dtype                         # matmul operand dtype (bf16/f32)
    xf = x_ref[...]                            # (88, TB) cdt, batch on lanes

    def dot(a, b):                             # MXU, always f32 accumulation
        return jnp.dot(a, b.astype(a.dtype), preferred_element_type=jnp.float32)

    def conv_pair(i, s, xg):
        # two fused [rep-pad -> conv1(k=5) -> LeakyReLU -> conv2(k=3) -> tanh]
        # stacks as two matmuls (weight pairing precomputed in the wrapper)
        y = dot(w1_ref[i, s], xg) + b1_ref[i, s]         # (160, TB) f32
        y = jnp.where(y >= 0.0, y, 0.01 * y)             # LeakyReLU(0.01)
        # TODO(synk): nn.Dropout(p) only acts in training; eval identity here.
        z = dot(w2_ref[i, s], y) + b2_ref[i, s]          # (64, TB) f32
        return jnp.tanh(z)

    def interactor(i, xg):                               # xg = [x1_flat; x2_flat]
        ea = conv_pair(i, 0, xg)                         # [psi(x2); phi(x1)]
        dc = xg * jnp.exp(ea)                            # [c; d]   (no half-swap)
        up = conv_pair(i, 1, dc)                         # [P(c); U(d)]
        dcup = jnp.concatenate([dc, up], axis=0)         # (128, TB)
        return dot(wch_ref[i], dcup) + b2_ref[i, 2]      # fused choose_1/choose_2

    oc1 = interactor(0, dot(g1_ref[...], xf))                # [new_left; new_right]
    s1 = jnp.concatenate([oc1.astype(cdt), xf], axis=0)      # (152, TB) = [oc1; xf]
    oc2 = interactor(1, dot(g2_ref[...], s1))                # [new_up; new_down]
    s2 = jnp.concatenate([oc2.astype(cdt), s1], axis=0)      # (216, TB) = [oc2; oc1; xf]
    o_ref[...] = dot(ff_ref[...], s2).astype(o_ref.dtype)    # fused final scatter


# ------------------------------ tiling / wrapper -------------------------------
def _num_tensorcores():
    """TensorCores one pallas_call's 'parallel' grid axis is sharded across."""
    try:
        kind = jax.devices()[0].device_kind.lower()
    except Exception:
        return 1
    return 2 if any(t in kind for t in ("v7", "v5p", "v4")) else 1


def _pick_tiles(batch, ncores):
    """Lane tile TB (multiple of 256, <= TB_MAX) and padded batch such that the
    grid-step count is a multiple of ncores (even split on 2-TC chips) and 1 on
    single-core chips whenever the batch fits a single slab."""
    units = max(1, -(-batch // LANE_UNIT))
    steps = ncores
    while -(-units // steps) * LANE_UNIT > TB_MAX:
        steps += ncores
    tb = -(-units // steps) * LANE_UNIT
    return tb, steps * tb


def _const_spec(a):
    n = a.ndim
    return pl.BlockSpec(a.shape, lambda b, _n=n: (0,) * _n)


@partial(jax.jit, static_argnames=("use_bf16",))
def encoder_tree_forward(params1, params2, x, use_bf16=True):
    """x: (B, NJ, C). Same in-place-update semantics as the PyTorch forward.
    use_bf16=True : bf16 MXU operands (f32 accumulate / f32 nonlinearities).
    use_bf16=False: all-f32 path, used for the tight structural check."""
    B = x.shape[0]
    cdt = jnp.bfloat16 if use_bf16 else DTYPE

    mats = [_interactor_mats(p, cdt) for p in (params1, params2)]
    w1, b1, w2, b2, wch = (jnp.stack(t) for t in zip(*mats))
    g1 = _G1.astype(cdt)                                        # (64, 88)  on xf
    g2 = jnp.concatenate([_G2A, _G2B], axis=1).astype(cdt)      # (64, 152) on [oc1; xf]
    ff = jnp.concatenate([_F1, _F2, _F3], axis=1).astype(cdt)   # (88, 216) on [oc2; oc1; xf]

    tb, b_pad = _pick_tiles(B, _num_tensorcores())

    # batch onto the lane axis: (B, 22, C) -> (22*C, b_pad), zero-padded lanes
    xflat = jnp.transpose(x.astype(DTYPE), (1, 2, 0)).reshape(NJ * C, B)
    xflat = jnp.pad(xflat, ((0, 0), (0, b_pad - B))).astype(cdt)

    operands = (w1, b1, w2, b2, wch, g1, g2, ff)
    xspec = pl.BlockSpec((NJ * C, tb), lambda b: (0, b))
    outflat = pl.pallas_call(
        _encoder_kernel,
        out_shape=jax.ShapeDtypeStruct((NJ * C, b_pad), DTYPE),
        grid=(b_pad // tb,),
        in_specs=[xspec] + [_const_spec(a) for a in operands],
        out_specs=xspec,
        compiler_params=pltpu.CompilerParams(dimension_semantics=("parallel",)),
    )(xflat, *operands)

    out = outflat[:, :B].reshape(NJ, C, B).transpose(2, 0, 1)
    return out.astype(x.dtype)
    # NOTE: SCINet_human_structure.expand = nn.Linear(3, 19) is unused in forward().


# ------------------------- deterministic parameter init ------------------------
def init_interactor_params(key):
    ks = jax.random.split(key, 6)
    return dict(
        w1=0.2 * jax.random.normal(ks[0], (4, H, C, K1), DTYPE),   # Conv1d(C->H, 5)
        b1=0.1 * jax.random.normal(ks[1], (4, H), DTYPE),
        w2=0.2 * jax.random.normal(ks[2], (4, C, H, K2), DTYPE),   # Conv1d(H->C, 3)
        b2=0.1 * jax.random.normal(ks[3], (4, C), DTYPE),
        cw=0.2 * jax.random.normal(ks[4], (2, L, 2 * L), DTYPE),   # Linear(16->8), (out,in)
        cb=0.1 * jax.random.normal(ks[5], (2, L), DTYPE),
    )


# -------------------------- pure-JAX reference (sanity) ------------------------
def _ref_conv_stack(w1, bias1, w2, bias2, x):          # x: (B, C, L)
    xp = jnp.concatenate([jnp.repeat(x[:, :, :1], PAD, axis=2), x,
                          jnp.repeat(x[:, :, -1:], PAD, axis=2)], axis=2)
    y = lax.conv_general_dilated(xp, w1, (1,), 'VALID',
                                 dimension_numbers=('NCH', 'OIH', 'NCH'))
    y = y + bias1[None, :, None]
    y = jnp.where(y >= 0, y, 0.01 * y)
    z = lax.conv_general_dilated(y, w2, (1,), 'VALID',
                                 dimension_numbers=('NCH', 'OIH', 'NCH'))
    return jnp.tanh(z + bias2[None, :, None])


def _ref_interactor(p, x1, x2):                        # x1, x2: (B, 8, C)
    x1 = jnp.transpose(x1, (0, 2, 1))
    x2 = jnp.transpose(x2, (0, 2, 1))
    d = x2 * jnp.exp(_ref_conv_stack(p['w1'][PHI], p['b1'][PHI],
                                     p['w2'][PHI], p['b2'][PHI], x1))
    c = x1 * jnp.exp(_ref_conv_stack(p['w1'][PSI], p['b1'][PSI],
                                     p['w2'][PSI], p['b2'][PSI], x2))
    ud = _ref_conv_stack(p['w1'][U_IDX], p['b1'][U_IDX],
                         p['w2'][U_IDX], p['b2'][U_IDX], d)
    pc = _ref_conv_stack(p['w1'][P_IDX], p['b1'][P_IDX],
                         p['w2'][P_IDX], p['b2'][P_IDX], c)
    o1 = jnp.einsum('bcl,ml->bcm', jnp.concatenate([c, ud], -1), p['cw'][0]) + p['cb'][0]
    o2 = jnp.einsum('bcl,ml->bcm', jnp.concatenate([d, pc], -1), p['cw'][1]) + p['cb'][1]
    return jnp.transpose(o1, (0, 2, 1)), jnp.transpose(o2, (0, 2, 1))


def _ref_encoder_tree(p1, p2, x):
    ll, lr = jnp.asarray(LIST_LEFT), jnp.asarray(LIST_RIGHT)
    lu, ld = jnp.asarray(LIST_UP), jnp.asarray(LIST_DOWN)
    nl, nr = _ref_interactor(p1, x[:, ll, :], x[:, lr, :])
    x = x.at[:, ll, :].set(nl)
    x = x.at[:, lr, :].set(nr)
    nu, nd = _ref_interactor(p2, x[:, lu, :], x[:, ld, :])
    x = x.at[:, lu, :].set(nu)
    x = x.at[:, ld, :].set(nd)
    return x


# ------------------------------------ main -------------------------------------
if __name__ == "__main__":
    key = jax.random.PRNGKey(0)
    k_x, k_p1, k_p2, k_x2 = jax.random.split(key, 4)

    params1 = init_interactor_params(k_p1)   # interact_1
    params2 = init_interactor_params(k_p2)   # interact_2

    # small demo shape implied by the module: 22 joints, in_planes = 4
    B = 2
    x = jax.random.normal(k_x, (B, NJ, C), DTYPE)
    ref = jax.block_until_ready(_ref_encoder_tree(params1, params2, x))

    # structural check: f32 matmul path must match the reference tightly
    out_f32 = jax.block_until_ready(
        encoder_tree_forward(params1, params2, x, use_bf16=False))
    assert out_f32.shape == (B, NJ, C)
    assert bool(jnp.all(jnp.isfinite(out_f32)))
    assert bool(jnp.allclose(out_f32, ref, rtol=2e-3, atol=2e-3))

    # performance path: bf16 MXU operands (exp coupling amplifies rounding,
    # hence the looser band plus a mean-error check)
    out = jax.block_until_ready(encoder_tree_forward(params1, params2, x))
    err = jnp.abs(out - ref)
    assert bool(jnp.all(jnp.isfinite(out)))
    assert float(jnp.mean(err)) < 8e-3
    assert bool(jnp.allclose(out, ref, rtol=5e-2, atol=5e-2))

    # larger batch exercises lane padding and the multi-step / megacore grid path
    B2 = 384
    x2 = jax.random.normal(k_x2, (B2, NJ, C), DTYPE)
    out2 = jax.block_until_ready(encoder_tree_forward(params1, params2, x2))
    ref2 = jax.block_until_ready(_ref_encoder_tree(params1, params2, x2))
    err2 = jnp.abs(out2 - ref2)
    assert float(jnp.mean(err2)) < 8e-3
    assert bool(jnp.allclose(out2, ref2, rtol=5e-2, atol=5e-2))

    print("KERNEL_OK")
</pallas_src>

<mosaic_0001>
module attributes {stable_mosaic.version = 11 : i64} {
  func.func @_encoder_kernel(%arg0: i32, %arg1: memref<88x256xf32, #tpu.memory_space<vmem>>, %arg2: memref<2x2x160x64xf32, #tpu.memory_space<vmem>>, %arg3: memref<2x2x160x1xf32, #tpu.memory_space<vmem>>, %arg4: memref<2x2x64x160xf32, #tpu.memory_space<vmem>>, %arg5: memref<2x3x64x1xf32, #tpu.memory_space<vmem>>, %arg6: memref<2x64x128xf32, #tpu.memory_space<vmem>>, %arg7: memref<64x88xf32, #tpu.memory_space<vmem>>, %arg8: memref<64x152xf32, #tpu.memory_space<vmem>>, %arg9: memref<88x216xf32, #tpu.memory_space<vmem>>, %arg10: memref<88x256xf32, #tpu.memory_space<vmem>>) attributes {dimension_semantics = [#tpu.dimension_semantics<parallel>], iteration_bounds = array<i64: 1>, scalar_prefetch = 0 : i64, scratch_operands = 0 : i64, tpu.core_type = #tpu.core_type<tc>, window_params = [{transform_indices = @transform_0, window_bounds = array<i64: 88, 256>}, {pipeline_mode = #tpu.pipeline_mode<synchronous>, transform_indices = @transform_1, window_bounds = array<i64: 2, 2, 160, 64>}, {pipeline_mode = #tpu.pipeline_mode<synchronous>, transform_indices = @transform_2, window_bounds = array<i64: 2, 2, 160, 1>}, {pipeline_mode = #tpu.pipeline_mode<synchronous>, transform_indices = @transform_3, window_bounds = array<i64: 2, 2, 64, 160>}, {pipeline_mode = #tpu.pipeline_mode<synchronous>, transform_indices = @transform_4, window_bounds = array<i64: 2, 3, 64, 1>}, {pipeline_mode = #tpu.pipeline_mode<synchronous>, transform_indices = @transform_5, window_bounds = array<i64: 2, 64, 128>}, {pipeline_mode = #tpu.pipeline_mode<synchronous>, transform_indices = @transform_6, window_bounds = array<i64: 64, 88>}, {pipeline_mode = #tpu.pipeline_mode<synchronous>, transform_indices = @transform_7, window_bounds = array<i64: 64, 152>}, {pipeline_mode = #tpu.pipeline_mode<synchronous>, transform_indices = @transform_8, window_bounds = array<i64: 88, 216>}, {transform_indices = @transform_9, window_bounds = array<i64: 88, 256>}]} {
    %c0 = arith.constant 0 : index
    %c0_0 = arith.constant 0 : index
    %0 = vector.load %arg1[%c0, %c0_0] : memref<88x256xf32, #tpu.memory_space<vmem>>, vector<88x256xf32>
    %c0_1 = arith.constant 0 : index
    %c0_2 = arith.constant 0 : index
    %1 = vector.load %arg7[%c0_1, %c0_2] : memref<64x88xf32, #tpu.memory_space<vmem>>, vector<64x88xf32>
    %cst = arith.constant dense<0.000000e+00> : vector<64x256xf32>
    %2 = tpu.matmul %1, %0, %cst {dimension_numbers = #tpu.dot_dimension_numbers<[1], [0], [0], [1], [0, 0, 1, 1], [], []>} : vector<64x88xf32>, vector<88x256xf32>, vector<64x256xf32> -> vector<64x256xf32>
    %c0_3 = arith.constant 0 : index
    %c0_4 = arith.constant 0 : index
    %c0_5 = arith.constant 0 : index
    %c0_6 = arith.constant 0 : index
    %3 = vector.load %arg2[%c0_3, %c0_4, %c0_5, %c0_6] : memref<2x2x160x64xf32, #tpu.memory_space<vmem>>, vector<1x1x160x64xf32>
    %4 = vector.shape_cast %3 : vector<1x1x160x64xf32> to vector<160x64xf32>
    %cst_7 = arith.constant dense<0.000000e+00> : vector<160x256xf32>
    %5 = tpu.matmul %4, %2, %cst_7 {dimension_numbers = #tpu.dot_dimension_numbers<[1], [0], [0], [1], [0, 0, 1, 1], [], []>} : vector<160x64xf32>, vector<64x256xf32>, vector<160x256xf32> -> vector<160x256xf32>
    %c0_8 = arith.constant 0 : index
    %c0_9 = arith.constant 0 : index
    %c0_10 = arith.constant 0 : index
    %c0_11 = arith.constant 0 : index
    %6 = vector.load %arg3[%c0_8, %c0_9, %c0_10, %c0_11] : memref<2x2x160x1xf32, #tpu.memory_space<vmem>>, vector<1x1x160x1xf32>
    %7 = vector.shape_cast %6 : vector<1x1x160x1xf32> to vector<160x1xf32>
    %8 = vector.broadcast %7 : vector<160x1xf32> to vector<160x256xf32>
    %9 = arith.addf %5, %8 : vector<160x256xf32>
    %cst_12 = arith.constant 0.000000e+00 : f32
    %10 = vector.broadcast %cst_12 : f32 to vector<160x256xf32>
    %11 = arith.cmpf oge, %9, %10 : vector<160x256xf32>
    %cst_13 = arith.constant 0.00999999977 : f32
    %12 = vector.broadcast %cst_13 : f32 to vector<160x256xf32>
    %13 = arith.mulf %12, %9 : vector<160x256xf32>
    %14 = arith.select %11, %9, %13 : vector<160x256xi1>, vector<160x256xf32>
    %c0_14 = arith.constant 0 : index
    %c0_15 = arith.constant 0 : index
    %c0_16 = arith.constant 0 : index
    %c0_17 = arith.constant 0 : index
    %15 = vector.load %arg4[%c0_14, %c0_15, %c0_16, %c0_17] : memref<2x2x64x160xf32, #tpu.memory_space<vmem>>, vector<1x1x64x160xf32>
    %16 = vector.shape_cast %15 : vector<1x1x64x160xf32> to vector<64x160xf32>
    %cst_18 = arith.constant dense<0.000000e+00> : vector<64x256xf32>
    %17 = tpu.matmul %16, %14, %cst_18 {dimension_numbers = #tpu.dot_dimension_numbers<[1], [0], [0], [1], [0, 0, 1, 1], [], []>} : vector<64x160xf32>, vector<160x256xf32>, vector<64x256xf32> -> vector<64x256xf32>
    %c0_19 = arith.constant 0 : index
    %c0_20 = arith.constant 0 : index
    %c0_21 = arith.constant 0 : index
    %c0_22 = arith.constant 0 : index
    %18 = vector.load %arg5[%c0_19, %c0_20, %c0_21, %c0_22] : memref<2x3x64x1xf32, #tpu.memory_space<vmem>>, vector<1x1x64x1xf32>
    %19 = vector.shape_cast %18 : vector<1x1x64x1xf32> to vector<64x1xf32>
    %20 = vector.broadcast %19 : vector<64x1xf32> to vector<64x256xf32>
    %21 = arith.addf %17, %20 : vector<64x256xf32>
    %22 = math.tanh %21 : vector<64x256xf32>
    %23 = math.exp %22 : vector<64x256xf32>
    %24 = arith.mulf %2, %23 : vector<64x256xf32>
    %c0_23 = arith.constant 0 : index
    %c1 = arith.constant 1 : index
    %c0_24 = arith.constant 0 : index
    %c0_25 = arith.constant 0 : index
    %25 = vector.load %arg2[%c0_23, %c1, %c0_24, %c0_25] : memref<2x2x160x64xf32, #tpu.memory_space<vmem>>, vector<1x1x160x64xf32>
    %26 = vector.shape_cast %25 : vector<1x1x160x64xf32> to vector<160x64xf32>
    %cst_26 = arith.constant dense<0.000000e+00> : vector<160x256xf32>
    %27 = tpu.matmul %26, %24, %cst_26 {dimension_numbers = #tpu.dot_dimension_numbers<[1], [0], [0], [1], [0, 0, 1, 1], [], []>} : vector<160x64xf32>, vector<64x256xf32>, vector<160x256xf32> -> vector<160x256xf32>
    %c0_27 = arith.constant 0 : index
    %c1_28 = arith.constant 1 : index
    %c0_29 = arith.constant 0 : index
    %c0_30 = arith.constant 0 : index
    %28 = vector.load %arg3[%c0_27, %c1_28, %c0_29, %c0_30] : memref<2x2x160x1xf32, #tpu.memory_space<vmem>>, vector<1x1x160x1xf32>
    %29 = vector.shape_cast %28 : vector<1x1x160x1xf32> to vector<160x1xf32>
    %30 = vector.broadcast %29 : vector<160x1xf32> to vector<160x256xf32>
    %31 = arith.addf %27, %30 : vector<160x256xf32>
    %cst_31 = arith.constant 0.000000e+00 : f32
    %32 = vector.broadcast %cst_31 : f32 to vector<160x256xf32>
    %33 = arith.cmpf oge, %31, %32 : vector<160x256xf32>
    %cst_32 = arith.constant 0.00999999977 : f32
    %34 = vector.broadcast %cst_32 : f32 to vector<160x256xf32>
    %35 = arith.mulf %34, %31 : vector<160x256xf32>
    %36 = arith.select %33, %31, %35 : vector<160x256xi1>, vector<160x256xf32>
    %c0_33 = arith.constant 0 : index
    %c1_34 = arith.constant 1 : index
    %c0_35 = arith.constant 0 : index
    %c0_36 = arith.constant 0 : index
    %37 = vector.load %arg4[%c0_33, %c1_34, %c0_35, %c0_36] : memref<2x2x64x160xf32, #tpu.memory_space<vmem>>, vector<1x1x64x160xf32>
    %38 = vector.shape_cast %37 : vector<1x1x64x160xf32> to vector<64x160xf32>
    %cst_37 = arith.constant dense<0.000000e+00> : vector<64x256xf32>
    %39 = tpu.matmul %38, %36, %cst_37 {dimension_numbers = #tpu.dot_dimension_numbers<[1], [0], [0], [1], [0, 0, 1, 1], [], []>} : vector<64x160xf32>, vector<160x256xf32>, vector<64x256xf32> -> vector<64x256xf32>
    %c0_38 = arith.constant 0 : index
    %c1_39 = arith.constant 1 : index
    %c0_40 = arith.constant 0 : index
    %c0_41 = arith.constant 0 : index
    %40 = vector.load %arg5[%c0_38, %c1_39, %c0_40, %c0_41] : memref<2x3x64x1xf32, #tpu.memory_space<vmem>>, vector<1x1x64x1xf32>
    %41 = vector.shape_cast %40 : vector<1x1x64x1xf32> to vector<64x1xf32>
    %42 = vector.broadcast %41 : vector<64x1xf32> to vector<64x256xf32>
    %43 = arith.addf %39, %42 : vector<64x256xf32>
    %44 = math.tanh %43 : vector<64x256xf32>
    %45 = tpu.concatenate %24, %44 in 0 : vector<64x256xf32>, vector<64x256xf32> -> vector<128x256xf32>
    %c0_42 = arith.constant 0 : index
    %c0_43 = arith.constant 0 : index
    %c0_44 = arith.constant 0 : index
    %46 = vector.load %arg6[%c0_42, %c0_43, %c0_44] : memref<2x64x128xf32, #tpu.memory_space<vmem>>, vector<1x64x128xf32>
    %47 = vector.shape_cast %46 : vector<1x64x128xf32> to vector<64x128xf32>
    %cst_45 = arith.constant dense<0.000000e+00> : vector<64x256xf32>
    %48 = tpu.matmul %47, %45, %cst_45 {dimension_numbers = #tpu.dot_dimension_numbers<[1], [0], [0], [1], [0, 0, 1, 1], [], []>} : vector<64x128xf32>, vector<128x256xf32>, vector<64x256xf32> -> vector<64x256xf32>
    %c0_46 = arith.constant 0 : index
    %c2 = arith.constant 2 : index
    %c0_47 = arith.constant 0 : index
    %c0_48 = arith.constant 0 : index
    %49 = vector.load %arg5[%c0_46, %c2, %c0_47, %c0_48] : memref<2x3x64x1xf32, #tpu.memory_space<vmem>>, vector<1x1x64x1xf32>
    %50 = vector.shape_cast %49 : vector<1x1x64x1xf32> to vector<64x1xf32>
    %51 = vector.broadcast %50 : vector<64x1xf32> to vector<64x256xf32>
    %52 = arith.addf %48, %51 : vector<64x256xf32>
    %53 = tpu.concatenate %52, %0 in 0 : vector<64x256xf32>, vector<88x256xf32> -> vector<152x256xf32>
    %c0_49 = arith.constant 0 : index
    %c0_50 = arith.constant 0 : index
    %54 = vector.load %arg8[%c0_49, %c0_50] : memref<64x152xf32, #tpu.memory_space<vmem>>, vector<64x152xf32>
    %cst_51 = arith.constant dense<0.000000e+00> : vector<64x256xf32>
    %55 = tpu.matmul %54, %53, %cst_51 {dimension_numbers = #tpu.dot_dimension_numbers<[1], [0], [0], [1], [0, 0, 1, 1], [], []>} : vector<64x152xf32>, vector<152x256xf32>, vector<64x256xf32> -> vector<64x256xf32>
    %c1_52 = arith.constant 1 : index
    %c0_53 = arith.constant 0 : index
    %c0_54 = arith.constant 0 : index
    %c0_55 = arith.constant 0 : index
    %56 = vector.load %arg2[%c1_52, %c0_53, %c0_54, %c0_55] : memref<2x2x160x64xf32, #tpu.memory_space<vmem>>, vector<1x1x160x64xf32>
    %57 = vector.shape_cast %56 : vector<1x1x160x64xf32> to vector<160x64xf32>
    %cst_56 = arith.constant dense<0.000000e+00> : vector<160x256xf32>
    %58 = tpu.matmul %57, %55, %cst_56 {dimension_numbers = #tpu.dot_dimension_numbers<[1], [0], [0], [1], [0, 0, 1, 1], [], []>} : vector<160x64xf32>, vector<64x256xf32>, vector<160x256xf32> -> vector<160x256xf32>
    %c1_57 = arith.constant 1 : index
    %c0_58 = arith.constant 0 : index
    %c0_59 = arith.constant 0 : index
    %c0_60 = arith.constant 0 : index
    %59 = vector.load %arg3[%c1_57, %c0_58, %c0_59, %c0_60] : memref<2x2x160x1xf32, #tpu.memory_space<vmem>>, vector<1x1x160x1xf32>
    %60 = vector.shape_cast %59 : vector<1x1x160x1xf32> to vector<160x1xf32>
    %61 = vector.broadcast %60 : vector<160x1xf32> to vector<160x256xf32>
    %62 = arith.addf %58, %61 : vector<160x256xf32>
    %cst_61 = arith.constant 0.000000e+00 : f32
    %63 = vector.broadcast %cst_61 : f32 to vector<160x256xf32>
    %64 = arith.cmpf oge, %62, %63 : vector<160x256xf32>
    %cst_62 = arith.constant 0.00999999977 : f32
    %65 = vector.broadcast %cst_62 : f32 to vector<160x256xf32>
    %66 = arith.mulf %65, %62 : vector<160x256xf32>
    %67 = arith.select %64, %62, %66 : vector<160x256xi1>, vector<160x256xf32>
    %c1_63 = arith.constant 1 : index
    %c0_64 = arith.constant 0 : index
    %c0_65 = arith.constant 0 : index
    %c0_66 = arith.constant 0 : index
    %68 = vector.load %arg4[%c1_63, %c0_64, %c0_65, %c0_66] : memref<2x2x64x160xf32, #tpu.memory_space<vmem>>, vector<1x1x64x160xf32>
    %69 = vector.shape_cast %68 : vector<1x1x64x160xf32> to vector<64x160xf32>
    %cst_67 = arith.constant dense<0.000000e+00> : vector<64x256xf32>
    %70 = tpu.matmul %69, %67, %cst_67 {dimension_numbers = #tpu.dot_dimension_numbers<[1], [0], [0], [1], [0, 0, 1, 1], [], []>} : vector<64x160xf32>, vector<160x256xf32>, vector<64x256xf32> -> vector<64x256xf32>
    %c1_68 = arith.constant 1 : index
    %c0_69 = arith.constant 0 : index
    %c0_70 = arith.constant 0 : index
    %c0_71 = arith.constant 0 : index
    %71 = vector.load %arg5[%c1_68, %c0_69, %c0_70, %c0_71] : memref<2x3x64x1xf32, #tpu.memory_space<vmem>>, vector<1x1x64x1xf32>
    %72 = vector.shape_cast %71 : vector<1x1x64x1xf32> to vector<64x1xf32>
    %73 = vector.broadcast %72 : vector<64x1xf32> to vector<64x256xf32>
    %74 = arith.addf %70, %73 : vector<64x256xf32>
    %75 = math.tanh %74 : vector<64x256xf32>
    %76 = math.exp %75 : vector<64x256xf32>
    %77 = arith.mulf %55, %76 : vector<64x256xf32>
    %c1_72 = arith.constant 1 : index
    %c1_73 = arith.constant 1 : index
    %c0_74 = arith.constant 0 : index
    %c0_75 = arith.constant 0 : index
    %78 = vector.load %arg2[%c1_72, %c1_73, %c0_74, %c0_75] : memref<2x2x160x64xf32, #tpu.memory_space<vmem>>, vector<1x1x160x64xf32>
    %79 = vector.shape_cast %78 : vector<1x1x160x64xf32> to vector<160x64xf32>
    %cst_76 = arith.constant dense<0.000000e+00> : vector<160x256xf32>
    %80 = tpu.matmul %79, %77, %cst_76 {dimension_numbers = #tpu.dot_dimension_numbers<[1], [0], [0], [1], [0, 0, 1, 1], [], []>} : vector<160x64xf32>, vector<64x256xf32>, vector<160x256xf32> -> vector<160x256xf32>
    %c1_77 = arith.constant 1 : index
    %c1_78 = arith.constant 1 : index
    %c0_79 = arith.constant 0 : index
    %c0_80 = arith.constant 0 : index
    %81 = vector.load %arg3[%c1_77, %c1_78, %c0_79, %c0_80] : memref<2x2x160x1xf32, #tpu.memory_space<vmem>>, vector<1x1x160x1xf32>
    %82 = vector.shape_cast %81 : vector<1x1x160x1xf32> to vector<160x1xf32>
    %83 = vector.broadcast %82 : vector<160x1xf32> to vector<160x256xf32>
    %84 = arith.addf %80, %83 : vector<160x256xf32>
    %cst_81 = arith.constant 0.000000e+00 : f32
    %85 = vector.broadcast %cst_81 : f32 to vector<160x256xf32>
    %86 = arith.cmpf oge, %84, %85 : vector<160x256xf32>
    %cst_82 = arith.constant 0.00999999977 : f32
    %87 = vector.broadcast %cst_82 : f32 to vector<160x256xf32>
    %88 = arith.mulf %87, %84 : vector<160x256xf32>
    %89 = arith.select %86, %84, %88 : vector<160x256xi1>, vector<160x256xf32>
    %c1_83 = arith.constant 1 : index
    %c1_84 = arith.constant 1 : index
    %c0_85 = arith.constant 0 : index
    %c0_86 = arith.constant 0 : index
    %90 = vector.load %arg4[%c1_83, %c1_84, %c0_85, %c0_86] : memref<2x2x64x160xf32, #tpu.memory_space<vmem>>, vector<1x1x64x160xf32>
    %91 = vector.shape_cast %90 : vector<1x1x64x160xf32> to vector<64x160xf32>
    %cst_87 = arith.constant dense<0.000000e+00> : vector<64x256xf32>
    %92 = tpu.matmul %91, %89, %cst_87 {dimension_numbers = #tpu.dot_dimension_numbers<[1], [0], [0], [1], [0, 0, 1, 1], [], []>} : vector<64x160xf32>, vector<160x256xf32>, vector<64x256xf32> -> vector<64x256xf32>
    %c1_88 = arith.constant 1 : index
    %c1_89 = arith.constant 1 : index
    %c0_90 = arith.constant 0 : index
    %c0_91 = arith.constant 0 : index
    %93 = vector.load %arg5[%c1_88, %c1_89, %c0_90, %c0_91] : memref<2x3x64x1xf32, #tpu.memory_space<vmem>>, vector<1x1x64x1xf32>
    %94 = vector.shape_cast %93 : vector<1x1x64x1xf32> to vector<64x1xf32>
    %95 = vector.broadcast %94 : vector<64x1xf32> to vector<64x256xf32>
    %96 = arith.addf %92, %95 : vector<64x256xf32>
    %97 = math.tanh %96 : vector<64x256xf32>
    %98 = tpu.concatenate %77, %97 in 0 : vector<64x256xf32>, vector<64x256xf32> -> vector<128x256xf32>
    %c1_92 = arith.constant 1 : index
    %c0_93 = arith.constant 0 : index
    %c0_94 = arith.constant 0 : index
    %99 = vector.load %arg6[%c1_92, %c0_93, %c0_94] : memref<2x64x128xf32, #tpu.memory_space<vmem>>, vector<1x64x128xf32>
    %100 = vector.shape_cast %99 : vector<1x64x128xf32> to vector<64x128xf32>
    %cst_95 = arith.constant dense<0.000000e+00> : vector<64x256xf32>
    %101 = tpu.matmul %100, %98, %cst_95 {dimension_numbers = #tpu.dot_dimension_numbers<[1], [0], [0], [1], [0, 0, 1, 1], [], []>} : vector<64x128xf32>, vector<128x256xf32>, vector<64x256xf32> -> vector<64x256xf32>
    %c1_96 = arith.constant 1 : index
    %c2_97 = arith.constant 2 : index
    %c0_98 = arith.constant 0 : index
    %c0_99 = arith.constant 0 : index
    %102 = vector.load %arg5[%c1_96, %c2_97, %c0_98, %c0_99] : memref<2x3x64x1xf32, #tpu.memory_space<vmem>>, vector<1x1x64x1xf32>
    %103 = vector.shape_cast %102 : vector<1x1x64x1xf32> to vector<64x1xf32>
    %104 = vector.broadcast %103 : vector<64x1xf32> to vector<64x256xf32>
    %105 = arith.addf %101, %104 : vector<64x256xf32>
    %106 = tpu.concatenate %105, %53 in 0 : vector<64x256xf32>, vector<152x256xf32> -> vector<216x256xf32>
    %c0_100 = arith.constant 0 : index
    %c0_101 = arith.constant 0 : index
    %107 = vector.load %arg9[%c0_100, %c0_101] : memref<88x216xf32, #tpu.memory_space<vmem>>, vector<88x216xf32>
    %cst_102 = arith.constant dense<0.000000e+00> : vector<88x256xf32>
    %108 = tpu.matmul %107, %106, %cst_102 {dimension_numbers = #tpu.dot_dimension_numbers<[1], [0], [0], [1], [0, 0, 1, 1], [], []>} : vector<88x216xf32>, vector<216x256xf32>, vector<88x256xf32> -> vector<88x256xf32>
    %c0_103 = arith.constant 0 : index
    %c0_104 = arith.constant 0 : index
    %109 = vector.load %arg10[%c0_103, %c0_104] : memref<88x256xf32, #tpu.memory_space<vmem>>, vector<88x256xf32>
    tpu.vector_store %arg10[%c0_103, %c0_104], %108 {strides = array<i32>} : memref<88x256xf32, #tpu.memory_space<vmem>>, vector<88x256xf32>,
    return
  }
  func.func @transform_0(%arg0: i32) -> (i32, i32) {
    %c0_i32 = arith.constant 0 : i32
    %c0_i32_0 = arith.constant 0 : i32
    return %c0_i32, %arg0 : i32, i32
  }
  func.func @transform_1(%arg0: i32) -> (i32, i32, i32, i32) {
    %c0_i32 = arith.constant 0 : i32
    %c0_i32_0 = arith.constant 0 : i32
    %c0_i32_1 = arith.constant 0 : i32
    %c0_i32_2 = arith.constant 0 : i32
    %c0_i32_3 = arith.constant 0 : i32
    return %c0_i32, %c0_i32_0, %c0_i32_1, %c0_i32_2 : i32, i32, i32, i32
  }
  func.func @transform_2(%arg0: i32) -> (i32, i32, i32, i32) {
    %c0_i32 = arith.constant 0 : i32
    %c0_i32_0 = arith.constant 0 : i32
    %c0_i32_1 = arith.constant 0 : i32
    %c0_i32_2 = arith.constant 0 : i32
    %c0_i32_3 = arith.constant 0 : i32
    return %c0_i32, %c0_i32_0, %c0_i32_1, %c0_i32_2 : i32, i32, i32, i32
  }
  func.func @transform_3(%arg0: i32) -> (i32, i32, i32, i32) {
    %c0_i32 = arith.constant 0 : i32
    %c0_i32_0 = arith.constant 0 : i32
    %c0_i32_1 = arith.constant 0 : i32
    %c0_i32_2 = arith.constant 0 : i32
    %c0_i32_3 = arith.constant 0 : i32
    return %c0_i32, %c0_i32_0, %c0_i32_1, %c0_i32_2 : i32, i32, i32, i32
  }
  func.func @transform_4(%arg0: i32) -> (i32, i32, i32, i32) {
    %c0_i32 = arith.constant 0 : i32
    %c0_i32_0 = arith.constant 0 : i32
    %c0_i32_1 = arith.constant 0 : i32
    %c0_i32_2 = arith.constant 0 : i32
    %c0_i32_3 = arith.constant 0 : i32
    return %c0_i32, %c0_i32_0, %c0_i32_1, %c0_i32_2 : i32, i32, i32, i32
  }
  func.func @transform_5(%arg0: i32) -> (i32, i32, i32) {
    %c0_i32 = arith.constant 0 : i32
    %c0_i32_0 = arith.constant 0 : i32
    %c0_i32_1 = arith.constant 0 : i32
    %c0_i32_2 = arith.constant 0 : i32
    return %c0_i32, %c0_i32_0, %c0_i32_1 : i32, i32, i32
  }
  func.func @transform_6(%arg0: i32) -> (i32, i32) {
    %c0_i32 = arith.constant 0 : i32
    %c0_i32_0 = arith.constant 0 : i32
    %c0_i32_1 = arith.constant 0 : i32
    return %c0_i32, %c0_i32_0 : i32, i32
  }
  func.func @transform_7(%arg0: i32) -> (i32, i32) {
    %c0_i32 = arith.constant 0 : i32
    %c0_i32_0 = arith.constant 0 : i32
    %c0_i32_1 = arith.constant 0 : i32
    return %c0_i32, %c0_i32_0 : i32, i32
  }
  func.func @transform_8(%arg0: i32) -> (i32, i32) {
    %c0_i32 = arith.constant 0 : i32
    %c0_i32_0 = arith.constant 0 : i32
    %c0_i32_1 = arith.constant 0 : i32
    return %c0_i32, %c0_i32_0 : i32, i32
  }
  func.func @transform_9(%arg0: i32) -> (i32, i32) {
    %c0_i32 = arith.constant 0 : i32
    %c0_i32_0 = arith.constant 0 : i32
    return %c0_i32, %arg0 : i32, i32
  }
}

</mosaic_0001>

<llo_original>
// kernel: tile.18
$region0: #{tile.18}
  #allocation0 [shape = 's32[1]{0}', space=sflag, size = 0x4, scoped, tag = 'scoped memory for tile.18']
  %s0 = inlined_call_operand.vmem [shape: f32[8], index: 0, kind: input, shape index: {}]
  %s1 = inlined_call_operand.vmem [shape: f32[4,8], index: 1, kind: output, shape index: {}]
  // Predicated region
  $region2: #{tile.18} parent=0 // pred_check
    _
  $region3: #{tile.18} parent=0 // pred_check_branch
    %3 = sbr.rel (0) target = $region5
  $region4: #{tile.18} parent=0 // pred_region
    _
  $region5: #{tile.18} parent=0 // pred_fallthru
    _
  %v4 = vld [vmem:[%s0] ss:$0 sm:$0xff]
  %5 = vst [vmem:[%s1] sm:$0xf] %v4

// kernel: tile.19
$region0: #{tile.19}
  %s0 = inlined_call_operand.vmem [shape: f32[4,8], index: 0, kind: input, shape index: {}]
  %s1 = inlined_call_operand.vmem [shape: f32[32], index: 1, kind: output, shape index: {}]
  $region1: #{tile.19} parent=0
    #allocation0 [shape = 'u8[4096]{0}', space=vmem, size = 0x1000, scoped, tag = 'scoped mem for output reshape']
    #allocation1 [shape = 'u8[4096]{0}', space=vmem, size = 0x1000, scoped, tag = 'scoped mem for input reshape']
    %s3 = sshllo.u32 0, 4
    %v4 = vld [vmem:[%s0] sm:%s3]
    %5 = vst [vmem:[#allocation1] sm:%s3] %v4
    %v6 = vld [vmem:[#allocation1] sm:$0x1]
    %vm7 = vcmask 64512
    %8 = vst.msk [vmem:[#allocation0] sm:$0x1] %vm7, %v6
    %s9 = scalar_lea.vmem [#allocation1], 3
    %v10 = vld [vmem:[%s9] sm:$0x1]
    %11 = vrot.lane.b32.xlu0 %v10, 24
    %v12 = vpop.permute.xlu0 %11
    %vm13 = vcmask 261312
    %14 = vst.msk [vmem:[#allocation0] sm:$0x1] %vm13, %v12
    %s15 = scalar_lea.vmem [#allocation1], 2
    %v16 = vld [vmem:[%s15] sm:$0x1]
    %17 = vrot.lane.b32.xlu0 %v16, 16
    %v18 = vpop.permute.xlu0 %17
    %vm19 = vcmask 195712
    %20 = vst.msk [vmem:[#allocation0] sm:$0x1] %vm19, %v18
    %s21 = scalar_lea.vmem [#allocation1], 1
    %v22 = vld [vmem:[%s21] sm:$0x1]
    %23 = vrot.lane.b32.xlu0 %v22, 8
    %v24 = vpop.permute.xlu0 %23
    %vm25 = vcmask 130112
    %26 = vst.msk [vmem:[#allocation0] sm:$0x1] %vm25, %v24
    %s28 = sshllo.u32 0, 1
    %v30 = vld [vmem:[#allocation0] sm:%s28]
    %s31 = sshllo.u32 0, 1
    %32 = vst [vmem:[%s1] sm:%s31] %v30

// kernel: encoder_tree_forward.1
$region0: #{encoder_tree_forward.1}
  #allocation0 [shape = 'u32[]', space=smem, size = 0x4, offset = 0x4, fixed_abs, tag = 'smem constant byte address 0x4 - core index']
  #allocation1 [shape = 'u32[144,128]{1,0:T(1,128)}', space=vmem, size = 0x12000, scoped, tag = 'internal scratch']
  %s0 = inlined_call_operand.vmem [shape: f32[88,256], index: 0, kind: input, shape index: {}]
  %s1 = inlined_call_operand.vmem [shape: f32[2,2,160,64], index: 1, kind: input, shape index: {}]
  %s2 = inlined_call_operand.vmem [shape: f32[2,2,160,1], index: 2, kind: input, shape index: {}]
  %s3 = inlined_call_operand.vmem [shape: f32[2,2,64,160], index: 3, kind: input, shape index: {}]
  %s4 = inlined_call_operand.vmem [shape: f32[2,3,64,1], index: 4, kind: input, shape index: {}]
  %s5 = inlined_call_operand.vmem [shape: f32[2,64,128], index: 5, kind: input, shape index: {}]
  %s6 = inlined_call_operand.vmem [shape: f32[64,88], index: 6, kind: input, shape index: {}]
  %s7 = inlined_call_operand.vmem [shape: f32[64,152], index: 7, kind: input, shape index: {}]
  %s8 = inlined_call_operand.vmem [shape: f32[88,216], index: 8, kind: input, shape index: {}]
  %s9 = inlined_call_operand.vmem [shape: f32[88,256], index: 9, kind: output, shape index: {}]
  %s10 = sld [smem:[#allocation0]]
  $region46: #{encoder_tree_forward.1} parent=0
    _
  %s12 = ssub.s32 1, %s10
  %s13 = scalar_select 0, %s12, %s10
  // Predicated region
  $region2: #{encoder_tree_forward.1} parent=0 // pred_check
    _
  $region3: #{encoder_tree_forward.1} parent=0 // pred_check_branch
    %15 = sbr.rel (0) target = $region5
  $region4: #{encoder_tree_forward.1} parent=0 // pred_region
    _
  $region5: #{encoder_tree_forward.1} parent=0 // pred_fallthru
    _
  // Predicated region
  $region6: #{encoder_tree_forward.1} parent=0 // pred_check
    _
  $region7: #{encoder_tree_forward.1} parent=0 // pred_check_branch
    %17 = sbr.rel (0) target = $region9
  $region8: #{encoder_tree_forward.1} parent=0 // pred_region
    _
  $region9: #{encoder_tree_forward.1} parent=0 // pred_fallthru
    _
  // Predicated region
  $region10: #{encoder_tree_forward.1} parent=0 // pred_check
    _
  $region11: #{encoder_tree_forward.1} parent=0 // pred_check_branch
    %19 = sbr.rel (0) target = $region13
  $region12: #{encoder_tree_forward.1} parent=0 // pred_region
    _
  $region13: #{encoder_tree_forward.1} parent=0 // pred_fallthru
    _
  // Predicated region
  $region14: #{encoder_tree_forward.1} parent=0 // pred_check
    _
  $region15: #{encoder_tree_forward.1} parent=0 // pred_check_branch
    %21 = sbr.rel (0) target = $region17
  $region16: #{encoder_tree_forward.1} parent=0 // pred_region
    _
  $region17: #{encoder_tree_forward.1} parent=0 // pred_fallthru
    _
  // Predicated region
  $region18: #{encoder_tree_forward.1} parent=0 // pred_check
    _
  $region19: #{encoder_tree_forward.1} parent=0 // pred_check_branch
    %23 = sbr.rel (0) target = $region21
  $region20: #{encoder_tree_forward.1} parent=0 // pred_region
    _
  $region21: #{encoder_tree_forward.1} parent=0 // pred_fallthru
    _
  // Predicated region
  $region22: #{encoder_tree_forward.1} parent=0 // pred_check
    _
  $region23: #{encoder_tree_forward.1} parent=0 // pred_check_branch
    %25 = sbr.rel (0) target = $region25
  $region24: #{encoder_tree_forward.1} parent=0 // pred_region
    _
  $region25: #{encoder_tree_forward.1} parent=0 // pred_fallthru
    _
  // Predicated region
  $region26: #{encoder_tree_forward.1} parent=0 // pred_check
    _
  $region27: #{encoder_tree_forward.1} parent=0 // pred_check_branch
    %27 = sbr.rel (0) target = $region29
  $region28: #{encoder_tree_forward.1} parent=0 // pred_region
    _
  $region29: #{encoder_tree_forward.1} parent=0 // pred_fallthru
    _
  // Predicated region
  $region30: #{encoder_tree_forward.1} parent=0 // pred_check
    _
  $region31: #{encoder_tree_forward.1} parent=0 // pred_check_branch
    %29 = sbr.rel (0) target = $region33
  $region32: #{encoder_tree_forward.1} parent=0 // pred_region
    _
  $region33: #{encoder_tree_forward.1} parent=0 // pred_fallthru
    _
  // Predicated region
  $region34: #{encoder_tree_forward.1} parent=0 // pred_check
    _
  $region35: #{encoder_tree_forward.1} parent=0 // pred_check_branch
    %31 = sbr.rel (0) target = $region37
  $region36: #{encoder_tree_forward.1} parent=0 // pred_region
    _
  $region37: #{encoder_tree_forward.1} parent=0 // pred_fallthru
    _
  %v32 = vld [vmem:[%s0] sm:$0xff]
  %v33 = vld [vmem:[%s0 + $0x8] sm:$0xff]
  %v34 = vld [vmem:[%s0 + $0x10] sm:$0xff]
  %v35 = vld [vmem:[%s0 + $0x18] sm:$0xff]
  %v36 = vld [vmem:[%s0 + $0x20] sm:$0xff]
  %v37 = vld [vmem:[%s0 + $0x28] sm:$0xff]
  %v38 = vld [vmem:[%s0 + $0x30] sm:$0xff]
  %v39 = vld [vmem:[%s0 + $0x38] sm:$0xff]
  %v40 = vld [vmem:[%s0 + $0x40] sm:$0xff]
  %v41 = vld [vmem:[%s0 + $0x48] sm:$0xff]
  %v42 = vld [vmem:[%s0 + $0x50] sm:$0xff]
  %v43 = vld [vmem:[%s0 + $0x58] sm:$0xff]
  %v44 = vld [vmem:[%s0 + $0x60] sm:$0xff]
  %v45 = vld [vmem:[%s0 + $0x68] sm:$0xff]
  %v46 = vld [vmem:[%s0 + $0x70] sm:$0xff]
  %v47 = vld [vmem:[%s0 + $0x78] sm:$0xff]
  %v48 = vld [vmem:[%s0 + $0x80] sm:$0xff]
  %v49 = vld [vmem:[%s0 + $0x88] sm:$0xff]
  %v50 = vld [vmem:[%s0 + $0x90] sm:$0xff]
  %v51 = vld [vmem:[%s0 + $0x98] sm:$0xff]
  %v52 = vld [vmem:[%s0 + $0xa0] sm:$0xff]
  %v53 = vld [vmem:[%s0 + $0xa8] sm:$0xff]
  %v54 = vld [vmem:[%s6] sm:$0xff]
  %v55 = vld [vmem:[%s6 + $0x8] sm:$0xff]
  %v56 = vld [vmem:[%s6 + $0x10] sm:$0xff]
  %v57 = vld [vmem:[%s6 + $0x18] sm:$0xff]
  %v58 = vld [vmem:[%s6 + $0x20] sm:$0xff]
  %v59 = vld [vmem:[%s6 + $0x28] sm:$0xff]
  %v60 = vld [vmem:[%s6 + $0x30] sm:$0xff]
  %v61 = vld [vmem:[%s6 + $0x38] sm:$0xff]
  %vm62 = vcmask 719872
  %v64 = vsel %vm62, %v54, 0
  %v67 = vsel %vm62, %v55, 0
  %v70 = vsel %vm62, %v56, 0
  %v73 = vsel %vm62, %v57, 0
  %v76 = vsel %vm62, %v58, 0
  %v79 = vsel %vm62, %v59, 0
  %v82 = vsel %vm62, %v60, 0
  %v85 = vsel %vm62, %v61, 0
  %87 = vmatprep.subr.mxu0 %v33
  %88 = vmatpush1.msra.mxu0 %v32
  %89 = vmatprep.subr.mxu0 %v35
  %90 = vmatpush1.msra.mxu0 %v34
  %91 = vmatprep.subr.mxu0 %v37
  %92 = vmatpush1.msra.mxu0 %v36
  %93 = vmatprep.subr.mxu0 %v39
  %94 = vmatpush1.msra.mxu0 %v38
  %95 = vmatprep.subr.mxu0 %v41
  %96 = vmatpush1.msra.mxu0 %v40
  %97 = vmatprep.subr.mxu0 %v43
  %98 = vmatpush1.msra.mxu0 %v42
  %99 = vmatprep.subr.mxu0 %v45
  %100 = vmatpush1.msra.mxu0 %v44
  %101 = vmatprep.subr.mxu0 %v47
  %102 = vmatpush1.msra.mxu0 %v46
  %103 = vmatprep.subr.mxu0 %v49
  %104 = vmatpush1.msra.mxu0 %v48
  %105 = vmatprep.subr.mxu0 %v51
  %106 = vmatpush1.msra.mxu0 %v50
  %107 = vmatprep.subr.mxu0 %v53
  %108 = vmatpush1.msra.mxu0 %v52
  %109 = vmatprep.subr.mxu0 0.0
  %110 = vmatpush1.msra.mxu0 0.0
  %111 = vmatprep.subr.mxu0 0.0
  %112 = vmatpush1.msra.mxu0 0.0
  %113 = vmatprep.subr.mxu0 0.0
  %114 = vmatpush1.msra.mxu0 0.0
  %115 = vmatprep.subr.mxu0 0.0
  %116 = vmatpush1.msra.mxu0 0.0
  %117 = vmatprep.subr.mxu0 0.0
  %118 = vmatpush1.msra.mxu0 0.0
  %119 = vmatprep.subr.mxu0 0.0
  %120 = vmatpush1.msra.mxu0 0.0
  %121 = vmatprep.subr.mxu0 0.0
  %122 = vmatpush1.msra.mxu0 0.0
  %123 = vmatprep.subr.mxu0 0.0
  %124 = vmatpush1.msra.mxu0 0.0
  %125 = vmatprep.subr.mxu0 0.0
  %126 = vmatpush1.msra.mxu0 0.0
  %127 = vmatprep.subr.mxu0 0.0
  %128 = vmatpush1.msra.mxu0 0.0
  %129 = vmatprep.subr.mxu0 0.0
  %130 = vmatpush1.msra.mxu0 0.0
  %131 = vmatprep.subr.mxu0 0.0
  %132 = vmatpush1.msra.mxu0 0.0
  %133 = vmatprep.subr.mxu0 0.0
  %134 = vmatpush1.msra.mxu0 0.0
  %135 = vmatprep.subr.mxu0 0.0
  %136 = vmatpush1.msra.mxu0 0.0
  %137 = vmatprep.subr.mxu0 0.0
  %138 = vmatpush1.msra.mxu0 0.0
  %139 = vmatprep.subr.mxu0 0.0
  %140 = vmatpush1.msra.mxu0 0.0
  %141 = vmatprep.subr.mxu0 0.0
  %142 = vmatpush1.msra.mxu0 0.0
  %143 = vmatprep.subr.mxu0 0.0
  %144 = vmatpush1.msra.mxu0 0.0
  %145 = vmatprep.subr.mxu0 0.0
  %146 = vmatpush1.msra.mxu0 0.0
  %147 = vmatprep.subr.mxu0 0.0
  %148 = vmatpush1.msra.mxu0 0.0
  %149 = vmatprep.subr.mxu0 0.0
  %150 = vmatpush1.msra.mxu0 0.0
  %151 = vmatprep.mubr.f32.mxu0 0.0
  %152 = vmatmul.mubr.f32.gmra.mrb[0].mxu0 %v64
  %v153 = vpop.f32.mrb[0].mxu0
  %v154 = vadd.f32 0.0, %v153
  %v155 = vpop.f32.mrb[0].mxu0
  %v156 = vadd.f32 0.0, %v155
  %157 = vmatprep.mubr.f32.mxu0 0.0
  %158 = vmatmul.mubr.f32.gmra.mrb[0].mxu0 %v67
  %v159 = vpop.f32.mrb[0].mxu0
  %v160 = vadd.f32 0.0, %v159
  %v161 = vpop.f32.mrb[0].mxu0
  %v162 = vadd.f32 0.0, %v161
  %163 = vmatprep.mubr.f32.mxu0 0.0
  %164 = vmatmul.mubr.f32.gmra.mrb[0].mxu0 %v70
  %v165 = vpop.f32.mrb[0].mxu0
  %v166 = vadd.f32 0.0, %v165
  %v167 = vpop.f32.mrb[0].mxu0
  %v168 = vadd.f32 0.0, %v167
  %169 = vmatprep.mubr.f32.mxu0 0.0
  %170 = vmatmul.mubr.f32.gmra.mrb[0].mxu0 %v73
  %v171 = vpop.f32.mrb[0].mxu0
  %v172 = vadd.f32 0.0, %v171
  %v173 = vpop.f32.mrb[0].mxu0
  %v174 = vadd.f32 0.0, %v173
  %175 = vmatprep.mubr.f32.mxu0 0.0
  %176 = vmatmul.mubr.f32.gmra.mrb[0].mxu0 %v76
  %v177 = vpop.f32.mrb[0].mxu0
  %v178 = vadd.f32 0.0, %v177
  %v179 = vpop.f32.mrb[0].mxu0
  %v180 = vadd.f32 0.0, %v179
  %181 = vmatprep.mubr.f32.mxu0 0.0
  %182 = vmatmul.mubr.f32.gmra.mrb[0].mxu0 %v79
  %v183 = vpop.f32.mrb[0].mxu0
  %v184 = vadd.f32 0.0, %v183
  %v185 = vpop.f32.mrb[0].mxu0
  %v186 = vadd.f32 0.0, %v185
  %187 = vmatprep.mubr.f32.mxu0 0.0
  %188 = vmatmul.mubr.f32.gmra.mrb[0].mxu0 %v82
  %v189 = vpop.f32.mrb[0].mxu0
  %v190 = vadd.f32 0.0, %v189
  %v191 = vpop.f32.mrb[0].mxu0
  %v192 = vadd.f32 0.0, %v191
  %193 = vmatprep.mubr.f32.mxu0 0.0
  %194 = vmatmul.mubr.f32.gmra.mrb[0].mxu0 %v85
  %v195 = vpop.f32.mrb[0].mxu0
  %v196 = vadd.f32 0.0, %v195
  %v197 = vpop.f32.mrb[0].mxu0
  %v198 = vadd.f32 0.0, %v197
  %199 = vdwg.mxu0
  %v200 = vld [vmem:[%s1] sm:$0xff]
  %v201 = vld [vmem:[%s1 + $0x8] sm:$0xff]
  %v202 = vld [vmem:[%s1 + $0x10] sm:$0xff]
  %v203 = vld [vmem:[%s1 + $0x18] sm:$0xff]
  %v204 = vld [vmem:[%s1 + $0x20] sm:$0xff]
  %v205 = vld [vmem:[%s1 + $0x28] sm:$0xff]
  %v206 = vld [vmem:[%s1 + $0x30] sm:$0xff]
  %v207 = vld [vmem:[%s1 + $0x38] sm:$0xff]
  %v208 = vld [vmem:[%s1 + $0x40] sm:$0xff]
  %v209 = vld [vmem:[%s1 + $0x48] sm:$0xff]
  %v210 = vld [vmem:[%s1 + $0x50] sm:$0xff]
  %v211 = vld [vmem:[%s1 + $0x58] sm:$0xff]
  %v212 = vld [vmem:[%s1 + $0x60] sm:$0xff]
  %v213 = vld [vmem:[%s1 + $0x68] sm:$0xff]
  %v214 = vld [vmem:[%s1 + $0x70] sm:$0xff]
  %v215 = vld [vmem:[%s1 + $0x78] sm:$0xff]
  %v216 = vld [vmem:[%s1 + $0x80] sm:$0xff]
  %v217 = vld [vmem:[%s1 + $0x88] sm:$0xff]
  %v218 = vld [vmem:[%s1 + $0x90] sm:$0xff]
  %v219 = vld [vmem:[%s1 + $0x98] sm:$0xff]
  %v220 = vld [vmem:[%s2] sm:$0xff]
  %v221 = vld [vmem:[%s2 + $0x8] sm:$0xff]
  %v222 = vld [vmem:[%s2 + $0x10] sm:$0xff]
  %v223 = vld [vmem:[%s2 + $0x18] sm:$0xff]
  %v224 = vld [vmem:[%s2 + $0x20] sm:$0xff]
  %v225 = vld [vmem:[%s2 + $0x28] sm:$0xff]
  %v226 = vld [vmem:[%s2 + $0x30] sm:$0xff]
  %v227 = vld [vmem:[%s2 + $0x38] sm:$0xff]
  %v228 = vld [vmem:[%s2 + $0x40] sm:$0xff]
  %v229 = vld [vmem:[%s2 + $0x48] sm:$0xff]
  %v230 = vld [vmem:[%s2 + $0x50] sm:$0xff]
  %v231 = vld [vmem:[%s2 + $0x58] sm:$0xff]
  %v232 = vld [vmem:[%s2 + $0x60] sm:$0xff]
  %v233 = vld [vmem:[%s2 + $0x68] sm:$0xff]
  %v234 = vld [vmem:[%s2 + $0x70] sm:$0xff]
  %v235 = vld [vmem:[%s2 + $0x78] sm:$0xff]
  %v236 = vld [vmem:[%s2 + $0x80] sm:$0xff]
  %v237 = vld [vmem:[%s2 + $0x88] sm:$0xff]
  %v238 = vld [vmem:[%s2 + $0x90] sm:$0xff]
  %v239 = vld [vmem:[%s2 + $0x98] sm:$0xff]
  %241 = vset.pattern.permute.xlu0 0
  %242 = vperm.xlu0 %241, %v220
  %v243 = vpop.permute.xlu0 %242
  %246 = vset.pattern.permute.xlu0 0
  %247 = vperm.xlu0 %246, %v221
  %v248 = vpop.permute.xlu0 %247
  %251 = vset.pattern.permute.xlu0 0
  %252 = vperm.xlu0 %251, %v222
  %v253 = vpop.permute.xlu0 %252
  %256 = vset.pattern.permute.xlu0 0
  %257 = vperm.xlu0 %256, %v223
  %v258 = vpop.permute.xlu0 %257
  %261 = vset.pattern.permute.xlu0 0
  %262 = vperm.xlu0 %261, %v224
  %v263 = vpop.permute.xlu0 %262
  %266 = vset.pattern.permute.xlu0 0
  %267 = vperm.xlu0 %266, %v225
  %v268 = vpop.permute.xlu0 %267
  %271 = vset.pattern.permute.xlu0 0
  %272 = vperm.xlu0 %271, %v226
  %v273 = vpop.permute.xlu0 %272
  %276 = vset.pattern.permute.xlu0 0
  %277 = vperm.xlu0 %276, %v227
  %v278 = vpop.permute.xlu0 %277
  %281 = vset.pattern.permute.xlu0 0
  %282 = vperm.xlu0 %281, %v228
  %v283 = vpop.permute.xlu0 %282
  %286 = vset.pattern.permute.xlu0 0
  %287 = vperm.xlu0 %286, %v229
  %v288 = vpop.permute.xlu0 %287
  %291 = vset.pattern.permute.xlu0 0
  %292 = vperm.xlu0 %291, %v230
  %v293 = vpop.permute.xlu0 %292
  %296 = vset.pattern.permute.xlu0 0
  %297 = vperm.xlu0 %296, %v231
  %v298 = vpop.permute.xlu0 %297
  %301 = vset.pattern.permute.xlu0 0
  %302 = vperm.xlu0 %301, %v232
  %v303 = vpop.permute.xlu0 %302
  %306 = vset.pattern.permute.xlu0 0
  %307 = vperm.xlu0 %306, %v233
  %v308 = vpop.permute.xlu0 %307
  %311 = vset.pattern.permute.xlu0 0
  %312 = vperm.xlu0 %311, %v234
  %v313 = vpop.permute.xlu0 %312
  %316 = vset.pattern.permute.xlu0 0
  %317 = vperm.xlu0 %316, %v235
  %v318 = vpop.permute.xlu0 %317
  %321 = vset.pattern.permute.xlu0 0
  %322 = vperm.xlu0 %321, %v236
  %v323 = vpop.permute.xlu0 %322
  %326 = vset.pattern.permute.xlu0 0
  %327 = vperm.xlu0 %326, %v237
  %v328 = vpop.permute.xlu0 %327
  %331 = vset.pattern.permute.xlu0 0
  %332 = vperm.xlu0 %331, %v238
  %v333 = vpop.permute.xlu0 %332
  %336 = vset.pattern.permute.xlu0 0
  %337 = vperm.xlu0 %336, %v239
  %v338 = vpop.permute.xlu0 %337
  %vm340 = vcmask 523264
  %v342 = vsel %vm340, %v200, 0
  %v345 = vsel %vm340, %v201, 0
  %v348 = vsel %vm340, %v202, 0
  %v351 = vsel %vm340, %v203, 0
  %v354 = vsel %vm340, %v204, 0
  %v357 = vsel %vm340, %v205, 0
  %v360 = vsel %vm340, %v206, 0
  %v363 = vsel %vm340, %v207, 0
  %v366 = vsel %vm340, %v208, 0
  %v369 = vsel %vm340, %v209, 0
  %v372 = vsel %vm340, %v210, 0
  %v375 = vsel %vm340, %v211, 0
  %v378 = vsel %vm340, %v212, 0
  %v381 = vsel %vm340, %v213, 0
  %v384 = vsel %vm340, %v214, 0
  %v387 = vsel %vm340, %v215, 0
  %v390 = vsel %vm340, %v216, 0
  %v393 = vsel %vm340, %v217, 0
  %v396 = vsel %vm340, %v218, 0
  %v399 = vsel %vm340, %v219, 0
  %401 = vmatprep.subr.mxu0 %v156
  %402 = vmatpush1.msra.mxu0 %v154
  %403 = vmatprep.subr.mxu0 %v162
  %404 = vmatpush1.msra.mxu0 %v160
  %405 = vmatprep.subr.mxu0 %v168
  %406 = vmatpush1.msra.mxu0 %v166
  %407 = vmatprep.subr.mxu0 %v174
  %408 = vmatpush1.msra.mxu0 %v172
  %409 = vmatprep.subr.mxu0 %v180
  %410 = vmatpush1.msra.mxu0 %v178
  %411 = vmatprep.subr.mxu0 %v186
  %412 = vmatpush1.msra.mxu0 %v184
  %413 = vmatprep.subr.mxu0 %v192
  %414 = vmatpush1.msra.mxu0 %v190
  %415 = vmatprep.subr.mxu0 %v198
  %416 = vmatpush1.msra.mxu0 %v196
  %417 = vmatprep.subr.mxu0 0.0
  %418 = vmatpush1.msra.mxu0 0.0
  %419 = vmatprep.subr.mxu0 0.0
  %420 = vmatpush1.msra.mxu0 0.0
  %421 = vmatprep.subr.mxu0 0.0
  %422 = vmatpush1.msra.mxu0 0.0
  %423 = vmatprep.subr.mxu0 0.0
  %424 = vmatpush1.msra.mxu0 0.0
  %425 = vmatprep.subr.mxu0 0.0
  %426 = vmatpush1.msra.mxu0 0.0
  %427 = vmatprep.subr.mxu0 0.0
  %428 = vmatpush1.msra.mxu0 0.0
  %429 = vmatprep.subr.mxu0 0.0
  %430 = vmatpush1.msra.mxu0 0.0
  %431 = vmatprep.subr.mxu0 0.0
  %432 = vmatpush1.msra.mxu0 0.0
  %433 = vmatprep.subr.mxu0 0.0
  %434 = vmatpush1.msra.mxu0 0.0
  %435 = vmatprep.subr.mxu0 0.0
  %436 = vmatpush1.msra.mxu0 0.0
  %437 = vmatprep.subr.mxu0 0.0
  %438 = vmatpush1.msra.mxu0 0.0
  %439 = vmatprep.subr.mxu0 0.0
  %440 = vmatpush1.msra.mxu0 0.0
  %441 = vmatprep.subr.mxu0 0.0
  %442 = vmatpush1.msra.mxu0 0.0
  %443 = vmatprep.subr.mxu0 0.0
  %444 = vmatpush1.msra.mxu0 0.0
  %445 = vmatprep.subr.mxu0 0.0
  %446 = vmatpush1.msra.mxu0 0.0
  %447 = vmatprep.subr.mxu0 0.0
  %448 = vmatpush1.msra.mxu0 0.0
  %449 = vmatprep.subr.mxu0 0.0
  %450 = vmatpush1.msra.mxu0 0.0
  %451 = vmatprep.subr.mxu0 0.0
  %452 = vmatpush1.msra.mxu0 0.0
  %453 = vmatprep.subr.mxu0 0.0
  %454 = vmatpush1.msra.mxu0 0.0
  %455 = vmatprep.subr.mxu0 0.0
  %456 = vmatpush1.msra.mxu0 0.0
  %457 = vmatprep.subr.mxu0 0.0
  %458 = vmatpush1.msra.mxu0 0.0
  %459 = vmatprep.subr.mxu0 0.0
  %460 = vmatpush1.msra.mxu0 0.0
  %461 = vmatprep.subr.mxu0 0.0
  %462 = vmatpush1.msra.mxu0 0.0
  %463 = vmatprep.subr.mxu0 0.0
  %464 = vmatpush1.msra.mxu0 0.0
  %465 = vmatprep.mubr.f32.mxu0 0.0
  %466 = vmatmul.mubr.f32.gmra.mrb[0].mxu0 %v342
  %v467 = vpop.f32.mrb[0].mxu0
  %v468 = vadd.f32 %v243, %v467
  %v469 = vpop.f32.mrb[0].mxu0
  %v470 = vadd.f32 %v243, %v469
  %471 = vmatprep.mubr.f32.mxu0 0.0
  %472 = vmatmul.mubr.f32.gmra.mrb[0].mxu0 %v345
  %v473 = vpop.f32.mrb[0].mxu0
  %v474 = vadd.f32 %v248, %v473
  %v475 = vpop.f32.mrb[0].mxu0
  %v476 = vadd.f32 %v248, %v475
  %477 = vmatprep.mubr.f32.mxu0 0.0
  %478 = vmatmul.mubr.f32.gmra.mrb[0].mxu0 %v348
  %v479 = vpop.f32.mrb[0].mxu0
  %v480 = vadd.f32 %v253, %v479
  %v481 = vpop.f32.mrb[0].mxu0
  %v482 = vadd.f32 %v253, %v481
  %483 = vmatprep.mubr.f32.mxu0 0.0
  %484 = vmatmul.mubr.f32.gmra.mrb[0].mxu0 %v351
  %v485 = vpop.f32.mrb[0].mxu0
  %v486 = vadd.f32 %v258, %v485
  %v487 = vpop.f32.mrb[0].mxu0
  %v488 = vadd.f32 %v258, %v487
  %489 = vmatprep.mubr.f32.mxu0 0.0
  %490 = vmatmul.mubr.f32.gmra.mrb[0].mxu0 %v354
  %v491 = vpop.f32.mrb[0].mxu0
  %v492 = vadd.f32 %v263, %v491
  %v493 = vpop.f32.mrb[0].mxu0
  %v494 = vadd.f32 %v263, %v493
  %495 = vmatprep.mubr.f32.mxu0 0.0
  %496 = vmatmul.mubr.f32.gmra.mrb[0].mxu0 %v357
  %v497 = vpop.f32.mrb[0].mxu0
  %v498 = vadd.f32 %v268, %v497
  %v499 = vpop.f32.mrb[0].mxu0
  %v500 = vadd.f32 %v268, %v499
  %501 = vmatprep.mubr.f32.mxu0 0.0
  %502 = vmatmul.mubr.f32.gmra.mrb[0].mxu0 %v360
  %v503 = vpop.f32.mrb[0].mxu0
  %v504 = vadd.f32 %v273, %v503
  %v505 = vpop.f32.mrb[0].mxu0
  %v506 = vadd.f32 %v273, %v505
  %507 = vmatprep.mubr.f32.mxu0 0.0
  %508 = vmatmul.mubr.f32.gmra.mrb[0].mxu0 %v363
  %v509 = vpop.f32.mrb[0].mxu0
  %v510 = vadd.f32 %v278, %v509
  %v511 = vpop.f32.mrb[0].mxu0
  %v512 = vadd.f32 %v278, %v511
  %513 = vmatprep.mubr.f32.mxu0 0.0
  %514 = vmatmul.mubr.f32.gmra.mrb[0].mxu0 %v366
  %v515 = vpop.f32.mrb[0].mxu0
  %v516 = vadd.f32 %v283, %v515
  %v517 = vpop.f32.mrb[0].mxu0
  %v518 = vadd.f32 %v283, %v517
  %519 = vmatprep.mubr.f32.mxu0 0.0
  %520 = vmatmul.mubr.f32.gmra.mrb[0].mxu0 %v369
  %v521 = vpop.f32.mrb[0].mxu0
  %v522 = vadd.f32 %v288, %v521
  %v523 = vpop.f32.mrb[0].mxu0
  %v524 = vadd.f32 %v288, %v523
  %525 = vmatprep.mubr.f32.mxu0 0.0
  %526 = vmatmul.mubr.f32.gmra.mrb[0].mxu0 %v372
  %v527 = vpop.f32.mrb[0].mxu0
  %v528 = vadd.f32 %v293, %v527
  %v529 = vpop.f32.mrb[0].mxu0
  %v530 = vadd.f32 %v293, %v529
  %531 = vmatprep.mubr.f32.mxu0 0.0
  %532 = vmatmul.mubr.f32.gmra.mrb[0].mxu0 %v375
  %v533 = vpop.f32.mrb[0].mxu0
  %v534 = vadd.f32 %v298, %v533
  %v535 = vpop.f32.mrb[0].mxu0
  %v536 = vadd.f32 %v298, %v535
  %537 = vmatprep.mubr.f32.mxu0 0.0
  %538 = vmatmul.mubr.f32.gmra.mrb[0].mxu0 %v378
  %v539 = vpop.f32.mrb[0].mxu0
  %v540 = vadd.f32 %v303, %v539
  %v541 = vpop.f32.mrb[0].mxu0
  %v542 = vadd.f32 %v303, %v541
  %543 = vmatprep.mubr.f32.mxu0 0.0
  %544 = vmatmul.mubr.f32.gmra.mrb[0].mxu0 %v381
  %v545 = vpop.f32.mrb[0].mxu0
  %v546 = vadd.f32 %v308, %v545
  %v547 = vpop.f32.mrb[0].mxu0
  %v548 = vadd.f32 %v308, %v547
  %549 = vmatprep.mubr.f32.mxu0 0.0
  %550 = vmatmul.mubr.f32.gmra.mrb[0].mxu0 %v384
  %v551 = vpop.f32.mrb[0].mxu0
  %v552 = vadd.f32 %v313, %v551
  %v553 = vpop.f32.mrb[0].mxu0
  %v554 = vadd.f32 %v313, %v553
  %555 = vmatprep.mubr.f32.mxu0 0.0
  %556 = vmatmul.mubr.f32.gmra.mrb[0].mxu0 %v387
  %v557 = vpop.f32.mrb[0].mxu0
  %v558 = vadd.f32 %v318, %v557
  %v559 = vpop.f32.mrb[0].mxu0
  %v560 = vadd.f32 %v318, %v559
  %561 = vmatprep.mubr.f32.mxu0 0.0
  %562 = vmatmul.mubr.f32.gmra.mrb[0].mxu0 %v390
  %v563 = vpop.f32.mrb[0].mxu0
  %v564 = vadd.f32 %v323, %v563
  %v565 = vpop.f32.mrb[0].mxu0
  %v566 = vadd.f32 %v323, %v565
  %567 = vmatprep.mubr.f32.mxu0 0.0
  %568 = vmatmul.mubr.f32.gmra.mrb[0].mxu0 %v393
  %v569 = vpop.f32.mrb[0].mxu0
  %v570 = vadd.f32 %v328, %v569
  %v571 = vpop.f32.mrb[0].mxu0
  %v572 = vadd.f32 %v328, %v571
  %573 = vmatprep.mubr.f32.mxu0 0.0
  %574 = vmatmul.mubr.f32.gmra.mrb[0].mxu0 %v396
  %v575 = vpop.f32.mrb[0].mxu0
  %v576 = vadd.f32 %v333, %v575
  %v577 = vpop.f32.mrb[0].mxu0
  %v578 = vadd.f32 %v333, %v577
  %579 = vmatprep.mubr.f32.mxu0 0.0
  %580 = vmatmul.mubr.f32.gmra.mrb[0].mxu0 %v399
  %v581 = vpop.f32.mrb[0].mxu0
  %v582 = vadd.f32 %v338, %v581
  %v583 = vpop.f32.mrb[0].mxu0
  %v584 = vadd.f32 %v338, %v583
  %585 = vdwg.mxu0
  %vm586 = vcmp.ge.f32.partialorder %v468, 0.0
  %vm587 = vcmp.ge.f32.partialorder %v470, 0.0
  %vm588 = vcmp.ge.f32.partialorder %v474, 0.0
  %vm589 = vcmp.ge.f32.partialorder %v476, 0.0
  %vm590 = vcmp.ge.f32.partialorder %v480, 0.0
  %vm591 = vcmp.ge.f32.partialorder %v482, 0.0
  %vm592 = vcmp.ge.f32.partialorder %v486, 0.0
  %vm593 = vcmp.ge.f32.partialorder %v488, 0.0
  %vm594 = vcmp.ge.f32.partialorder %v492, 0.0
  %vm595 = vcmp.ge.f32.partialorder %v494, 0.0
  %vm596 = vcmp.ge.f32.partialorder %v498, 0.0
  %vm597 = vcmp.ge.f32.partialorder %v500, 0.0
  %vm598 = vcmp.ge.f32.partialorder %v504, 0.0
  %vm599 = vcmp.ge.f32.partialorder %v506, 0.0
  %vm600 = vcmp.ge.f32.partialorder %v510, 0.0
  %vm601 = vcmp.ge.f32.partialorder %v512, 0.0
  %vm602 = vcmp.ge.f32.partialorder %v516, 0.0
  %vm603 = vcmp.ge.f32.partialorder %v518, 0.0
  %vm604 = vcmp.ge.f32.partialorder %v522, 0.0
  %vm605 = vcmp.ge.f32.partialorder %v524, 0.0
  %vm606 = vcmp.ge.f32.partialorder %v528, 0.0
  %vm607 = vcmp.ge.f32.partialorder %v530, 0.0
  %vm608 = vcmp.ge.f32.partialorder %v534, 0.0
  %vm609 = vcmp.ge.f32.partialorder %v536, 0.0
  %vm610 = vcmp.ge.f32.partialorder %v540, 0.0
  %vm611 = vcmp.ge.f32.partialorder %v542, 0.0
  %vm612 = vcmp.ge.f32.partialorder %v546, 0.0
  %vm613 = vcmp.ge.f32.partialorder %v548, 0.0
  %vm614 = vcmp.ge.f32.partialorder %v552, 0.0
  %vm615 = vcmp.ge.f32.partialorder %v554, 0.0
  %vm616 = vcmp.ge.f32.partialorder %v558, 0.0
  %vm617 = vcmp.ge.f32.partialorder %v560, 0.0
  %vm618 = vcmp.ge.f32.partialorder %v564, 0.0
  %vm619 = vcmp.ge.f32.partialorder %v566, 0.0
  %vm620 = vcmp.ge.f32.partialorder %v570, 0.0
  %vm621 = vcmp.ge.f32.partialorder %v572, 0.0
  %vm622 = vcmp.ge.f32.partialorder %v576, 0.0
  %vm623 = vcmp.ge.f32.partialorder %v578, 0.0
  %vm624 = vcmp.ge.f32.partialorder %v582, 0.0
  %vm625 = vcmp.ge.f32.partialorder %v584, 0.0
  %v626 = vmul.f32 %v468, 0.01
  %v627 = vmul.f32 %v470, 0.01
  %v628 = vmul.f32 %v474, 0.01
  %v629 = vmul.f32 %v476, 0.01
  %v630 = vmul.f32 %v480, 0.01
  %v631 = vmul.f32 %v482, 0.01
  %v632 = vmul.f32 %v486, 0.01
  %v633 = vmul.f32 %v488, 0.01
  %v634 = vmul.f32 %v492, 0.01
  %v635 = vmul.f32 %v494, 0.01
  %v636 = vmul.f32 %v498, 0.01
  %v637 = vmul.f32 %v500, 0.01
  %v638 = vmul.f32 %v504, 0.01
  %v639 = vmul.f32 %v506, 0.01
  %v640 = vmul.f32 %v510, 0.01
  %v641 = vmul.f32 %v512, 0.01
  %v642 = vmul.f32 %v516, 0.01
  %v643 = vmul.f32 %v518, 0.01
  %v644 = vmul.f32 %v522, 0.01
  %v645 = vmul.f32 %v524, 0.01
  %v646 = vmul.f32 %v528, 0.01
  %v647 = vmul.f32 %v530, 0.01
  %v648 = vmul.f32 %v534, 0.01
  %v649 = vmul.f32 %v536, 0.01
  %v650 = vmul.f32 %v540, 0.01
  %v651 = vmul.f32 %v542, 0.01
  %v652 = vmul.f32 %v546, 0.01
  %v653 = vmul.f32 %v548, 0.01
  %v654 = vmul.f32 %v552, 0.01
  %v655 = vmul.f32 %v554, 0.01
  %v656 = vmul.f32 %v558, 0.01
  %v657 = vmul.f32 %v560, 0.01
  %v658 = vmul.f32 %v564, 0.01
  %v659 = vmul.f32 %v566, 0.01
  %v660 = vmul.f32 %v570, 0.01
  %v661 = vmul.f32 %v572, 0.01
  %v662 = vmul.f32 %v576, 0.01
  %v663 = vmul.f32 %v578, 0.01
  %v664 = vmul.f32 %v582, 0.01
  %v665 = vmul.f32 %v584, 0.01
  %v666 = vsel %vm586, %v468, %v626
  %v667 = vsel %vm587, %v470, %v627
  %v668 = vsel %vm588, %v474, %v628
  %v669 = vsel %vm589, %v476, %v629
  %v670 = vsel %vm590, %v480, %v630
  %v671 = vsel %vm591, %v482, %v631
  %v672 = vsel %vm592, %v486, %v632
  %v673 = vsel %vm593, %v488, %v633
  %v674 = vsel %vm594, %v492, %v634
  %v675 = vsel %vm595, %v494, %v635
  %v676 = vsel %vm596, %v498, %v636
  %v677 = vsel %vm597, %v500, %v637
  %v678 = vsel %vm598, %v504, %v638
  %v679 = vsel %vm599, %v506, %v639
  %v680 = vsel %vm600, %v510, %v640
  %v681 = vsel %vm601, %v512, %v641
  %v682 = vsel %vm602, %v516, %v642
  %v683 = vsel %vm603, %v518, %v643
  %v684 = vsel %vm604, %v522, %v644
  %v685 = vsel %vm605, %v524, %v645
  %v686 = vsel %vm606, %v528, %v646
  %v687 = vsel %vm607, %v530, %v647
  %v688 = vsel %vm608, %v534, %v648
  %v689 = vsel %vm609, %v536, %v649
  %v690 = vsel %vm610, %v540, %v650
  %v691 = vsel %vm611, %v542, %v651
  %v692 = vsel %vm612, %v546, %v652
  %v693 = vsel %vm613, %v548, %v653
  %v694 = vsel %vm614, %v552, %v654
  %v695 = vsel %vm615, %v554, %v655
  %v696 = vsel %vm616, %v558, %v656
  %v697 = vsel %vm617, %v560, %v657
  %v698 = vsel %vm618, %v564, %v658
  %v699 = vsel %vm619, %v566, %v659
  %v700 = vsel %vm620, %v570, %v660
  %v701 = vsel %vm621, %v572, %v661
  %v702 = vsel %vm622, %v576, %v662
  %v703 = vsel %vm623, %v578, %v663
  %v704 = vsel %vm624, %v582, %v664
  %v705 = vsel %vm625, %v584, %v665
  %v706 = vld [vmem:[%s3] sm:$0xff]
  %v707 = vld [vmem:[%s3 + $0x8] sm:$0xff]
  %v708 = vld [vmem:[%s3 + $0x10] sm:$0xff]
  %v709 = vld [vmem:[%s3 + $0x18] sm:$0xff]
  %v710 = vld [vmem:[%s3 + $0x20] sm:$0xff]
  %v711 = vld [vmem:[%s3 + $0x28] sm:$0xff]
  %v712 = vld [vmem:[%s3 + $0x30] sm:$0xff]
  %v713 = vld [vmem:[%s3 + $0x38] sm:$0xff]
  %v714 = vld [vmem:[%s3 + $0x40] sm:$0xff]
  %v715 = vld [vmem:[%s3 + $0x48] sm:$0xff]
  %v716 = vld [vmem:[%s3 + $0x50] sm:$0xff]
  %v717 = vld [vmem:[%s3 + $0x58] sm:$0xff]
  %v718 = vld [vmem:[%s3 + $0x60] sm:$0xff]
  %v719 = vld [vmem:[%s3 + $0x68] sm:$0xff]
  %v720 = vld [vmem:[%s3 + $0x70] sm:$0xff]
  %v721 = vld [vmem:[%s3 + $0x78] sm:$0xff]
  %v722 = vld [vmem:[%s4] sm:$0xff]
  %v723 = vld [vmem:[%s4 + $0x8] sm:$0xff]
  %v724 = vld [vmem:[%s4 + $0x10] sm:$0xff]
  %v725 = vld [vmem:[%s4 + $0x18] sm:$0xff]
  %v726 = vld [vmem:[%s4 + $0x20] sm:$0xff]
  %v727 = vld [vmem:[%s4 + $0x28] sm:$0xff]
  %v728 = vld [vmem:[%s4 + $0x30] sm:$0xff]
  %v729 = vld [vmem:[%s4 + $0x38] sm:$0xff]
  %731 = vset.pattern.permute.xlu0 0
  %732 = vperm.xlu0 %731, %v722
  %v733 = vpop.permute.xlu0 %732
  %736 = vset.pattern.permute.xlu0 0
  %737 = vperm.xlu0 %736, %v723
  %v738 = vpop.permute.xlu0 %737
  %741 = vset.pattern.permute.xlu0 0
  %742 = vperm.xlu0 %741, %v724
  %v743 = vpop.permute.xlu0 %742
  %746 = vset.pattern.permute.xlu0 0
  %747 = vperm.xlu0 %746, %v725
  %v748 = vpop.permute.xlu0 %747
  %751 = vset.pattern.permute.xlu0 0
  %752 = vperm.xlu0 %751, %v726
  %v753 = vpop.permute.xlu0 %752
  %756 = vset.pattern.permute.xlu0 0
  %757 = vperm.xlu0 %756, %v727
  %v758 = vpop.permute.xlu0 %757
  %761 = vset.pattern.permute.xlu0 0
  %762 = vperm.xlu0 %761, %v728
  %v763 = vpop.permute.xlu0 %762
  %766 = vset.pattern.permute.xlu0 0
  %767 = vperm.xlu0 %766, %v729
  %v768 = vpop.permute.xlu0 %767
  %vm770 = vcmask 261120
  %v772 = vsel %vm770, %v707, 0
  %v775 = vsel %vm770, %v709, 0
  %v778 = vsel %vm770, %v711, 0
  %v781 = vsel %vm770, %v713, 0
  %v784 = vsel %vm770, %v715, 0
  %v787 = vsel %vm770, %v717, 0
  %v790 = vsel %vm770, %v719, 0
  %v793 = vsel %vm770, %v721, 0
  %795 = vmatprep.subr.mxu0 %v667
  %796 = vmatpush1.msra.mxu0 %v666
  %797 = vmatprep.subr.mxu0 %v669
  %798 = vmatpush1.msra.mxu0 %v668
  %799 = vmatprep.subr.mxu0 %v671
  %800 = vmatpush1.msra.mxu0 %v670
  %801 = vmatprep.subr.mxu0 %v673
  %802 = vmatpush1.msra.mxu0 %v672
  %803 = vmatprep.subr.mxu0 %v675
  %804 = vmatpush1.msra.mxu0 %v674
  %805 = vmatprep.subr.mxu0 %v677
  %806 = vmatpush1.msra.mxu0 %v676
  %807 = vmatprep.subr.mxu0 %v679
  %808 = vmatpush1.msra.mxu0 %v678
  %809 = vmatprep.subr.mxu0 %v681
  %810 = vmatpush1.msra.mxu0 %v680
  %811 = vmatprep.subr.mxu0 %v683
  %812 = vmatpush1.msra.mxu0 %v682
  %813 = vmatprep.subr.mxu0 %v685
  %814 = vmatpush1.msra.mxu0 %v684
  %815 = vmatprep.subr.mxu0 %v687
  %816 = vmatpush1.msra.mxu0 %v686
  %817 = vmatprep.subr.mxu0 %v689
  %818 = vmatpush1.msra.mxu0 %v688
  %819 = vmatprep.subr.mxu0 %v691
  %820 = vmatpush1.msra.mxu0 %v690
  %821 = vmatprep.subr.mxu0 %v693
  %822 = vmatpush1.msra.mxu0 %v692
  %823 = vmatprep.subr.mxu0 %v695
  %824 = vmatpush1.msra.mxu0 %v694
  %825 = vmatprep.subr.mxu0 %v697
  %826 = vmatpush1.msra.mxu0 %v696
  %827 = vmatprep.subr.mxu0 %v699
  %828 = vmatpush1.msra.mxu0 %v698
  %829 = vmatprep.subr.mxu0 %v701
  %830 = vmatpush1.msra.mxu0 %v700
  %831 = vmatprep.subr.mxu0 %v703
  %832 = vmatpush1.msra.mxu0 %v702
  %833 = vmatprep.subr.mxu0 %v705
  %834 = vmatpush1.msra.mxu0 %v704
  %835 = vmatprep.subr.mxu0 0.0
  %836 = vmatpush1.msra.mxu0 0.0
  %837 = vmatprep.subr.mxu0 0.0
  %838 = vmatpush1.msra.mxu0 0.0
  %839 = vmatprep.subr.mxu0 0.0
  %840 = vmatpush1.msra.mxu0 0.0
  %841 = vmatprep.subr.mxu0 0.0
  %842 = vmatpush1.msra.mxu0 0.0
  %843 = vmatprep.subr.mxu0 0.0
  %844 = vmatpush1.msra.mxu0 0.0
  %845 = vmatprep.subr.mxu0 0.0
  %846 = vmatpush1.msra.mxu0 0.0
  %847 = vmatprep.subr.mxu0 0.0
  %848 = vmatpush1.msra.mxu0 0.0
  %849 = vmatprep.subr.mxu0 0.0
  %850 = vmatpush1.msra.mxu0 0.0
  %851 = vmatprep.subr.mxu0 0.0
  %852 = vmatpush1.msra.mxu0 0.0
  %853 = vmatprep.subr.mxu0 0.0
  %854 = vmatpush1.msra.mxu0 0.0
  %855 = vmatprep.subr.mxu0 0.0
  %856 = vmatpush1.msra.mxu0 0.0
  %857 = vmatprep.subr.mxu0 0.0
  %858 = vmatpush1.msra.mxu0 0.0
  %859 = vmatprep.mubr.f32.mxu0 %v772
  %860 = vmatmul.mubr.f32.gmra.mrb[0].mxu0 %v706
  %v861 = vpop.f32.mrb[0].mxu0
  %v862 = vadd.f32 %v733, %v861
  %v863 = vpop.f32.mrb[0].mxu0
  %v864 = vadd.f32 %v733, %v863
  %865 = vmatprep.mubr.f32.mxu0 %v775
  %866 = vmatmul.mubr.f32.gmra.mrb[0].mxu0 %v708
  %v867 = vpop.f32.mrb[0].mxu0
  %v868 = vadd.f32 %v738, %v867
  %v869 = vpop.f32.mrb[0].mxu0
  %v870 = vadd.f32 %v738, %v869
  %871 = vmatprep.mubr.f32.mxu0 %v778
  %872 = vmatmul.mubr.f32.gmra.mrb[0].mxu0 %v710
  %v873 = vpop.f32.mrb[0].mxu0
  %v874 = vadd.f32 %v743, %v873
  %v875 = vpop.f32.mrb[0].mxu0
  %v876 = vadd.f32 %v743, %v875
  %877 = vmatprep.mubr.f32.mxu0 %v781
  %878 = vmatmul.mubr.f32.gmra.mrb[0].mxu0 %v712
  %v879 = vpop.f32.mrb[0].mxu0
  %v880 = vadd.f32 %v748, %v879
  %v881 = vpop.f32.mrb[0].mxu0
  %v882 = vadd.f32 %v748, %v881
  %883 = vmatprep.mubr.f32.mxu0 %v784
  %884 = vmatmul.mubr.f32.gmra.mrb[0].mxu0 %v714
  %v885 = vpop.f32.mrb[0].mxu0
  %v886 = vadd.f32 %v753, %v885
  %v887 = vpop.f32.mrb[0].mxu0
  %v888 = vadd.f32 %v753, %v887
  %889 = vmatprep.mubr.f32.mxu0 %v787
  %890 = vmatmul.mubr.f32.gmra.mrb[0].mxu0 %v716
  %v891 = vpop.f32.mrb[0].mxu0
  %v892 = vadd.f32 %v758, %v891
  %v893 = vpop.f32.mrb[0].mxu0
  %v894 = vadd.f32 %v758, %v893
  %895 = vmatprep.mubr.f32.mxu0 %v790
  %896 = vmatmul.mubr.f32.gmra.mrb[0].mxu0 %v718
  %v897 = vpop.f32.mrb[0].mxu0
  %v898 = vadd.f32 %v763, %v897
  %v899 = vpop.f32.mrb[0].mxu0
  %v900 = vadd.f32 %v763, %v899
  %901 = vmatprep.mubr.f32.mxu0 %v793
  %902 = vmatmul.mubr.f32.gmra.mrb[0].mxu0 %v720
  %v903 = vpop.f32.mrb[0].mxu0
  %v904 = vadd.f32 %v768, %v903
  %v905 = vpop.f32.mrb[0].mxu0
  %v906 = vadd.f32 %v768, %v905
  %907 = vdwg.mxu0
  %v908 = vtanh.pop %v862
  %v909 = vtanh.pop %v864
  %v910 = vtanh.pop %v868
  %v911 = vtanh.pop %v870
  %v912 = vtanh.pop %v874
  %v913 = vtanh.pop %v876
  %v914 = vtanh.pop %v880
  %v915 = vtanh.pop %v882
  %v916 = vtanh.pop %v886
  %v917 = vtanh.pop %v888
  %v918 = vtanh.pop %v892
  %v919 = vtanh.pop %v894
  %v920 = vtanh.pop %v898
  %v921 = vtanh.pop %v900
  %v922 = vtanh.pop %v904
  %v923 = vtanh.pop %v906
  %v924 = vmul.f32 %v908, 1.442695
  %v925 = vpow.pop %v924
  %v926 = vmul.f32 %v909, 1.442695
  %v927 = vpow.pop %v926
  %v928 = vmul.f32 %v910, 1.442695
  %v929 = vpow.pop %v928
  %v930 = vmul.f32 %v911, 1.442695
  %v931 = vpow.pop %v930
  %v932 = vmul.f32 %v912, 1.442695
  %v933 = vpow.pop %v932
  %v934 = vmul.f32 %v913, 1.442695
  %v935 = vpow.pop %v934
  %v936 = vmul.f32 %v914, 1.442695
  %v937 = vpow.pop %v936
  %v938 = vmul.f32 %v915, 1.442695
  %v939 = vpow.pop %v938
  %v940 = vmul.f32 %v916, 1.442695
  %v941 = vpow.pop %v940
  %v942 = vmul.f32 %v917, 1.442695
  %v943 = vpow.pop %v942
  %v944 = vmul.f32 %v918, 1.442695
  %v945 = vpow.pop %v944
  %v946 = vmul.f32 %v919, 1.442695
  %v947 = vpow.pop %v946
  %v948 = vmul.f32 %v920, 1.442695
  %v949 = vpow.pop %v948
  %v950 = vmul.f32 %v921, 1.442695
  %v951 = vpow.pop %v950
  %v952 = vmul.f32 %v922, 1.442695
  %v953 = vpow.pop %v952
  %v954 = vmul.f32 %v923, 1.442695
  %v955 = vpow.pop %v954
  %v956 = vmul.f32 %v154, %v925
  %v957 = vmul.f32 %v156, %v927
  %v958 = vmul.f32 %v160, %v929
  %v959 = vmul.f32 %v162, %v931
  %v960 = vmul.f32 %v166, %v933
  %v961 = vmul.f32 %v168, %v935
  %v962 = vmul.f32 %v172, %v937
  %v963 = vmul.f32 %v174, %v939
  %v964 = vmul.f32 %v178, %v941
  %v965 = vmul.f32 %v180, %v943
  %v966 = vmul.f32 %v184, %v945
  %v967 = vmul.f32 %v186, %v947
  %v968 = vmul.f32 %v190, %v949
  %v969 = vmul.f32 %v192, %v951
  %v970 = vmul.f32 %v196, %v953
  %v971 = vmul.f32 %v198, %v955
  %s972 = scalar_lea.vmem %s1, 160
  %v973 = vld [vmem:[%s972] sm:$0xff]
  %v974 = vld [vmem:[%s972 + $0x8] sm:$0xff]
  %v975 = vld [vmem:[%s972 + $0x10] sm:$0xff]
  %v976 = vld [vmem:[%s972 + $0x18] sm:$0xff]
  %v977 = vld [vmem:[%s972 + $0x20] sm:$0xff]
  %v978 = vld [vmem:[%s972 + $0x28] sm:$0xff]
  %v979 = vld [vmem:[%s972 + $0x30] sm:$0xff]
  %v980 = vld [vmem:[%s972 + $0x38] sm:$0xff]
  %v981 = vld [vmem:[%s972 + $0x40] sm:$0xff]
  %v982 = vld [vmem:[%s972 + $0x48] sm:$0xff]
  %v983 = vld [vmem:[%s972 + $0x50] sm:$0xff]
  %v984 = vld [vmem:[%s972 + $0x58] sm:$0xff]
  %v985 = vld [vmem:[%s972 + $0x60] sm:$0xff]
  %v986 = vld [vmem:[%s972 + $0x68] sm:$0xff]
  %v987 = vld [vmem:[%s972 + $0x70] sm:$0xff]
  %v988 = vld [vmem:[%s972 + $0x78] sm:$0xff]
  %v989 = vld [vmem:[%s972 + $0x80] sm:$0xff]
  %v990 = vld [vmem:[%s972 + $0x88] sm:$0xff]
  %v991 = vld [vmem:[%s972 + $0x90] sm:$0xff]
  %v992 = vld [vmem:[%s972 + $0x98] sm:$0xff]
  %s993 = scalar_lea.vmem %s2, 160
  %v994 = vld [vmem:[%s993] sm:$0xff]
  %v995 = vld [vmem:[%s993 + $0x8] sm:$0xff]
  %v996 = vld [vmem:[%s993 + $0x10] sm:$0xff]
  %v997 = vld [vmem:[%s993 + $0x18] sm:$0xff]
  %v998 = vld [vmem:[%s993 + $0x20] sm:$0xff]
  %v999 = vld [vmem:[%s993 + $0x28] sm:$0xff]
  %v1000 = vld [vmem:[%s993 + $0x30] sm:$0xff]
  %v1001 = vld [vmem:[%s993 + $0x38] sm:$0xff]
  %v1002 = vld [vmem:[%s993 + $0x40] sm:$0xff]
  %v1003 = vld [vmem:[%s993 + $0x48] sm:$0xff]
  %v1004 = vld [vmem:[%s993 + $0x50] sm:$0xff]
  %v1005 = vld [vmem:[%s993 + $0x58] sm:$0xff]
  %v1006 = vld [vmem:[%s993 + $0x60] sm:$0xff]
  %v1007 = vld [vmem:[%s993 + $0x68] sm:$0xff]
  %v1008 = vld [vmem:[%s993 + $0x70] sm:$0xff]
  %v1009 = vld [vmem:[%s993 + $0x78] sm:$0xff]
  %v1010 = vld [vmem:[%s993 + $0x80] sm:$0xff]
  %v1011 = vld [vmem:[%s993 + $0x88] sm:$0xff]
  %v1012 = vld [vmem:[%s993 + $0x90] sm:$0xff]
  %v1013 = vld [vmem:[%s993 + $0x98] sm:$0xff]
  %1015 = vset.pattern.permute.xlu0 0
  %1016 = vperm.xlu0 %1015, %v994
  %v1017 = vpop.permute.xlu0 %1016
  %1020 = vset.pattern.permute.xlu0 0
  %1021 = vperm.xlu0 %1020, %v995
  %v1022 = vpop.permute.xlu0 %1021
  %1025 = vset.pattern.permute.xlu0 0
  %1026 = vperm.xlu0 %1025, %v996
  %v1027 = vpop.permute.xlu0 %1026
  %1030 = vset.pattern.permute.xlu0 0
  %1031 = vperm.xlu0 %1030, %v997
  %v1032 = vpop.permute.xlu0 %1031
  %1035 = vset.pattern.permute.xlu0 0
  %1036 = vperm.xlu0 %1035, %v998
  %v1037 = vpop.permute.xlu0 %1036
  %1040 = vset.pattern.permute.xlu0 0
  %1041 = vperm.xlu0 %1040, %v999
  %v1042 = vpop.permute.xlu0 %1041
  %1045 = vset.pattern.permute.xlu0 0
  %1046 = vperm.xlu0 %1045, %v1000
  %v1047 = vpop.permute.xlu0 %1046
  %1050 = vset.pattern.permute.xlu0 0
  %1051 = vperm.xlu0 %1050, %v1001
  %v1052 = vpop.permute.xlu0 %1051
  %1055 = vset.pattern.permute.xlu0 0
  %1056 = vperm.xlu0 %1055, %v1002
  %v1057 = vpop.permute.xlu0 %1056
  %1060 = vset.pattern.permute.xlu0 0
  %1061 = vperm.xlu0 %1060, %v1003
  %v1062 = vpop.permute.xlu0 %1061
  %1065 = vset.pattern.permute.xlu0 0
  %1066 = vperm.xlu0 %1065, %v1004
  %v1067 = vpop.permute.xlu0 %1066
  %1070 = vset.pattern.permute.xlu0 0
  %1071 = vperm.xlu0 %1070, %v1005
  %v1072 = vpop.permute.xlu0 %1071
  %1075 = vset.pattern.permute.xlu0 0
  %1076 = vperm.xlu0 %1075, %v1006
  %v1077 = vpop.permute.xlu0 %1076
  %1080 = vset.pattern.permute.xlu0 0
  %1081 = vperm.xlu0 %1080, %v1007
  %v1082 = vpop.permute.xlu0 %1081
  %1085 = vset.pattern.permute.xlu0 0
  %1086 = vperm.xlu0 %1085, %v1008
  %v1087 = vpop.permute.xlu0 %1086
  %1090 = vset.pattern.permute.xlu0 0
  %1091 = vperm.xlu0 %1090, %v1009
  %v1092 = vpop.permute.xlu0 %1091
  %1095 = vset.pattern.permute.xlu0 0
  %1096 = vperm.xlu0 %1095, %v1010
  %v1097 = vpop.permute.xlu0 %1096
  %1100 = vset.pattern.permute.xlu0 0
  %1101 = vperm.xlu0 %1100, %v1011
  %v1102 = vpop.permute.xlu0 %1101
  %1105 = vset.pattern.permute.xlu0 0
  %1106 = vperm.xlu0 %1105, %v1012
  %v1107 = vpop.permute.xlu0 %1106
  %1110 = vset.pattern.permute.xlu0 0
  %1111 = vperm.xlu0 %1110, %v1013
  %v1112 = vpop.permute.xlu0 %1111
  %v1115 = vsel %vm340, %v973, 0
  %v1118 = vsel %vm340, %v974, 0
  %v1121 = vsel %vm340, %v975, 0
  %v1124 = vsel %vm340, %v976, 0
  %v1127 = vsel %vm340, %v977, 0
  %v1130 = vsel %vm340, %v978, 0
  %v1133 = vsel %vm340, %v979, 0
  %v1136 = vsel %vm340, %v980, 0
  %v1139 = vsel %vm340, %v981, 0
  %v1142 = vsel %vm340, %v982, 0
  %v1145 = vsel %vm340, %v983, 0
  %v1148 = vsel %vm340, %v984, 0
  %v1151 = vsel %vm340, %v985, 0
  %v1154 = vsel %vm340, %v986, 0
  %v1157 = vsel %vm340, %v987, 0
  %v1160 = vsel %vm340, %v988, 0
  %v1163 = vsel %vm340, %v989, 0
  %v1166 = vsel %vm340, %v990, 0
  %v1169 = vsel %vm340, %v991, 0
  %v1172 = vsel %vm340, %v992, 0
  %1174 = vmatprep.subr.mxu0 %v957
  %1175 = vmatpush1.msra.mxu0 %v956
  %1176 = vmatprep.subr.mxu0 %v959
  %1177 = vmatpush1.msra.mxu0 %v958
  %1178 = vmatprep.subr.mxu0 %v961
  %1179 = vmatpush1.msra.mxu0 %v960
  %1180 = vmatprep.subr.mxu0 %v963
  %1181 = vmatpush1.msra.mxu0 %v962
  %1182 = vmatprep.subr.mxu0 %v965
  %1183 = vmatpush1.msra.mxu0 %v964
  %1184 = vmatprep.subr.mxu0 %v967
  %1185 = vmatpush1.msra.mxu0 %v966
  %1186 = vmatprep.subr.mxu0 %v969
  %1187 = vmatpush1.msra.mxu0 %v968
  %1188 = vmatprep.subr.mxu0 %v971
  %1189 = vmatpush1.msra.mxu0 %v970
  %1190 = vmatprep.subr.mxu0 0.0
  %1191 = vmatpush1.msra.mxu0 0.0
  %1192 = vmatprep.subr.mxu0 0.0
  %1193 = vmatpush1.msra.mxu0 0.0
  %1194 = vmatprep.subr.mxu0 0.0
  %1195 = vmatpush1.msra.mxu0 0.0
  %1196 = vmatprep.subr.mxu0 0.0
  %1197 = vmatpush1.msra.mxu0 0.0
  %1198 = vmatprep.subr.mxu0 0.0
  %1199 = vmatpush1.msra.mxu0 0.0
  %1200 = vmatprep.subr.mxu0 0.0
  %1201 = vmatpush1.msra.mxu0 0.0
  %1202 = vmatprep.subr.mxu0 0.0
  %1203 = vmatpush1.msra.mxu0 0.0
  %1204 = vmatprep.subr.mxu0 0.0
  %1205 = vmatpush1.msra.mxu0 0.0
  %1206 = vmatprep.subr.mxu0 0.0
  %1207 = vmatpush1.msra.mxu0 0.0
  %1208 = vmatprep.subr.mxu0 0.0
  %1209 = vmatpush1.msra.mxu0 0.0
  %1210 = vmatprep.subr.mxu0 0.0
  %1211 = vmatpush1.msra.mxu0 0.0
  %1212 = vmatprep.subr.mxu0 0.0
  %1213 = vmatpush1.msra.mxu0 0.0
  %1214 = vmatprep.subr.mxu0 0.0
  %1215 = vmatpush1.msra.mxu0 0.0
  %1216 = vmatprep.subr.mxu0 0.0
  %1217 = vmatpush1.msra.mxu0 0.0
  %1218 = vmatprep.subr.mxu0 0.0
  %1219 = vmatpush1.msra.mxu0 0.0
  %1220 = vmatprep.subr.mxu0 0.0
  %1221 = vmatpush1.msra.mxu0 0.0
  %1222 = vmatprep.subr.mxu0 0.0
  %1223 = vmatpush1.msra.mxu0 0.0
  %1224 = vmatprep.subr.mxu0 0.0
  %1225 = vmatpush1.msra.mxu0 0.0
  %1226 = vmatprep.subr.mxu0 0.0
  %1227 = vmatpush1.msra.mxu0 0.0
  %1228 = vmatprep.subr.mxu0 0.0
  %1229 = vmatpush1.msra.mxu0 0.0
  %1230 = vmatprep.subr.mxu0 0.0
  %1231 = vmatpush1.msra.mxu0 0.0
  %1232 = vmatprep.subr.mxu0 0.0
  %1233 = vmatpush1.msra.mxu0 0.0
  %1234 = vmatprep.subr.mxu0 0.0
  %1235 = vmatpush1.msra.mxu0 0.0
  %1236 = vmatprep.subr.mxu0 0.0
  %1237 = vmatpush1.msra.mxu0 0.0
  %1238 = vmatprep.mubr.f32.mxu0 0.0
  %1239 = vmatmul.mubr.f32.gmra.mrb[0].mxu0 %v1115
  %v1240 = vpop.f32.mrb[0].mxu0
  %v1241 = vadd.f32 %v1017, %v1240
  %v1242 = vpop.f32.mrb[0].mxu0
  %v1243 = vadd.f32 %v1017, %v1242
  %1244 = vmatprep.mubr.f32.mxu0 0.0
  %1245 = vmatmul.mubr.f32.gmra.mrb[0].mxu0 %v1118
  %v1246 = vpop.f32.mrb[0].mxu0
  %v1247 = vadd.f32 %v1022, %v1246
  %v1248 = vpop.f32.mrb[0].mxu0
  %v1249 = vadd.f32 %v1022, %v1248
  %1250 = vmatprep.mubr.f32.mxu0 0.0
  %1251 = vmatmul.mubr.f32.gmra.mrb[0].mxu0 %v1121
  %v1252 = vpop.f32.mrb[0].mxu0
  %v1253 = vadd.f32 %v1027, %v1252
  %v1254 = vpop.f32.mrb[0].mxu0
  %v1255 = vadd.f32 %v1027, %v1254
  %1256 = vmatprep.mubr.f32.mxu0 0.0
  %1257 = vmatmul.mubr.f32.gmra.mrb[0].mxu0 %v1124
  %v1258 = vpop.f32.mrb[0].mxu0
  %v1259 = vadd.f32 %v1032, %v1258
  %v1260 = vpop.f32.mrb[0].mxu0
  %v1261 = vadd.f32 %v1032, %v1260
  %1262 = vmatprep.mubr.f32.mxu0 0.0
  %1263 = vmatmul.mubr.f32.gmra.mrb[0].mxu0 %v1127
  %v1264 = vpop.f32.mrb[0].mxu0
  %v1265 = vadd.f32 %v1037, %v1264
  %v1266 = vpop.f32.mrb[0].mxu0
  %v1267 = vadd.f32 %v1037, %v1266
  %1268 = vmatprep.mubr.f32.mxu0 0.0
  %1269 = vmatmul.mubr.f32.gmra.mrb[0].mxu0 %v1130
  %v1270 = vpop.f32.mrb[0].mxu0
  %v1271 = vadd.f32 %v1042, %v1270
  %v1272 = vpop.f32.mrb[0].mxu0
  %v1273 = vadd.f32 %v1042, %v1272
  %1274 = vmatprep.mubr.f32.mxu0 0.0
  %1275 = vmatmul.mubr.f32.gmra.mrb[0].mxu0 %v1133
  %v1276 = vpop.f32.mrb[0].mxu0
  %v1277 = vadd.f32 %v1047, %v1276
  %v1278 = vpop.f32.mrb[0].mxu0
  %v1279 = vadd.f32 %v1047, %v1278
  %1280 = vmatprep.mubr.f32.mxu0 0.0
  %1281 = vmatmul.mubr.f32.gmra.mrb[0].mxu0 %v1136
  %v1282 = vpop.f32.mrb[0].mxu0
  %v1283 = vadd.f32 %v1052, %v1282
  %v1284 = vpop.f32.mrb[0].mxu0
  %v1285 = vadd.f32 %v1052, %v1284
  %1286 = vmatprep.mubr.f32.mxu0 0.0
  %1287 = vmatmul.mubr.f32.gmra.mrb[0].mxu0 %v1139
  %v1288 = vpop.f32.mrb[0].mxu0
  %v1289 = vadd.f32 %v1057, %v1288
  %v1290 = vpop.f32.mrb[0].mxu0
  %v1291 = vadd.f32 %v1057, %v1290
  %1292 = vmatprep.mubr.f32.mxu0 0.0
  %1293 = vmatmul.mubr.f32.gmra.mrb[0].mxu0 %v1142
  %v1294 = vpop.f32.mrb[0].mxu0
  %v1295 = vadd.f32 %v1062, %v1294
  %v1296 = vpop.f32.mrb[0].mxu0
  %v1297 = vadd.f32 %v1062, %v1296
  %1298 = vmatprep.mubr.f32.mxu0 0.0
  %1299 = vmatmul.mubr.f32.gmra.mrb[0].mxu0 %v1145
  %v1300 = vpop.f32.mrb[0].mxu0
  %v1301 = vadd.f32 %v1067, %v1300
  %v1302 = vpop.f32.mrb[0].mxu0
  %v1303 = vadd.f32 %v1067, %v1302
  %1304 = vmatprep.mubr.f32.mxu0 0.0
  %1305 = vmatmul.mubr.f32.gmra.mrb[0].mxu0 %v1148
  %v1306 = vpop.f32.mrb[0].mxu0
  %v1307 = vadd.f32 %v1072, %v1306
  %v1308 = vpop.f32.mrb[0].mxu0
  %v1309 = vadd.f32 %v1072, %v1308
  %1310 = vmatprep.mubr.f32.mxu0 0.0
  %1311 = vmatmul.mubr.f32.gmra.mrb[0].mxu0 %v1151
  %v1312 = vpop.f32.mrb[0].mxu0
  %v1313 = vadd.f32 %v1077, %v1312
  %v1314 = vpop.f32.mrb[0].mxu0
  %v1315 = vadd.f32 %v1077, %v1314
  %1316 = vmatprep.mubr.f32.mxu0 0.0
  %1317 = vmatmul.mubr.f32.gmra.mrb[0].mxu0 %v1154
  %v1318 = vpop.f32.mrb[0].mxu0
  %v1319 = vadd.f32 %v1082, %v1318
  %v1320 = vpop.f32.mrb[0].mxu0
  %v1321 = vadd.f32 %v1082, %v1320
  %1322 = vmatprep.mubr.f32.mxu0 0.0
  %1323 = vmatmul.mubr.f32.gmra.mrb[0].mxu0 %v1157
  %v1324 = vpop.f32.mrb[0].mxu0
  %v1325 = vadd.f32 %v1087, %v1324
  %v1326 = vpop.f32.mrb[0].mxu0
  %v1327 = vadd.f32 %v1087, %v1326
  %1328 = vmatprep.mubr.f32.mxu0 0.0
  %1329 = vmatmul.mubr.f32.gmra.mrb[0].mxu0 %v1160
  %v1330 = vpop.f32.mrb[0].mxu0
  %v1331 = vadd.f32 %v1092, %v1330
  %v1332 = vpop.f32.mrb[0].mxu0
  %v1333 = vadd.f32 %v1092, %v1332
  %1334 = vmatprep.mubr.f32.mxu0 0.0
  %1335 = vmatmul.mubr.f32.gmra.mrb[0].mxu0 %v1163
  %v1336 = vpop.f32.mrb[0].mxu0
  %v1337 = vadd.f32 %v1097, %v1336
  %v1338 = vpop.f32.mrb[0].mxu0
  %v1339 = vadd.f32 %v1097, %v1338
  %1340 = vmatprep.mubr.f32.mxu0 0.0
  %1341 = vmatmul.mubr.f32.gmra.mrb[0].mxu0 %v1166
  %v1342 = vpop.f32.mrb[0].mxu0
  %v1343 = vadd.f32 %v1102, %v1342
  %v1344 = vpop.f32.mrb[0].mxu0
  %v1345 = vadd.f32 %v1102, %v1344
  %1346 = vmatprep.mubr.f32.mxu0 0.0
  %1347 = vmatmul.mubr.f32.gmra.mrb[0].mxu0 %v1169
  %v1348 = vpop.f32.mrb[0].mxu0
  %v1349 = vadd.f32 %v1107, %v1348
  %v1350 = vpop.f32.mrb[0].mxu0
  %v1351 = vadd.f32 %v1107, %v1350
  %1352 = vmatprep.mubr.f32.mxu0 0.0
  %1353 = vmatmul.mubr.f32.gmra.mrb[0].mxu0 %v1172
  %v1354 = vpop.f32.mrb[0].mxu0
  %v1355 = vadd.f32 %v1112, %v1354
  %v1356 = vpop.f32.mrb[0].mxu0
  %v1357 = vadd.f32 %v1112, %v1356
  %1358 = vdwg.mxu0
  %vm1359 = vcmp.ge.f32.partialorder %v1241, 0.0
  %vm1360 = vcmp.ge.f32.partialorder %v1243, 0.0
  %vm1361 = vcmp.ge.f32.partialorder %v1247, 0.0
  %vm1362 = vcmp.ge.f32.partialorder %v1249, 0.0
  %vm1363 = vcmp.ge.f32.partialorder %v1253, 0.0
  %vm1364 = vcmp.ge.f32.partialorder %v1255, 0.0
  %vm1365 = vcmp.ge.f32.partialorder %v1259, 0.0
  %vm1366 = vcmp.ge.f32.partialorder %v1261, 0.0
  %vm1367 = vcmp.ge.f32.partialorder %v1265, 0.0
  %vm1368 = vcmp.ge.f32.partialorder %v1267, 0.0
  %vm1369 = vcmp.ge.f32.partialorder %v1271, 0.0
  %vm1370 = vcmp.ge.f32.partialorder %v1273, 0.0
  %vm1371 = vcmp.ge.f32.partialorder %v1277, 0.0
  %vm1372 = vcmp.ge.f32.partialorder %v1279, 0.0
  %vm1373 = vcmp.ge.f32.partialorder %v1283, 0.0
  %vm1374 = vcmp.ge.f32.partialorder %v1285, 0.0
  %vm1375 = vcmp.ge.f32.partialorder %v1289, 0.0
  %vm1376 = vcmp.ge.f32.partialorder %v1291, 0.0
  %vm1377 = vcmp.ge.f32.partialorder %v1295, 0.0
  %vm1378 = vcmp.ge.f32.partialorder %v1297, 0.0
  %vm1379 = vcmp.ge.f32.partialorder %v1301, 0.0
  %vm1380 = vcmp.ge.f32.partialorder %v1303, 0.0
  %vm1381 = vcmp.ge.f32.partialorder %v1307, 0.0
  %vm1382 = vcmp.ge.f32.partialorder %v1309, 0.0
  %vm1383 = vcmp.ge.f32.partialorder %v1313, 0.0
  %vm1384 = vcmp.ge.f32.partialorder %v1315, 0.0
  %vm1385 = vcmp.ge.f32.partialorder %v1319, 0.0
  %vm1386 = vcmp.ge.f32.partialorder %v1321, 0.0
  %vm1387 = vcmp.ge.f32.partialorder %v1325, 0.0
  %vm1388 = vcmp.ge.f32.partialorder %v1327, 0.0
  %vm1389 = vcmp.ge.f32.partialorder %v1331, 0.0
  %vm1390 = vcmp.ge.f32.partialorder %v1333, 0.0
  %vm1391 = vcmp.ge.f32.partialorder %v1337, 0.0
  %vm1392 = vcmp.ge.f32.partialorder %v1339, 0.0
  %vm1393 = vcmp.ge.f32.partialorder %v1343, 0.0
  %vm1394 = vcmp.ge.f32.partialorder %v1345, 0.0
  %vm1395 = vcmp.ge.f32.partialorder %v1349, 0.0
  %vm1396 = vcmp.ge.f32.partialorder %v1351, 0.0
  %vm1397 = vcmp.ge.f32.partialorder %v1355, 0.0
  %vm1398 = vcmp.ge.f32.partialorder %v1357, 0.0
  %v1399 = vmul.f32 %v1241, 0.01
  %v1400 = vmul.f32 %v1243, 0.01
  %v1401 = vmul.f32 %v1247, 0.01
  %v1402 = vmul.f32 %v1249, 0.01
  %v1403 = vmul.f32 %v1253, 0.01
  %v1404 = vmul.f32 %v1255, 0.01
  %v1405 = vmul.f32 %v1259, 0.01
  %v1406 = vmul.f32 %v1261, 0.01
  %v1407 = vmul.f32 %v1265, 0.01
  %v1408 = vmul.f32 %v1267, 0.01
  %v1409 = vmul.f32 %v1271, 0.01
  %v1410 = vmul.f32 %v1273, 0.01
  %v1411 = vmul.f32 %v1277, 0.01
  %v1412 = vmul.f32 %v1279, 0.01
  %v1413 = vmul.f32 %v1283, 0.01
  %v1414 = vmul.f32 %v1285, 0.01
  %v1415 = vmul.f32 %v1289, 0.01
  %v1416 = vmul.f32 %v1291, 0.01
  %v1417 = vmul.f32 %v1295, 0.01
  %v1418 = vmul.f32 %v1297, 0.01
  %v1419 = vmul.f32 %v1301, 0.01
  %v1420 = vmul.f32 %v1303, 0.01
  %v1421 = vmul.f32 %v1307, 0.01
  %v1422 = vmul.f32 %v1309, 0.01
  %v1423 = vmul.f32 %v1313, 0.01
  %v1424 = vmul.f32 %v1315, 0.01
  %v1425 = vmul.f32 %v1319, 0.01
  %v1426 = vmul.f32 %v1321, 0.01
  %v1427 = vmul.f32 %v1325, 0.01
  %v1428 = vmul.f32 %v1327, 0.01
  %v1429 = vmul.f32 %v1331, 0.01
  %v1430 = vmul.f32 %v1333, 0.01
  %v1431 = vmul.f32 %v1337, 0.01
  %v1432 = vmul.f32 %v1339, 0.01
  %v1433 = vmul.f32 %v1343, 0.01
  %v1434 = vmul.f32 %v1345, 0.01
  %v1435 = vmul.f32 %v1349, 0.01
  %v1436 = vmul.f32 %v1351, 0.01
  %v1437 = vmul.f32 %v1355, 0.01
  %v1438 = vmul.f32 %v1357, 0.01
  %v1439 = vsel %vm1359, %v1241, %v1399
  %v1440 = vsel %vm1360, %v1243, %v1400
  %v1441 = vsel %vm1361, %v1247, %v1401
  %v1442 = vsel %vm1362, %v1249, %v1402
  %v1443 = vsel %vm1363, %v1253, %v1403
  %v1444 = vsel %vm1364, %v1255, %v1404
  %v1445 = vsel %vm1365, %v1259, %v1405
  %v1446 = vsel %vm1366, %v1261, %v1406
  %v1447 = vsel %vm1367, %v1265, %v1407
  %v1448 = vsel %vm1368, %v1267, %v1408
  %v1449 = vsel %vm1369, %v1271, %v1409
  %v1450 = vsel %vm1370, %v1273, %v1410
  %v1451 = vsel %vm1371, %v1277, %v1411
  %v1452 = vsel %vm1372, %v1279, %v1412
  %v1453 = vsel %vm1373, %v1283, %v1413
  %v1454 = vsel %vm1374, %v1285, %v1414
  %v1455 = vsel %vm1375, %v1289, %v1415
  %v1456 = vsel %vm1376, %v1291, %v1416
  %v1457 = vsel %vm1377, %v1295, %v1417
  %v1458 = vsel %vm1378, %v1297, %v1418
  %v1459 = vsel %vm1379, %v1301, %v1419
  %v1460 = vsel %vm1380, %v1303, %v1420
  %v1461 = vsel %vm1381, %v1307, %v1421
  %v1462 = vsel %vm1382, %v1309, %v1422
  %v1463 = vsel %vm1383, %v1313, %v1423
  %v1464 = vsel %vm1384, %v1315, %v1424
  %v1465 = vsel %vm1385, %v1319, %v1425
  %v1466 = vsel %vm1386, %v1321, %v1426
  %v1467 = vsel %vm1387, %v1325, %v1427
  %v1468 = vsel %vm1388, %v1327, %v1428
  %v1469 = vsel %vm1389, %v1331, %v1429
  %v1470 = vsel %vm1390, %v1333, %v1430
  %v1471 = vsel %vm1391, %v1337, %v1431
  %v1472 = vsel %vm1392, %v1339, %v1432
  %v1473 = vsel %vm1393, %v1343, %v1433
  %v1474 = vsel %vm1394, %v1345, %v1434
  %v1475 = vsel %vm1395, %v1349, %v1435
  %v1476 = vsel %vm1396, %v1351, %v1436
  %v1477 = vsel %vm1397, %v1355, %v1437
  %v1478 = vsel %vm1398, %v1357, %v1438
  %s1479 = scalar_lea.vmem %s3, 128
  %v1480 = vld [vmem:[%s1479] sm:$0xff]
  %v1481 = vld [vmem:[%s1479 + $0x8] sm:$0xff]
  %v1482 = vld [vmem:[%s1479 + $0x10] sm:$0xff]
  %v1483 = vld [vmem:[%s1479 + $0x18] sm:$0xff]
  %v1484 = vld [vmem:[%s1479 + $0x20] sm:$0xff]
  %v1485 = vld [vmem:[%s1479 + $0x28] sm:$0xff]
  %v1486 = vld [vmem:[%s1479 + $0x30] sm:$0xff]
  %v1487 = vld [vmem:[%s1479 + $0x38] sm:$0xff]
  %v1488 = vld [vmem:[%s1479 + $0x40] sm:$0xff]
  %v1489 = vld [vmem:[%s1479 + $0x48] sm:$0xff]
  %v1490 = vld [vmem:[%s1479 + $0x50] sm:$0xff]
  %v1491 = vld [vmem:[%s1479 + $0x58] sm:$0xff]
  %v1492 = vld [vmem:[%s1479 + $0x60] sm:$0xff]
  %v1493 = vld [vmem:[%s1479 + $0x68] sm:$0xff]
  %v1494 = vld [vmem:[%s1479 + $0x70] sm:$0xff]
  %v1495 = vld [vmem:[%s1479 + $0x78] sm:$0xff]
  %s1496 = scalar_lea.vmem %s4, 64
  %v1497 = vld [vmem:[%s1496] sm:$0xff]
  %v1498 = vld [vmem:[%s1496 + $0x8] sm:$0xff]
  %v1499 = vld [vmem:[%s1496 + $0x10] sm:$0xff]
  %v1500 = vld [vmem:[%s1496 + $0x18] sm:$0xff]
  %v1501 = vld [vmem:[%s1496 + $0x20] sm:$0xff]
  %v1502 = vld [vmem:[%s1496 + $0x28] sm:$0xff]
  %v1503 = vld [vmem:[%s1496 + $0x30] sm:$0xff]
  %v1504 = vld [vmem:[%s1496 + $0x38] sm:$0xff]
  %1506 = vset.pattern.permute.xlu0 0
  %1507 = vperm.xlu0 %1506, %v1497
  %v1508 = vpop.permute.xlu0 %1507
  %1511 = vset.pattern.permute.xlu0 0
  %1512 = vperm.xlu0 %1511, %v1498
  %v1513 = vpop.permute.xlu0 %1512
  %1516 = vset.pattern.permute.xlu0 0
  %1517 = vperm.xlu0 %1516, %v1499
  %v1518 = vpop.permute.xlu0 %1517
  %1521 = vset.pattern.permute.xlu0 0
  %1522 = vperm.xlu0 %1521, %v1500
  %v1523 = vpop.permute.xlu0 %1522
  %1526 = vset.pattern.permute.xlu0 0
  %1527 = vperm.xlu0 %1526, %v1501
  %v1528 = vpop.permute.xlu0 %1527
  %1531 = vset.pattern.permute.xlu0 0
  %1532 = vperm.xlu0 %1531, %v1502
  %v1533 = vpop.permute.xlu0 %1532
  %1536 = vset.pattern.permute.xlu0 0
  %1537 = vperm.xlu0 %1536, %v1503
  %v1538 = vpop.permute.xlu0 %1537
  %1541 = vset.pattern.permute.xlu0 0
  %1542 = vperm.xlu0 %1541, %v1504
  %v1543 = vpop.permute.xlu0 %1542
  %v1546 = vsel %vm770, %v1481, 0
  %v1549 = vsel %vm770, %v1483, 0
  %v1552 = vsel %vm770, %v1485, 0
  %v1555 = vsel %vm770, %v1487, 0
  %v1558 = vsel %vm770, %v1489, 0
  %v1561 = vsel %vm770, %v1491, 0
  %v1564 = vsel %vm770, %v1493, 0
  %v1567 = vsel %vm770, %v1495, 0
  %1569 = vmatprep.subr.mxu0 %v1440
  %1570 = vmatpush1.msra.mxu0 %v1439
  %1571 = vmatprep.subr.mxu0 %v1442
  %1572 = vmatpush1.msra.mxu0 %v1441
  %1573 = vmatprep.subr.mxu0 %v1444
  %1574 = vmatpush1.msra.mxu0 %v1443
  %1575 = vmatprep.subr.mxu0 %v1446
  %1576 = vmatpush1.msra.mxu0 %v1445
  %1577 = vmatprep.subr.mxu0 %v1448
  %1578 = vmatpush1.msra.mxu0 %v1447
  %1579 = vmatprep.subr.mxu0 %v1450
  %1580 = vmatpush1.msra.mxu0 %v1449
  %1581 = vmatprep.subr.mxu0 %v1452
  %1582 = vmatpush1.msra.mxu0 %v1451
  %1583 = vmatprep.subr.mxu0 %v1454
  %1584 = vmatpush1.msra.mxu0 %v1453
  %1585 = vmatprep.subr.mxu0 %v1456
  %1586 = vmatpush1.msra.mxu0 %v1455
  %1587 = vmatprep.subr.mxu0 %v1458
  %1588 = vmatpush1.msra.mxu0 %v1457
  %1589 = vmatprep.subr.mxu0 %v1460
  %1590 = vmatpush1.msra.mxu0 %v1459
  %1591 = vmatprep.subr.mxu0 %v1462
  %1592 = vmatpush1.msra.mxu0 %v1461
  %1593 = vmatprep.subr.mxu0 %v1464
  %1594 = vmatpush1.msra.mxu0 %v1463
  %1595 = vmatprep.subr.mxu0 %v1466
  %1596 = vmatpush1.msra.mxu0 %v1465
  %1597 = vmatprep.subr.mxu0 %v1468
  %1598 = vmatpush1.msra.mxu0 %v1467
  %1599 = vmatprep.subr.mxu0 %v1470
  %1600 = vmatpush1.msra.mxu0 %v1469
  %1601 = vmatprep.subr.mxu0 %v1472
  %1602 = vmatpush1.msra.mxu0 %v1471
  %1603 = vmatprep.subr.mxu0 %v1474
  %1604 = vmatpush1.msra.mxu0 %v1473
  %1605 = vmatprep.subr.mxu0 %v1476
  %1606 = vmatpush1.msra.mxu0 %v1475
  %1607 = vmatprep.subr.mxu0 %v1478
  %1608 = vmatpush1.msra.mxu0 %v1477
  %1609 = vmatprep.subr.mxu0 0.0
  %1610 = vmatpush1.msra.mxu0 0.0
  %1611 = vmatprep.subr.mxu0 0.0
  %1612 = vmatpush1.msra.mxu0 0.0
  %1613 = vmatprep.subr.mxu0 0.0
  %1614 = vmatpush1.msra.mxu0 0.0
  %1615 = vmatprep.subr.mxu0 0.0
  %1616 = vmatpush1.msra.mxu0 0.0
  %1617 = vmatprep.subr.mxu0 0.0
  %1618 = vmatpush1.msra.mxu0 0.0
  %1619 = vmatprep.subr.mxu0 0.0
  %1620 = vmatpush1.msra.mxu0 0.0
  %1621 = vmatprep.subr.mxu0 0.0
  %1622 = vmatpush1.msra.mxu0 0.0
  %1623 = vmatprep.subr.mxu0 0.0
  %1624 = vmatpush1.msra.mxu0 0.0
  %1625 = vmatprep.subr.mxu0 0.0
  %1626 = vmatpush1.msra.mxu0 0.0
  %1627 = vmatprep.subr.mxu0 0.0
  %1628 = vmatpush1.msra.mxu0 0.0
  %1629 = vmatprep.subr.mxu0 0.0
  %1630 = vmatpush1.msra.mxu0 0.0
  %1631 = vmatprep.subr.mxu0 0.0
  %1632 = vmatpush1.msra.mxu0 0.0
  %1633 = vmatprep.mubr.f32.mxu0 %v1546
  %1634 = vmatmul.mubr.f32.gmra.mrb[0].mxu0 %v1480
  %v1635 = vpop.f32.mrb[0].mxu0
  %v1636 = vadd.f32 %v1508, %v1635
  %v1637 = vpop.f32.mrb[0].mxu0
  %v1638 = vadd.f32 %v1508, %v1637
  %1639 = vmatprep.mubr.f32.mxu0 %v1549
  %1640 = vmatmul.mubr.f32.gmra.mrb[0].mxu0 %v1482
  %v1641 = vpop.f32.mrb[0].mxu0
  %v1642 = vadd.f32 %v1513, %v1641
  %v1643 = vpop.f32.mrb[0].mxu0
  %v1644 = vadd.f32 %v1513, %v1643
  %1645 = vmatprep.mubr.f32.mxu0 %v1552
  %1646 = vmatmul.mubr.f32.gmra.mrb[0].mxu0 %v1484
  %v1647 = vpop.f32.mrb[0].mxu0
  %v1648 = vadd.f32 %v1518, %v1647
  %v1649 = vpop.f32.mrb[0].mxu0
  %v1650 = vadd.f32 %v1518, %v1649
  %1651 = vmatprep.mubr.f32.mxu0 %v1555
  %1652 = vmatmul.mubr.f32.gmra.mrb[0].mxu0 %v1486
  %v1653 = vpop.f32.mrb[0].mxu0
  %v1654 = vadd.f32 %v1523, %v1653
  %v1655 = vpop.f32.mrb[0].mxu0
  %v1656 = vadd.f32 %v1523, %v1655
  %1657 = vmatprep.mubr.f32.mxu0 %v1558
  %1658 = vmatmul.mubr.f32.gmra.mrb[0].mxu0 %v1488
  %v1659 = vpop.f32.mrb[0].mxu0
  %v1660 = vadd.f32 %v1528, %v1659
  %v1661 = vpop.f32.mrb[0].mxu0
  %v1662 = vadd.f32 %v1528, %v1661
  %1663 = vmatprep.mubr.f32.mxu0 %v1561
  %1664 = vmatmul.mubr.f32.gmra.mrb[0].mxu0 %v1490
  %v1665 = vpop.f32.mrb[0].mxu0
  %v1666 = vadd.f32 %v1533, %v1665
  %v1667 = vpop.f32.mrb[0].mxu0
  %v1668 = vadd.f32 %v1533, %v1667
  %1669 = vmatprep.mubr.f32.mxu0 %v1564
  %1670 = vmatmul.mubr.f32.gmra.mrb[0].mxu0 %v1492
  %v1671 = vpop.f32.mrb[0].mxu0
  %v1672 = vadd.f32 %v1538, %v1671
  %v1673 = vpop.f32.mrb[0].mxu0
  %v1674 = vadd.f32 %v1538, %v1673
  %1675 = vmatprep.mubr.f32.mxu0 %v1567
  %1676 = vmatmul.mubr.f32.gmra.mrb[0].mxu0 %v1494
  %v1677 = vpop.f32.mrb[0].mxu0
  %v1678 = vadd.f32 %v1543, %v1677
  %v1679 = vpop.f32.mrb[0].mxu0
  %v1680 = vadd.f32 %v1543, %v1679
  %1681 = vdwg.mxu0
  %v1682 = vtanh.pop %v1636
  %v1683 = vtanh.pop %v1638
  %v1684 = vtanh.pop %v1642
  %v1685 = vtanh.pop %v1644
  %v1686 = vtanh.pop %v1648
  %v1687 = vtanh.pop %v1650
  %v1688 = vtanh.pop %v1654
  %v1689 = vtanh.pop %v1656
  %v1690 = vtanh.pop %v1660
  %v1691 = vtanh.pop %v1662
  %v1692 = vtanh.pop %v1666
  %v1693 = vtanh.pop %v1668
  %v1694 = vtanh.pop %v1672
  %v1695 = vtanh.pop %v1674
  %v1696 = vtanh.pop %v1678
  %v1697 = vtanh.pop %v1680
  %v1698 = vld [vmem:[%s5] sm:$0xff]
  %v1699 = vld [vmem:[%s5 + $0x8] sm:$0xff]
  %v1700 = vld [vmem:[%s5 + $0x10] sm:$0xff]
  %v1701 = vld [vmem:[%s5 + $0x18] sm:$0xff]
  %v1702 = vld [vmem:[%s5 + $0x20] sm:$0xff]
  %v1703 = vld [vmem:[%s5 + $0x28] sm:$0xff]
  %v1704 = vld [vmem:[%s5 + $0x30] sm:$0xff]
  %v1705 = vld [vmem:[%s5 + $0x38] sm:$0xff]
  %s1706 = scalar_lea.vmem %s4, 128
  %v1707 = vld [vmem:[%s1706] sm:$0xff]
  %v1708 = vld [vmem:[%s1706 + $0x8] sm:$0xff]
  %v1709 = vld [vmem:[%s1706 + $0x10] sm:$0xff]
  %v1710 = vld [vmem:[%s1706 + $0x18] sm:$0xff]
  %v1711 = vld [vmem:[%s1706 + $0x20] sm:$0xff]
  %v1712 = vld [vmem:[%s1706 + $0x28] sm:$0xff]
  %v1713 = vld [vmem:[%s1706 + $0x30] sm:$0xff]
  %v1714 = vld [vmem:[%s1706 + $0x38] sm:$0xff]
  %1716 = vset.pattern.permute.xlu0 0
  %1717 = vperm.xlu0 %1716, %v1707
  %v1718 = vpop.permute.xlu0 %1717
  %1721 = vset.pattern.permute.xlu0 0
  %1722 = vperm.xlu0 %1721, %v1708
  %v1723 = vpop.permute.xlu0 %1722
  %1726 = vset.pattern.permute.xlu0 0
  %1727 = vperm.xlu0 %1726, %v1709
  %v1728 = vpop.permute.xlu0 %1727
  %1731 = vset.pattern.permute.xlu0 0
  %1732 = vperm.xlu0 %1731, %v1710
  %v1733 = vpop.permute.xlu0 %1732
  %1736 = vset.pattern.permute.xlu0 0
  %1737 = vperm.xlu0 %1736, %v1711
  %v1738 = vpop.permute.xlu0 %1737
  %1741 = vset.pattern.permute.xlu0 0
  %1742 = vperm.xlu0 %1741, %v1712
  %v1743 = vpop.permute.xlu0 %1742
  %1746 = vset.pattern.permute.xlu0 0
  %1747 = vperm.xlu0 %1746, %v1713
  %v1748 = vpop.permute.xlu0 %1747
  %1751 = vset.pattern.permute.xlu0 0
  %1752 = vperm.xlu0 %1751, %v1714
  %v1753 = vpop.permute.xlu0 %1752
  %1755 = vmatprep.subr.mxu0 %v957
  %1756 = vmatpush1.msra.mxu0 %v956
  %1757 = vmatprep.subr.mxu0 %v959
  %1758 = vmatpush1.msra.mxu0 %v958
  %1759 = vmatprep.subr.mxu0 %v961
  %1760 = vmatpush1.msra.mxu0 %v960
  %1761 = vmatprep.subr.mxu0 %v963
  %1762 = vmatpush1.msra.mxu0 %v962
  %1763 = vmatprep.subr.mxu0 %v965
  %1764 = vmatpush1.msra.mxu0 %v964
  %1765 = vmatprep.subr.mxu0 %v967
  %1766 = vmatpush1.msra.mxu0 %v966
  %1767 = vmatprep.subr.mxu0 %v969
  %1768 = vmatpush1.msra.mxu0 %v968
  %1769 = vmatprep.subr.mxu0 %v971
  %1770 = vmatpush1.msra.mxu0 %v970
  %1771 = vmatprep.subr.mxu0 %v1683
  %1772 = vmatpush1.msra.mxu0 %v1682
  %1773 = vmatprep.subr.mxu0 %v1685
  %1774 = vmatpush1.msra.mxu0 %v1684
  %1775 = vmatprep.subr.mxu0 %v1687
  %1776 = vmatpush1.msra.mxu0 %v1686
  %1777 = vmatprep.subr.mxu0 %v1689
  %1778 = vmatpush1.msra.mxu0 %v1688
  %1779 = vmatprep.subr.mxu0 %v1691
  %1780 = vmatpush1.msra.mxu0 %v1690
  %1781 = vmatprep.subr.mxu0 %v1693
  %1782 = vmatpush1.msra.mxu0 %v1692
  %1783 = vmatprep.subr.mxu0 %v1695
  %1784 = vmatpush1.msra.mxu0 %v1694
  %1785 = vmatprep.subr.mxu0 %v1697
  %1786 = vmatpush1.msra.mxu0 %v1696
  %1787 = vmatprep.subr.mxu0 0.0
  %1788 = vmatpush1.msra.mxu0 0.0
  %1789 = vmatprep.subr.mxu0 0.0
  %1790 = vmatpush1.msra.mxu0 0.0
  %1791 = vmatprep.subr.mxu0 0.0
  %1792 = vmatpush1.msra.mxu0 0.0
  %1793 = vmatprep.subr.mxu0 0.0
  %1794 = vmatpush1.msra.mxu0 0.0
  %1795 = vmatprep.subr.mxu0 0.0
  %1796 = vmatpush1.msra.mxu0 0.0
  %1797 = vmatprep.subr.mxu0 0.0
  %1798 = vmatpush1.msra.mxu0 0.0
  %1799 = vmatprep.subr.mxu0 0.0
  %1800 = vmatpush1.msra.mxu0 0.0
  %1801 = vmatprep.subr.mxu0 0.0
  %1802 = vmatpush1.msra.mxu0 0.0
  %1803 = vmatprep.subr.mxu0 0.0
  %1804 = vmatpush1.msra.mxu0 0.0
  %1805 = vmatprep.subr.mxu0 0.0
  %1806 = vmatpush1.msra.mxu0 0.0
  %1807 = vmatprep.subr.mxu0 0.0
  %1808 = vmatpush1.msra.mxu0 0.0
  %1809 = vmatprep.subr.mxu0 0.0
  %1810 = vmatpush1.msra.mxu0 0.0
  %1811 = vmatprep.subr.mxu0 0.0
  %1812 = vmatpush1.msra.mxu0 0.0
  %1813 = vmatprep.subr.mxu0 0.0
  %1814 = vmatpush1.msra.mxu0 0.0
  %1815 = vmatprep.subr.mxu0 0.0
  %1816 = vmatpush1.msra.mxu0 0.0
  %1817 = vmatprep.subr.mxu0 0.0
  %1818 = vmatpush1.msra.mxu0 0.0
  %1819 = vmatprep.mubr.f32.mxu0 0.0
  %1820 = vmatmul.mubr.f32.gmra.mrb[0].mxu0 %v1698
  %v1821 = vpop.f32.mrb[0].mxu0
  %v1822 = vadd.f32 %v1718, %v1821
  %v1823 = vpop.f32.mrb[0].mxu0
  %v1824 = vadd.f32 %v1718, %v1823
  %1825 = vmatprep.mubr.f32.mxu0 0.0
  %1826 = vmatmul.mubr.f32.gmra.mrb[0].mxu0 %v1699
  %v1827 = vpop.f32.mrb[0].mxu0
  %v1828 = vadd.f32 %v1723, %v1827
  %v1829 = vpop.f32.mrb[0].mxu0
  %v1830 = vadd.f32 %v1723, %v1829
  %1831 = vmatprep.mubr.f32.mxu0 0.0
  %1832 = vmatmul.mubr.f32.gmra.mrb[0].mxu0 %v1700
  %v1833 = vpop.f32.mrb[0].mxu0
  %v1834 = vadd.f32 %v1728, %v1833
  %v1835 = vpop.f32.mrb[0].mxu0
  %v1836 = vadd.f32 %v1728, %v1835
  %1837 = vmatprep.mubr.f32.mxu0 0.0
  %1838 = vmatmul.mubr.f32.gmra.mrb[0].mxu0 %v1701
  %v1839 = vpop.f32.mrb[0].mxu0
  %v1840 = vadd.f32 %v1733, %v1839
  %v1841 = vpop.f32.mrb[0].mxu0
  %v1842 = vadd.f32 %v1733, %v1841
  %1843 = vmatprep.mubr.f32.mxu0 0.0
  %1844 = vmatmul.mubr.f32.gmra.mrb[0].mxu0 %v1702
  %v1845 = vpop.f32.mrb[0].mxu0
  %v1846 = vadd.f32 %v1738, %v1845
  %v1847 = vpop.f32.mrb[0].mxu0
  %v1848 = vadd.f32 %v1738, %v1847
  %1849 = vmatprep.mubr.f32.mxu0 0.0
  %1850 = vmatmul.mubr.f32.gmra.mrb[0].mxu0 %v1703
  %v1851 = vpop.f32.mrb[0].mxu0
  %v1852 = vadd.f32 %v1743, %v1851
  %v1853 = vpop.f32.mrb[0].mxu0
  %v1854 = vadd.f32 %v1743, %v1853
  %1855 = vmatprep.mubr.f32.mxu0 0.0
  %1856 = vmatmul.mubr.f32.gmra.mrb[0].mxu0 %v1704
  %v1857 = vpop.f32.mrb[0].mxu0
  %v1858 = vadd.f32 %v1748, %v1857
  %v1859 = vpop.f32.mrb[0].mxu0
  %v1860 = vadd.f32 %v1748, %v1859
  %1861 = vmatprep.mubr.f32.mxu0 0.0
  %1862 = vmatmul.mubr.f32.gmra.mrb[0].mxu0 %v1705
  %v1863 = vpop.f32.mrb[0].mxu0
  %v1864 = vadd.f32 %v1753, %v1863
  %v1865 = vpop.f32.mrb[0].mxu0
  %v1866 = vadd.f32 %v1753, %v1865
  %1867 = vdwg.mxu0
  %v1868 = vld [vmem:[%s7] sm:$0xff]
  %v1869 = vld [vmem:[%s7 + $0x8] sm:$0xff]
  %v1870 = vld [vmem:[%s7 + $0x10] sm:$0xff]
  %v1871 = vld [vmem:[%s7 + $0x18] sm:$0xff]
  %v1872 = vld [vmem:[%s7 + $0x20] sm:$0xff]
  %v1873 = vld [vmem:[%s7 + $0x28] sm:$0xff]
  %v1874 = vld [vmem:[%s7 + $0x30] sm:$0xff]
  %v1875 = vld [vmem:[%s7 + $0x38] sm:$0xff]
  %v1876 = vld [vmem:[%s7 + $0x40] sm:$0xff]
  %v1877 = vld [vmem:[%s7 + $0x48] sm:$0xff]
  %v1878 = vld [vmem:[%s7 + $0x50] sm:$0xff]
  %v1879 = vld [vmem:[%s7 + $0x58] sm:$0xff]
  %v1880 = vld [vmem:[%s7 + $0x60] sm:$0xff]
  %v1881 = vld [vmem:[%s7 + $0x68] sm:$0xff]
  %v1882 = vld [vmem:[%s7 + $0x70] sm:$0xff]
  %v1883 = vld [vmem:[%s7 + $0x78] sm:$0xff]
  %vm1884 = vcmask 195584
  %v1886 = vsel %vm1884, %v1869, 0
  %v1889 = vsel %vm1884, %v1871, 0
  %v1892 = vsel %vm1884, %v1873, 0
  %v1895 = vsel %vm1884, %v1875, 0
  %v1898 = vsel %vm1884, %v1877, 0
  %v1901 = vsel %vm1884, %v1879, 0
  %v1904 = vsel %vm1884, %v1881, 0
  %v1907 = vsel %vm1884, %v1883, 0
  %1909 = vmatprep.subr.mxu0 %v1824
  %1910 = vmatpush1.msra.mxu0 %v1822
  %1911 = vmatprep.subr.mxu0 %v1830
  %1912 = vmatpush1.msra.mxu0 %v1828
  %1913 = vmatprep.subr.mxu0 %v1836
  %1914 = vmatpush1.msra.mxu0 %v1834
  %1915 = vmatprep.subr.mxu0 %v1842
  %1916 = vmatpush1.msra.mxu0 %v1840
  %1917 = vmatprep.subr.mxu0 %v1848
  %1918 = vmatpush1.msra.mxu0 %v1846
  %1919 = vmatprep.subr.mxu0 %v1854
  %1920 = vmatpush1.msra.mxu0 %v1852
  %1921 = vmatprep.subr.mxu0 %v1860
  %1922 = vmatpush1.msra.mxu0 %v1858
  %1923 = vmatprep.subr.mxu0 %v1866
  %1924 = vmatpush1.msra.mxu0 %v1864
  %1925 = vmatprep.subr.mxu0 %v33
  %1926 = vmatpush1.msra.mxu0 %v32
  %1927 = vmatprep.subr.mxu0 %v35
  %1928 = vmatpush1.msra.mxu0 %v34
  %1929 = vmatprep.subr.mxu0 %v37
  %1930 = vmatpush1.msra.mxu0 %v36
  %1931 = vmatprep.subr.mxu0 %v39
  %1932 = vmatpush1.msra.mxu0 %v38
  %1933 = vmatprep.subr.mxu0 %v41
  %1934 = vmatpush1.msra.mxu0 %v40
  %1935 = vmatprep.subr.mxu0 %v43
  %1936 = vmatpush1.msra.mxu0 %v42
  %1937 = vmatprep.subr.mxu0 %v45
  %1938 = vmatpush1.msra.mxu0 %v44
  %1939 = vmatprep.subr.mxu0 %v47
  %1940 = vmatpush1.msra.mxu0 %v46
  %1941 = vmatprep.subr.mxu0 %v49
  %1942 = vmatpush1.msra.mxu0 %v48
  %1943 = vmatprep.subr.mxu0 %v51
  %1944 = vmatpush1.msra.mxu0 %v50
  %1945 = vmatprep.subr.mxu0 %v53
  %1946 = vmatpush1.msra.mxu0 %v52
  %1947 = vmatprep.subr.mxu0 0.0
  %1948 = vmatpush1.msra.mxu0 0.0
  %1949 = vmatprep.subr.mxu0 0.0
  %1950 = vmatpush1.msra.mxu0 0.0
  %1951 = vmatprep.subr.mxu0 0.0
  %1952 = vmatpush1.msra.mxu0 0.0
  %1953 = vmatprep.subr.mxu0 0.0
  %1954 = vmatpush1.msra.mxu0 0.0
  %1955 = vmatprep.subr.mxu0 0.0
  %1956 = vmatpush1.msra.mxu0 0.0
  %1957 = vmatprep.subr.mxu0 0.0
  %1958 = vmatpush1.msra.mxu0 0.0
  %1959 = vmatprep.subr.mxu0 0.0
  %1960 = vmatpush1.msra.mxu0 0.0
  %1961 = vmatprep.subr.mxu0 0.0
  %1962 = vmatpush1.msra.mxu0 0.0
  %1963 = vmatprep.subr.mxu0 0.0
  %1964 = vmatpush1.msra.mxu0 0.0
  %1965 = vmatprep.subr.mxu0 0.0
  %1966 = vmatpush1.msra.mxu0 0.0
  %1967 = vmatprep.subr.mxu0 0.0
  %1968 = vmatpush1.msra.mxu0 0.0
  %1969 = vmatprep.subr.mxu0 0.0
  %1970 = vmatpush1.msra.mxu0 0.0
  %1971 = vmatprep.subr.mxu0 0.0
  %1972 = vmatpush1.msra.mxu0 0.0
  %1973 = vmatprep.mubr.f32.mxu0 %v1886
  %1974 = vmatmul.mubr.f32.gmra.mrb[0].mxu0 %v1868
  %v1975 = vpop.f32.mrb[0].mxu0
  %v1976 = vadd.f32 0.0, %v1975
  %v1977 = vpop.f32.mrb[0].mxu0
  %v1978 = vadd.f32 0.0, %v1977
  %1979 = vmatprep.mubr.f32.mxu0 %v1889
  %1980 = vmatmul.mubr.f32.gmra.mrb[0].mxu0 %v1870
  %v1981 = vpop.f32.mrb[0].mxu0
  %v1982 = vadd.f32 0.0, %v1981
  %v1983 = vpop.f32.mrb[0].mxu0
  %v1984 = vadd.f32 0.0, %v1983
  %1985 = vmatprep.mubr.f32.mxu0 %v1892
  %1986 = vmatmul.mubr.f32.gmra.mrb[0].mxu0 %v1872
  %v1987 = vpop.f32.mrb[0].mxu0
  %v1988 = vadd.f32 0.0, %v1987
  %v1989 = vpop.f32.mrb[0].mxu0
  %v1990 = vadd.f32 0.0, %v1989
  %1991 = vmatprep.mubr.f32.mxu0 %v1895
  %1992 = vmatmul.mubr.f32.gmra.mrb[0].mxu0 %v1874
  %v1993 = vpop.f32.mrb[0].mxu0
  %v1994 = vadd.f32 0.0, %v1993
  %v1995 = vpop.f32.mrb[0].mxu0
  %v1996 = vadd.f32 0.0, %v1995
  %1997 = vmatprep.mubr.f32.mxu0 %v1898
  %1998 = vmatmul.mubr.f32.gmra.mrb[0].mxu0 %v1876
  %v1999 = vpop.f32.mrb[0].mxu0
  %v2000 = vadd.f32 0.0, %v1999
  %v2001 = vpop.f32.mrb[0].mxu0
  %v2002 = vadd.f32 0.0, %v2001
  %2003 = vmatprep.mubr.f32.mxu0 %v1901
  %2004 = vmatmul.mubr.f32.gmra.mrb[0].mxu0 %v1878
  %v2005 = vpop.f32.mrb[0].mxu0
  %v2006 = vadd.f32 0.0, %v2005
  %v2007 = vpop.f32.mrb[0].mxu0
  %v2008 = vadd.f32 0.0, %v2007
  %2009 = vmatprep.mubr.f32.mxu0 %v1904
  %2010 = vmatmul.mubr.f32.gmra.mrb[0].mxu0 %v1880
  %v2011 = vpop.f32.mrb[0].mxu0
  %v2012 = vadd.f32 0.0, %v2011
  %v2013 = vpop.f32.mrb[0].mxu0
  %v2014 = vadd.f32 0.0, %v2013
  %2015 = vmatprep.mubr.f32.mxu0 %v1907
  %2016 = vmatmul.mubr.f32.gmra.mrb[0].mxu0 %v1882
  %v2017 = vpop.f32.mrb[0].mxu0
  %v2018 = vadd.f32 0.0, %v2017
  %v2019 = vpop.f32.mrb[0].mxu0
  %v2020 = vadd.f32 0.0, %v2019
  %2021 = vdwg.mxu0
  %s2022 = scalar_lea.vmem %s1, 320
  %v2023 = vld [vmem:[%s2022] sm:$0xff]
  %v2024 = vld [vmem:[%s2022 + $0x8] sm:$0xff]
  %v2025 = vld [vmem:[%s2022 + $0x10] sm:$0xff]
  %v2026 = vld [vmem:[%s2022 + $0x18] sm:$0xff]
  %v2027 = vld [vmem:[%s2022 + $0x20] sm:$0xff]
  %v2028 = vld [vmem:[%s2022 + $0x28] sm:$0xff]
  %v2029 = vld [vmem:[%s2022 + $0x30] sm:$0xff]
  %v2030 = vld [vmem:[%s2022 + $0x38] sm:$0xff]
  %v2031 = vld [vmem:[%s2022 + $0x40] sm:$0xff]
  %v2032 = vld [vmem:[%s2022 + $0x48] sm:$0xff]
  %v2033 = vld [vmem:[%s2022 + $0x50] sm:$0xff]
  %v2034 = vld [vmem:[%s2022 + $0x58] sm:$0xff]
  %v2035 = vld [vmem:[%s2022 + $0x60] sm:$0xff]
  %v2036 = vld [vmem:[%s2022 + $0x68] sm:$0xff]
  %v2037 = vld [vmem:[%s2022 + $0x70] sm:$0xff]
  %v2038 = vld [vmem:[%s2022 + $0x78] sm:$0xff]
  %v2039 = vld [vmem:[%s2022 + $0x80] sm:$0xff]
  %v2040 = vld [vmem:[%s2022 + $0x88] sm:$0xff]
  %v2041 = vld [vmem:[%s2022 + $0x90] sm:$0xff]
  %v2042 = vld [vmem:[%s2022 + $0x98] sm:$0xff]
  %s2043 = scalar_lea.vmem %s2, 320
  %v2044 = vld [vmem:[%s2043] sm:$0xff]
  %v2045 = vld [vmem:[%s2043 + $0x8] sm:$0xff]
  %v2046 = vld [vmem:[%s2043 + $0x10] sm:$0xff]
  %v2047 = vld [vmem:[%s2043 + $0x18] sm:$0xff]
  %v2048 = vld [vmem:[%s2043 + $0x20] sm:$0xff]
  %v2049 = vld [vmem:[%s2043 + $0x28] sm:$0xff]
  %v2050 = vld [vmem:[%s2043 + $0x30] sm:$0xff]
  %v2051 = vld [vmem:[%s2043 + $0x38] sm:$0xff]
  %v2052 = vld [vmem:[%s2043 + $0x40] sm:$0xff]
  %v2053 = vld [vmem:[%s2043 + $0x48] sm:$0xff]
  %v2054 = vld [vmem:[%s2043 + $0x50] sm:$0xff]
  %v2055 = vld [vmem:[%s2043 + $0x58] sm:$0xff]
  %v2056 = vld [vmem:[%s2043 + $0x60] sm:$0xff]
  %v2057 = vld [vmem:[%s2043 + $0x68] sm:$0xff]
  %v2058 = vld [vmem:[%s2043 + $0x70] sm:$0xff]
  %v2059 = vld [vmem:[%s2043 + $0x78] sm:$0xff]
  %v2060 = vld [vmem:[%s2043 + $0x80] sm:$0xff]
  %v2061 = vld [vmem:[%s2043 + $0x88] sm:$0xff]
  %v2062 = vld [vmem:[%s2043 + $0x90] sm:$0xff]
  %v2063 = vld [vmem:[%s2043 + $0x98] sm:$0xff]
  %2065 = vset.pattern.permute.xlu0 0
  %2066 = vperm.xlu0 %2065, %v2044
  %v2067 = vpop.permute.xlu0 %2066
  %2070 = vset.pattern.permute.xlu0 0
  %2071 = vperm.xlu0 %2070, %v2045
  %v2072 = vpop.permute.xlu0 %2071
  %2075 = vset.pattern.permute.xlu0 0
  %2076 = vperm.xlu0 %2075, %v2046
  %v2077 = vpop.permute.xlu0 %2076
  %2080 = vset.pattern.permute.xlu0 0
  %2081 = vperm.xlu0 %2080, %v2047
  %v2082 = vpop.permute.xlu0 %2081
  %2085 = vset.pattern.permute.xlu0 0
  %2086 = vperm.xlu0 %2085, %v2048
  %v2087 = vpop.permute.xlu0 %2086
  %2090 = vset.pattern.permute.xlu0 0
  %2091 = vperm.xlu0 %2090, %v2049
  %v2092 = vpop.permute.xlu0 %2091
  %2095 = vset.pattern.permute.xlu0 0
  %2096 = vperm.xlu0 %2095, %v2050
  %v2097 = vpop.permute.xlu0 %2096
  %2100 = vset.pattern.permute.xlu0 0
  %2101 = vperm.xlu0 %2100, %v2051
  %v2102 = vpop.permute.xlu0 %2101
  %2105 = vset.pattern.permute.xlu0 0
  %2106 = vperm.xlu0 %2105, %v2052
  %v2107 = vpop.permute.xlu0 %2106
  %2110 = vset.pattern.permute.xlu0 0
  %2111 = vperm.xlu0 %2110, %v2053
  %v2112 = vpop.permute.xlu0 %2111
  %2115 = vset.pattern.permute.xlu0 0
  %2116 = vperm.xlu0 %2115, %v2054
  %v2117 = vpop.permute.xlu0 %2116
  %2120 = vset.pattern.permute.xlu0 0
  %2121 = vperm.xlu0 %2120, %v2055
  %v2122 = vpop.permute.xlu0 %2121
  %2125 = vset.pattern.permute.xlu0 0
  %2126 = vperm.xlu0 %2125, %v2056
  %v2127 = vpop.permute.xlu0 %2126
  %2130 = vset.pattern.permute.xlu0 0
  %2131 = vperm.xlu0 %2130, %v2057
  %v2132 = vpop.permute.xlu0 %2131
  %2135 = vset.pattern.permute.xlu0 0
  %2136 = vperm.xlu0 %2135, %v2058
  %v2137 = vpop.permute.xlu0 %2136
  %2140 = vset.pattern.permute.xlu0 0
  %2141 = vperm.xlu0 %2140, %v2059
  %v2142 = vpop.permute.xlu0 %2141
  %2145 = vset.pattern.permute.xlu0 0
  %2146 = vperm.xlu0 %2145, %v2060
  %v2147 = vpop.permute.xlu0 %2146
  %2150 = vset.pattern.permute.xlu0 0
  %2151 = vperm.xlu0 %2150, %v2061
  %v2152 = vpop.permute.xlu0 %2151
  %2155 = vset.pattern.permute.xlu0 0
  %2156 = vperm.xlu0 %2155, %v2062
  %v2157 = vpop.permute.xlu0 %2156
  %2160 = vset.pattern.permute.xlu0 0
  %2161 = vperm.xlu0 %2160, %v2063
  %v2162 = vpop.permute.xlu0 %2161
  %v2165 = vsel %vm340, %v2023, 0
  %v2168 = vsel %vm340, %v2024, 0
  %v2171 = vsel %vm340, %v2025, 0
  %v2174 = vsel %vm340, %v2026, 0
  %v2177 = vsel %vm340, %v2027, 0
  %v2180 = vsel %vm340, %v2028, 0
  %v2183 = vsel %vm340, %v2029, 0
  %v2186 = vsel %vm340, %v2030, 0
  %v2189 = vsel %vm340, %v2031, 0
  %v2192 = vsel %vm340, %v2032, 0
  %v2195 = vsel %vm340, %v2033, 0
  %v2198 = vsel %vm340, %v2034, 0
  %v2201 = vsel %vm340, %v2035, 0
  %v2204 = vsel %vm340, %v2036, 0
  %v2207 = vsel %vm340, %v2037, 0
  %v2210 = vsel %vm340, %v2038, 0
  %v2213 = vsel %vm340, %v2039, 0
  %v2216 = vsel %vm340, %v2040, 0
  %v2219 = vsel %vm340, %v2041, 0
  %v2222 = vsel %vm340, %v2042, 0
  %2224 = vmatprep.subr.mxu0 %v1978
  %2225 = vmatpush1.msra.mxu0 %v1976
  %2226 = vmatprep.subr.mxu0 %v1984
  %2227 = vmatpush1.msra.mxu0 %v1982
  %2228 = vmatprep.subr.mxu0 %v1990
  %2229 = vmatpush1.msra.mxu0 %v1988
  %2230 = vmatprep.subr.mxu0 %v1996
  %2231 = vmatpush1.msra.mxu0 %v1994
  %2232 = vmatprep.subr.mxu0 %v2002
  %2233 = vmatpush1.msra.mxu0 %v2000
  %2234 = vmatprep.subr.mxu0 %v2008
  %2235 = vmatpush1.msra.mxu0 %v2006
  %2236 = vmatprep.subr.mxu0 %v2014
  %2237 = vmatpush1.msra.mxu0 %v2012
  %2238 = vmatprep.subr.mxu0 %v2020
  %2239 = vmatpush1.msra.mxu0 %v2018
  %2240 = vmatprep.subr.mxu0 0.0
  %2241 = vmatpush1.msra.mxu0 0.0
  %2242 = vmatprep.subr.mxu0 0.0
  %2243 = vmatpush1.msra.mxu0 0.0
  %2244 = vmatprep.subr.mxu0 0.0
  %2245 = vmatpush1.msra.mxu0 0.0
  %2246 = vmatprep.subr.mxu0 0.0
  %2247 = vmatpush1.msra.mxu0 0.0
  %2248 = vmatprep.subr.mxu0 0.0
  %2249 = vmatpush1.msra.mxu0 0.0
  %2250 = vmatprep.subr.mxu0 0.0
  %2251 = vmatpush1.msra.mxu0 0.0
  %2252 = vmatprep.subr.mxu0 0.0
  %2253 = vmatpush1.msra.mxu0 0.0
  %2254 = vmatprep.subr.mxu0 0.0
  %2255 = vmatpush1.msra.mxu0 0.0
  %2256 = vmatprep.subr.mxu0 0.0
  %2257 = vmatpush1.msra.mxu0 0.0
  %2258 = vmatprep.subr.mxu0 0.0
  %2259 = vmatpush1.msra.mxu0 0.0
  %2260 = vmatprep.subr.mxu0 0.0
  %2261 = vmatpush1.msra.mxu0 0.0
  %2262 = vmatprep.subr.mxu0 0.0
  %2263 = vmatpush1.msra.mxu0 0.0
  %2264 = vmatprep.subr.mxu0 0.0
  %2265 = vmatpush1.msra.mxu0 0.0
  %2266 = vmatprep.subr.mxu0 0.0
  %2267 = vmatpush1.msra.mxu0 0.0
  %2268 = vmatprep.subr.mxu0 0.0
  %2269 = vmatpush1.msra.mxu0 0.0
  %2270 = vmatprep.subr.mxu0 0.0
  %2271 = vmatpush1.msra.mxu0 0.0
  %2272 = vmatprep.subr.mxu0 0.0
  %2273 = vmatpush1.msra.mxu0 0.0
  %2274 = vmatprep.subr.mxu0 0.0
  %2275 = vmatpush1.msra.mxu0 0.0
  %2276 = vmatprep.subr.mxu0 0.0
  %2277 = vmatpush1.msra.mxu0 0.0
  %2278 = vmatprep.subr.mxu0 0.0
  %2279 = vmatpush1.msra.mxu0 0.0
  %2280 = vmatprep.subr.mxu0 0.0
  %2281 = vmatpush1.msra.mxu0 0.0
  %2282 = vmatprep.subr.mxu0 0.0
  %2283 = vmatpush1.msra.mxu0 0.0
  %2284 = vmatprep.subr.mxu0 0.0
  %2285 = vmatpush1.msra.mxu0 0.0
  %2286 = vmatprep.subr.mxu0 0.0
  %2287 = vmatpush1.msra.mxu0 0.0
  %2288 = vmatprep.mubr.f32.mxu0 0.0
  %2289 = vmatmul.mubr.f32.gmra.mrb[0].mxu0 %v2165
  %v2290 = vpop.f32.mrb[0].mxu0
  %v2291 = vadd.f32 %v2067, %v2290
  %v2292 = vpop.f32.mrb[0].mxu0
  %v2293 = vadd.f32 %v2067, %v2292
  %2294 = vmatprep.mubr.f32.mxu0 0.0
  %2295 = vmatmul.mubr.f32.gmra.mrb[0].mxu0 %v2168
  %v2296 = vpop.f32.mrb[0].mxu0
  %v2297 = vadd.f32 %v2072, %v2296
  %v2298 = vpop.f32.mrb[0].mxu0
  %v2299 = vadd.f32 %v2072, %v2298
  %2300 = vmatprep.mubr.f32.mxu0 0.0
  %2301 = vmatmul.mubr.f32.gmra.mrb[0].mxu0 %v2171
  %v2302 = vpop.f32.mrb[0].mxu0
  %v2303 = vadd.f32 %v2077, %v2302
  %v2304 = vpop.f32.mrb[0].mxu0
  %v2305 = vadd.f32 %v2077, %v2304
  %2306 = vmatprep.mubr.f32.mxu0 0.0
  %2307 = vmatmul.mubr.f32.gmra.mrb[0].mxu0 %v2174
  %v2308 = vpop.f32.mrb[0].mxu0
  %v2309 = vadd.f32 %v2082, %v2308
  %v2310 = vpop.f32.mrb[0].mxu0
  %v2311 = vadd.f32 %v2082, %v2310
  %2312 = vmatprep.mubr.f32.mxu0 0.0
  %2313 = vmatmul.mubr.f32.gmra.mrb[0].mxu0 %v2177
  %v2314 = vpop.f32.mrb[0].mxu0
  %v2315 = vadd.f32 %v2087, %v2314
  %v2316 = vpop.f32.mrb[0].mxu0
  %v2317 = vadd.f32 %v2087, %v2316
  %2318 = vmatprep.mubr.f32.mxu0 0.0
  %2319 = vmatmul.mubr.f32.gmra.mrb[0].mxu0 %v2180
  %v2320 = vpop.f32.mrb[0].mxu0
  %v2321 = vadd.f32 %v2092, %v2320
  %v2322 = vpop.f32.mrb[0].mxu0
  %v2323 = vadd.f32 %v2092, %v2322
  %2324 = vmatprep.mubr.f32.mxu0 0.0
  %2325 = vmatmul.mubr.f32.gmra.mrb[0].mxu0 %v2183
  %v2326 = vpop.f32.mrb[0].mxu0
  %v2327 = vadd.f32 %v2097, %v2326
  %v2328 = vpop.f32.mrb[0].mxu0
  %v2329 = vadd.f32 %v2097, %v2328
  %2330 = vmatprep.mubr.f32.mxu0 0.0
  %2331 = vmatmul.mubr.f32.gmra.mrb[0].mxu0 %v2186
  %v2332 = vpop.f32.mrb[0].mxu0
  %v2333 = vadd.f32 %v2102, %v2332
  %v2334 = vpop.f32.mrb[0].mxu0
  %v2335 = vadd.f32 %v2102, %v2334
  %2336 = vmatprep.mubr.f32.mxu0 0.0
  %2337 = vmatmul.mubr.f32.gmra.mrb[0].mxu0 %v2189
  %v2338 = vpop.f32.mrb[0].mxu0
  %v2339 = vadd.f32 %v2107, %v2338
  %v2340 = vpop.f32.mrb[0].mxu0
  %v2341 = vadd.f32 %v2107, %v2340
  %2342 = vmatprep.mubr.f32.mxu0 0.0
  %2343 = vmatmul.mubr.f32.gmra.mrb[0].mxu0 %v2192
  %v2344 = vpop.f32.mrb[0].mxu0
  %v2345 = vadd.f32 %v2112, %v2344
  %v2346 = vpop.f32.mrb[0].mxu0
  %v2347 = vadd.f32 %v2112, %v2346
  %2348 = vmatprep.mubr.f32.mxu0 0.0
  %2349 = vmatmul.mubr.f32.gmra.mrb[0].mxu0 %v2195
  %v2350 = vpop.f32.mrb[0].mxu0
  %v2351 = vadd.f32 %v2117, %v2350
  %v2352 = vpop.f32.mrb[0].mxu0
  %v2353 = vadd.f32 %v2117, %v2352
  %2354 = vmatprep.mubr.f32.mxu0 0.0
  %2355 = vmatmul.mubr.f32.gmra.mrb[0].mxu0 %v2198
  %v2356 = vpop.f32.mrb[0].mxu0
  %v2357 = vadd.f32 %v2122, %v2356
  %v2358 = vpop.f32.mrb[0].mxu0
  %v2359 = vadd.f32 %v2122, %v2358
  %2360 = vmatprep.mubr.f32.mxu0 0.0
  %2361 = vmatmul.mubr.f32.gmra.mrb[0].mxu0 %v2201
  %v2362 = vpop.f32.mrb[0].mxu0
  %v2363 = vadd.f32 %v2127, %v2362
  %v2364 = vpop.f32.mrb[0].mxu0
  %v2365 = vadd.f32 %v2127, %v2364
  %2366 = vmatprep.mubr.f32.mxu0 0.0
  %2367 = vmatmul.mubr.f32.gmra.mrb[0].mxu0 %v2204
  %v2368 = vpop.f32.mrb[0].mxu0
  %v2369 = vadd.f32 %v2132, %v2368
  %v2370 = vpop.f32.mrb[0].mxu0
  %v2371 = vadd.f32 %v2132, %v2370
  %2372 = vmatprep.mubr.f32.mxu0 0.0
  %2373 = vmatmul.mubr.f32.gmra.mrb[0].mxu0 %v2207
  %v2374 = vpop.f32.mrb[0].mxu0
  %v2375 = vadd.f32 %v2137, %v2374
  %v2376 = vpop.f32.mrb[0].mxu0
  %v2377 = vadd.f32 %v2137, %v2376
  %2378 = vmatprep.mubr.f32.mxu0 0.0
  %2379 = vmatmul.mubr.f32.gmra.mrb[0].mxu0 %v2210
  %v2380 = vpop.f32.mrb[0].mxu0
  %v2381 = vadd.f32 %v2142, %v2380
  %v2382 = vpop.f32.mrb[0].mxu0
  %v2383 = vadd.f32 %v2142, %v2382
  %2384 = vmatprep.mubr.f32.mxu0 0.0
  %2385 = vmatmul.mubr.f32.gmra.mrb[0].mxu0 %v2213
  %v2386 = vpop.f32.mrb[0].mxu0
  %v2387 = vadd.f32 %v2147, %v2386
  %v2388 = vpop.f32.mrb[0].mxu0
  %v2389 = vadd.f32 %v2147, %v2388
  %2390 = vmatprep.mubr.f32.mxu0 0.0
  %2391 = vmatmul.mubr.f32.gmra.mrb[0].mxu0 %v2216
  %v2392 = vpop.f32.mrb[0].mxu0
  %v2393 = vadd.f32 %v2152, %v2392
  %v2394 = vpop.f32.mrb[0].mxu0
  %v2395 = vadd.f32 %v2152, %v2394
  %2396 = vmatprep.mubr.f32.mxu0 0.0
  %2397 = vmatmul.mubr.f32.gmra.mrb[0].mxu0 %v2219
  %v2398 = vpop.f32.mrb[0].mxu0
  %v2399 = vadd.f32 %v2157, %v2398
  %v2400 = vpop.f32.mrb[0].mxu0
  %v2401 = vadd.f32 %v2157, %v2400
  %2402 = vmatprep.mubr.f32.mxu0 0.0
  %2403 = vmatmul.mubr.f32.gmra.mrb[0].mxu0 %v2222
  %v2404 = vpop.f32.mrb[0].mxu0
  %v2405 = vadd.f32 %v2162, %v2404
  %v2406 = vpop.f32.mrb[0].mxu0
  %v2407 = vadd.f32 %v2162, %v2406
  %2408 = vdwg.mxu0
  %vm2409 = vcmp.ge.f32.partialorder %v2291, 0.0
  %vm2410 = vcmp.ge.f32.partialorder %v2293, 0.0
  %vm2411 = vcmp.ge.f32.partialorder %v2297, 0.0
  %vm2412 = vcmp.ge.f32.partialorder %v2299, 0.0
  %vm2413 = vcmp.ge.f32.partialorder %v2303, 0.0
  %vm2414 = vcmp.ge.f32.partialorder %v2305, 0.0
  %vm2415 = vcmp.ge.f32.partialorder %v2309, 0.0
  %vm2416 = vcmp.ge.f32.partialorder %v2311, 0.0
  %vm2417 = vcmp.ge.f32.partialorder %v2315, 0.0
  %vm2418 = vcmp.ge.f32.partialorder %v2317, 0.0
  %vm2419 = vcmp.ge.f32.partialorder %v2321, 0.0
  %vm2420 = vcmp.ge.f32.partialorder %v2323, 0.0
  %vm2421 = vcmp.ge.f32.partialorder %v2327, 0.0
  %vm2422 = vcmp.ge.f32.partialorder %v2329, 0.0
  %vm2423 = vcmp.ge.f32.partialorder %v2333, 0.0
  %vm2424 = vcmp.ge.f32.partialorder %v2335, 0.0
  %vm2425 = vcmp.ge.f32.partialorder %v2339, 0.0
  %vm2426 = vcmp.ge.f32.partialorder %v2341, 0.0
  %vm2427 = vcmp.ge.f32.partialorder %v2345, 0.0
  %vm2428 = vcmp.ge.f32.partialorder %v2347, 0.0
  %vm2429 = vcmp.ge.f32.partialorder %v2351, 0.0
  %vm2430 = vcmp.ge.f32.partialorder %v2353, 0.0
  %vm2431 = vcmp.ge.f32.partialorder %v2357, 0.0
  %vm2432 = vcmp.ge.f32.partialorder %v2359, 0.0
  %vm2433 = vcmp.ge.f32.partialorder %v2363, 0.0
  %vm2434 = vcmp.ge.f32.partialorder %v2365, 0.0
  %vm2435 = vcmp.ge.f32.partialorder %v2369, 0.0
  %vm2436 = vcmp.ge.f32.partialorder %v2371, 0.0
  %vm2437 = vcmp.ge.f32.partialorder %v2375, 0.0
  %vm2438 = vcmp.ge.f32.partialorder %v2377, 0.0
  %vm2439 = vcmp.ge.f32.partialorder %v2381, 0.0
  %vm2440 = vcmp.ge.f32.partialorder %v2383, 0.0
  %vm2441 = vcmp.ge.f32.partialorder %v2387, 0.0
  %vm2442 = vcmp.ge.f32.partialorder %v2389, 0.0
  %vm2443 = vcmp.ge.f32.partialorder %v2393, 0.0
  %vm2444 = vcmp.ge.f32.partialorder %v2395, 0.0
  %vm2445 = vcmp.ge.f32.partialorder %v2399, 0.0
  %vm2446 = vcmp.ge.f32.partialorder %v2401, 0.0
  %vm2447 = vcmp.ge.f32.partialorder %v2405, 0.0
  %vm2448 = vcmp.ge.f32.partialorder %v2407, 0.0
  %v2449 = vmul.f32 %v2291, 0.01
  %v2450 = vmul.f32 %v2293, 0.01
  %v2451 = vmul.f32 %v2297, 0.01
  %v2452 = vmul.f32 %v2299, 0.01
  %v2453 = vmul.f32 %v2303, 0.01
  %v2454 = vmul.f32 %v2305, 0.01
  %v2455 = vmul.f32 %v2309, 0.01
  %v2456 = vmul.f32 %v2311, 0.01
  %v2457 = vmul.f32 %v2315, 0.01
  %v2458 = vmul.f32 %v2317, 0.01
  %v2459 = vmul.f32 %v2321, 0.01
  %v2460 = vmul.f32 %v2323, 0.01
  %v2461 = vmul.f32 %v2327, 0.01
  %v2462 = vmul.f32 %v2329, 0.01
  %v2463 = vmul.f32 %v2333, 0.01
  %v2464 = vmul.f32 %v2335, 0.01
  %v2465 = vmul.f32 %v2339, 0.01
  %v2466 = vmul.f32 %v2341, 0.01
  %v2467 = vmul.f32 %v2345, 0.01
  %v2468 = vmul.f32 %v2347, 0.01
  %v2469 = vmul.f32 %v2351, 0.01
  %v2470 = vmul.f32 %v2353, 0.01
  %v2471 = vmul.f32 %v2357, 0.01
  %v2472 = vmul.f32 %v2359, 0.01
  %v2473 = vmul.f32 %v2363, 0.01
  %v2474 = vmul.f32 %v2365, 0.01
  %v2475 = vmul.f32 %v2369, 0.01
  %v2476 = vmul.f32 %v2371, 0.01
  %v2477 = vmul.f32 %v2375, 0.01
  %v2478 = vmul.f32 %v2377, 0.01
  %v2479 = vmul.f32 %v2381, 0.01
  %v2480 = vmul.f32 %v2383, 0.01
  %v2481 = vmul.f32 %v2387, 0.01
  %v2482 = vmul.f32 %v2389, 0.01
  %v2483 = vmul.f32 %v2393, 0.01
  %v2484 = vmul.f32 %v2395, 0.01
  %v2485 = vmul.f32 %v2399, 0.01
  %v2486 = vmul.f32 %v2401, 0.01
  %v2487 = vmul.f32 %v2405, 0.01
  %v2488 = vmul.f32 %v2407, 0.01
  %v2489 = vsel %vm2409, %v2291, %v2449
  %v2490 = vsel %vm2410, %v2293, %v2450
  %v2491 = vsel %vm2411, %v2297, %v2451
  %v2492 = vsel %vm2412, %v2299, %v2452
  %v2493 = vsel %vm2413, %v2303, %v2453
  %v2494 = vsel %vm2414, %v2305, %v2454
  %v2495 = vsel %vm2415, %v2309, %v2455
  %v2496 = vsel %vm2416, %v2311, %v2456
  %v2497 = vsel %vm2417, %v2315, %v2457
  %v2498 = vsel %vm2418, %v2317, %v2458
  %v2499 = vsel %vm2419, %v2321, %v2459
  %v2500 = vsel %vm2420, %v2323, %v2460
  %v2501 = vsel %vm2421, %v2327, %v2461
  %v2502 = vsel %vm2422, %v2329, %v2462
  %v2503 = vsel %vm2423, %v2333, %v2463
  %v2504 = vsel %vm2424, %v2335, %v2464
  %v2505 = vsel %vm2425, %v2339, %v2465
  %v2506 = vsel %vm2426, %v2341, %v2466
  %v2507 = vsel %vm2427, %v2345, %v2467
  %v2508 = vsel %vm2428, %v2347, %v2468
  %v2509 = vsel %vm2429, %v2351, %v2469
  %v2510 = vsel %vm2430, %v2353, %v2470
  %v2511 = vsel %vm2431, %v2357, %v2471
  %v2512 = vsel %vm2432, %v2359, %v2472
  %v2513 = vsel %vm2433, %v2363, %v2473
  %v2514 = vsel %vm2434, %v2365, %v2474
  %v2515 = vsel %vm2435, %v2369, %v2475
  %v2516 = vsel %vm2436, %v2371, %v2476
  %v2517 = vsel %vm2437, %v2375, %v2477
  %v2518 = vsel %vm2438, %v2377, %v2478
  %v2519 = vsel %vm2439, %v2381, %v2479
  %v2520 = vsel %vm2440, %v2383, %v2480
  %v2521 = vsel %vm2441, %v2387, %v2481
  %v2522 = vsel %vm2442, %v2389, %v2482
  %v2523 = vsel %vm2443, %v2393, %v2483
  %v2524 = vsel %vm2444, %v2395, %v2484
  %v2525 = vsel %vm2445, %v2399, %v2485
  %v2526 = vsel %vm2446, %v2401, %v2486
  %v2527 = vsel %vm2447, %v2405, %v2487
  %v2528 = vsel %vm2448, %v2407, %v2488
  %s2529 = scalar_lea.vmem %s3, 256
  %v2530 = vld [vmem:[%s2529] sm:$0xff]
  %v2531 = vld [vmem:[%s2529 + $0x8] sm:$0xff]
  %v2532 = vld [vmem:[%s2529 + $0x10] sm:$0xff]
  %v2533 = vld [vmem:[%s2529 + $0x18] sm:$0xff]
  %v2534 = vld [vmem:[%s2529 + $0x20] sm:$0xff]
  %v2535 = vld [vmem:[%s2529 + $0x28] sm:$0xff]
  %v2536 = vld [vmem:[%s2529 + $0x30] sm:$0xff]
  %v2537 = vld [vmem:[%s2529 + $0x38] sm:$0xff]
  %v2538 = vld [vmem:[%s2529 + $0x40] sm:$0xff]
  %v2539 = vld [vmem:[%s2529 + $0x48] sm:$0xff]
  %v2540 = vld [vmem:[%s2529 + $0x50] sm:$0xff]
  %v2541 = vld [vmem:[%s2529 + $0x58] sm:$0xff]
  %v2542 = vld [vmem:[%s2529 + $0x60] sm:$0xff]
  %v2543 = vld [vmem:[%s2529 + $0x68] sm:$0xff]
  %v2544 = vld [vmem:[%s2529 + $0x70] sm:$0xff]
  %v2545 = vld [vmem:[%s2529 + $0x78] sm:$0xff]
  %s2546 = scalar_lea.vmem %s4, 192
  %v2547 = vld [vmem:[%s2546] sm:$0xff]
  %v2548 = vld [vmem:[%s2546 + $0x8] sm:$0xff]
  %v2549 = vld [vmem:[%s2546 + $0x10] sm:$0xff]
  %v2550 = vld [vmem:[%s2546 + $0x18] sm:$0xff]
  %v2551 = vld [vmem:[%s2546 + $0x20] sm:$0xff]
  %v2552 = vld [vmem:[%s2546 + $0x28] sm:$0xff]
  %v2553 = vld [vmem:[%s2546 + $0x30] sm:$0xff]
  %v2554 = vld [vmem:[%s2546 + $0x38] sm:$0xff]
  %2556 = vset.pattern.permute.xlu0 0
  %2557 = vperm.xlu0 %2556, %v2547
  %v2558 = vpop.permute.xlu0 %2557
  %2561 = vset.pattern.permute.xlu0 0
  %2562 = vperm.xlu0 %2561, %v2548
  %v2563 = vpop.permute.xlu0 %2562
  %2566 = vset.pattern.permute.xlu0 0
  %2567 = vperm.xlu0 %2566, %v2549
  %v2568 = vpop.permute.xlu0 %2567
  %2571 = vset.pattern.permute.xlu0 0
  %2572 = vperm.xlu0 %2571, %v2550
  %v2573 = vpop.permute.xlu0 %2572
  %2576 = vset.pattern.permute.xlu0 0
  %2577 = vperm.xlu0 %2576, %v2551
  %v2578 = vpop.permute.xlu0 %2577
  %2581 = vset.pattern.permute.xlu0 0
  %2582 = vperm.xlu0 %2581, %v2552
  %v2583 = vpop.permute.xlu0 %2582
  %2586 = vset.pattern.permute.xlu0 0
  %2587 = vperm.xlu0 %2586, %v2553
  %v2588 = vpop.permute.xlu0 %2587
  %2591 = vset.pattern.permute.xlu0 0
  %2592 = vperm.xlu0 %2591, %v2554
  %v2593 = vpop.permute.xlu0 %2592
  %v2596 = vsel %vm770, %v2531, 0
  %v2599 = vsel %vm770, %v2533, 0
  %v2602 = vsel %vm770, %v2535, 0
  %v2605 = vsel %vm770, %v2537, 0
  %v2608 = vsel %vm770, %v2539, 0
  %v2611 = vsel %vm770, %v2541, 0
  %v2614 = vsel %vm770, %v2543, 0
  %v2617 = vsel %vm770, %v2545, 0
  %2619 = vmatprep.subr.mxu0 %v2490
  %2620 = vmatpush1.msra.mxu0 %v2489
  %2621 = vmatprep.subr.mxu0 %v2492
  %2622 = vmatpush1.msra.mxu0 %v2491
  %2623 = vmatprep.subr.mxu0 %v2494
  %2624 = vmatpush1.msra.mxu0 %v2493
  %2625 = vmatprep.subr.mxu0 %v2496
  %2626 = vmatpush1.msra.mxu0 %v2495
  %2627 = vmatprep.subr.mxu0 %v2498
  %2628 = vmatpush1.msra.mxu0 %v2497
  %2629 = vmatprep.subr.mxu0 %v2500
  %2630 = vmatpush1.msra.mxu0 %v2499
  %2631 = vmatprep.subr.mxu0 %v2502
  %2632 = vmatpush1.msra.mxu0 %v2501
  %2633 = vmatprep.subr.mxu0 %v2504
  %2634 = vmatpush1.msra.mxu0 %v2503
  %2635 = vmatprep.subr.mxu0 %v2506
  %2636 = vmatpush1.msra.mxu0 %v2505
  %2637 = vmatprep.subr.mxu0 %v2508
  %2638 = vmatpush1.msra.mxu0 %v2507
  %2639 = vmatprep.subr.mxu0 %v2510
  %2640 = vmatpush1.msra.mxu0 %v2509
  %2641 = vmatprep.subr.mxu0 %v2512
  %2642 = vmatpush1.msra.mxu0 %v2511
  %2643 = vmatprep.subr.mxu0 %v2514
  %2644 = vmatpush1.msra.mxu0 %v2513
  %2645 = vmatprep.subr.mxu0 %v2516
  %2646 = vmatpush1.msra.mxu0 %v2515
  %2647 = vmatprep.subr.mxu0 %v2518
  %2648 = vmatpush1.msra.mxu0 %v2517
  %2649 = vmatprep.subr.mxu0 %v2520
  %2650 = vmatpush1.msra.mxu0 %v2519
  %2651 = vmatprep.subr.mxu0 %v2522
  %2652 = vmatpush1.msra.mxu0 %v2521
  %2653 = vmatprep.subr.mxu0 %v2524
  %2654 = vmatpush1.msra.mxu0 %v2523
  %2655 = vmatprep.subr.mxu0 %v2526
  %2656 = vmatpush1.msra.mxu0 %v2525
  %2657 = vmatprep.subr.mxu0 %v2528
  %2658 = vmatpush1.msra.mxu0 %v2527
  %2659 = vmatprep.subr.mxu0 0.0
  %2660 = vmatpush1.msra.mxu0 0.0
  %2661 = vmatprep.subr.mxu0 0.0
  %2662 = vmatpush1.msra.mxu0 0.0
  %2663 = vmatprep.subr.mxu0 0.0
  %2664 = vmatpush1.msra.mxu0 0.0
  %2665 = vmatprep.subr.mxu0 0.0
  %2666 = vmatpush1.msra.mxu0 0.0
  %2667 = vmatprep.subr.mxu0 0.0
  %2668 = vmatpush1.msra.mxu0 0.0
  %2669 = vmatprep.subr.mxu0 0.0
  %2670 = vmatpush1.msra.mxu0 0.0
  %2671 = vmatprep.subr.mxu0 0.0
  %2672 = vmatpush1.msra.mxu0 0.0
  %2673 = vmatprep.subr.mxu0 0.0
  %2674 = vmatpush1.msra.mxu0 0.0
  %2675 = vmatprep.subr.mxu0 0.0
  %2676 = vmatpush1.msra.mxu0 0.0
  %2677 = vmatprep.subr.mxu0 0.0
  %2678 = vmatpush1.msra.mxu0 0.0
  %2679 = vmatprep.subr.mxu0 0.0
  %2680 = vmatpush1.msra.mxu0 0.0
  %2681 = vmatprep.subr.mxu0 0.0
  %2682 = vmatpush1.msra.mxu0 0.0
  %2683 = vmatprep.mubr.f32.mxu0 %v2596
  %2684 = vmatmul.mubr.f32.gmra.mrb[0].mxu0 %v2530
  %v2685 = vpop.f32.mrb[0].mxu0
  %v2686 = vadd.f32 %v2558, %v2685
  %v2687 = vpop.f32.mrb[0].mxu0
  %v2688 = vadd.f32 %v2558, %v2687
  %2689 = vmatprep.mubr.f32.mxu0 %v2599
  %2690 = vmatmul.mubr.f32.gmra.mrb[0].mxu0 %v2532
  %v2691 = vpop.f32.mrb[0].mxu0
  %v2692 = vadd.f32 %v2563, %v2691
  %v2693 = vpop.f32.mrb[0].mxu0
  %v2694 = vadd.f32 %v2563, %v2693
  %2695 = vmatprep.mubr.f32.mxu0 %v2602
  %2696 = vmatmul.mubr.f32.gmra.mrb[0].mxu0 %v2534
  %v2697 = vpop.f32.mrb[0].mxu0
  %v2698 = vadd.f32 %v2568, %v2697
  %v2699 = vpop.f32.mrb[0].mxu0
  %v2700 = vadd.f32 %v2568, %v2699
  %2701 = vmatprep.mubr.f32.mxu0 %v2605
  %2702 = vmatmul.mubr.f32.gmra.mrb[0].mxu0 %v2536
  %v2703 = vpop.f32.mrb[0].mxu0
  %v2704 = vadd.f32 %v2573, %v2703
  %v2705 = vpop.f32.mrb[0].mxu0
  %v2706 = vadd.f32 %v2573, %v2705
  %2707 = vmatprep.mubr.f32.mxu0 %v2608
  %2708 = vmatmul.mubr.f32.gmra.mrb[0].mxu0 %v2538
  %v2709 = vpop.f32.mrb[0].mxu0
  %v2710 = vadd.f32 %v2578, %v2709
  %v2711 = vpop.f32.mrb[0].mxu0
  %v2712 = vadd.f32 %v2578, %v2711
  %2713 = vmatprep.mubr.f32.mxu0 %v2611
  %2714 = vmatmul.mubr.f32.gmra.mrb[0].mxu0 %v2540
  %v2715 = vpop.f32.mrb[0].mxu0
  %v2716 = vadd.f32 %v2583, %v2715
  %v2717 = vpop.f32.mrb[0].mxu0
  %v2718 = vadd.f32 %v2583, %v2717
  %2719 = vmatprep.mubr.f32.mxu0 %v2614
  %2720 = vmatmul.mubr.f32.gmra.mrb[0].mxu0 %v2542
  %v2721 = vpop.f32.mrb[0].mxu0
  %v2722 = vadd.f32 %v2588, %v2721
  %v2723 = vpop.f32.mrb[0].mxu0
  %v2724 = vadd.f32 %v2588, %v2723
  %2725 = vmatprep.mubr.f32.mxu0 %v2617
  %2726 = vmatmul.mubr.f32.gmra.mrb[0].mxu0 %v2544
  %v2727 = vpop.f32.mrb[0].mxu0
  %v2728 = vadd.f32 %v2593, %v2727
  %v2729 = vpop.f32.mrb[0].mxu0
  %v2730 = vadd.f32 %v2593, %v2729
  %2731 = vdwg.mxu0
  %v2732 = vtanh.pop %v2686
  %v2733 = vtanh.pop %v2688
  %v2734 = vtanh.pop %v2692
  %v2735 = vtanh.pop %v2694
  %v2736 = vtanh.pop %v2698
  %v2737 = vtanh.pop %v2700
  %v2738 = vtanh.pop %v2704
  %v2739 = vtanh.pop %v2706
  %v2740 = vtanh.pop %v2710
  %v2741 = vtanh.pop %v2712
  %v2742 = vtanh.pop %v2716
  %v2743 = vtanh.pop %v2718
  %v2744 = vtanh.pop %v2722
  %v2745 = vtanh.pop %v2724
  %v2746 = vtanh.pop %v2728
  %v2747 = vtanh.pop %v2730
  %v2748 = vmul.f32 %v2732, 1.442695
  %v2749 = vpow.pop %v2748
  %v2750 = vmul.f32 %v2733, 1.442695
  %v2751 = vpow.pop %v2750
  %v2752 = vmul.f32 %v2734, 1.442695
  %v2753 = vpow.pop %v2752
  %v2754 = vmul.f32 %v2735, 1.442695
  %v2755 = vpow.pop %v2754
  %v2756 = vmul.f32 %v2736, 1.442695
  %v2757 = vpow.pop %v2756
  %v2758 = vmul.f32 %v2737, 1.442695
  %v2759 = vpow.pop %v2758
  %v2760 = vmul.f32 %v2738, 1.442695
  %v2761 = vpow.pop %v2760
  %v2762 = vmul.f32 %v2739, 1.442695
  %v2763 = vpow.pop %v2762
  %v2764 = vmul.f32 %v2740, 1.442695
  %v2765 = vpow.pop %v2764
  %v2766 = vmul.f32 %v2741, 1.442695
  %v2767 = vpow.pop %v2766
  %v2768 = vmul.f32 %v2742, 1.442695
  %v2769 = vpow.pop %v2768
  %v2770 = vmul.f32 %v2743, 1.442695
  %v2771 = vpow.pop %v2770
  %v2772 = vmul.f32 %v2744, 1.442695
  %v2773 = vpow.pop %v2772
  %v2774 = vmul.f32 %v2745, 1.442695
  %v2775 = vpow.pop %v2774
  %v2776 = vmul.f32 %v2746, 1.442695
  %v2777 = vpow.pop %v2776
  %v2778 = vmul.f32 %v2747, 1.442695
  %v2779 = vpow.pop %v2778
  %v2780 = vmul.f32 %v1976, %v2749
  %v2781 = vmul.f32 %v1978, %v2751
  %v2782 = vmul.f32 %v1982, %v2753
  %v2783 = vmul.f32 %v1984, %v2755
  %v2784 = vmul.f32 %v1988, %v2757
  %v2785 = vmul.f32 %v1990, %v2759
  %v2786 = vmul.f32 %v1994, %v2761
  %v2787 = vmul.f32 %v1996, %v2763
  %v2788 = vmul.f32 %v2000, %v2765
  %v2789 = vmul.f32 %v2002, %v2767
  %v2790 = vmul.f32 %v2006, %v2769
  %v2791 = vmul.f32 %v2008, %v2771
  %v2792 = vmul.f32 %v2012, %v2773
  %v2793 = vmul.f32 %v2014, %v2775
  %v2794 = vmul.f32 %v2018, %v2777
  %v2795 = vmul.f32 %v2020, %v2779
  %s2796 = scalar_lea.vmem %s1, 480
  %v2797 = vld [vmem:[%s2796] sm:$0xff]
  %v2798 = vld [vmem:[%s2796 + $0x8] sm:$0xff]
  %v2799 = vld [vmem:[%s2796 + $0x10] sm:$0xff]
  %v2800 = vld [vmem:[%s2796 + $0x18] sm:$0xff]
  %v2801 = vld [vmem:[%s2796 + $0x20] sm:$0xff]
  %v2802 = vld [vmem:[%s2796 + $0x28] sm:$0xff]
  %v2803 = vld [vmem:[%s2796 + $0x30] sm:$0xff]
  %v2804 = vld [vmem:[%s2796 + $0x38] sm:$0xff]
  %v2805 = vld [vmem:[%s2796 + $0x40] sm:$0xff]
  %v2806 = vld [vmem:[%s2796 + $0x48] sm:$0xff]
  %v2807 = vld [vmem:[%s2796 + $0x50] sm:$0xff]
  %v2808 = vld [vmem:[%s2796 + $0x58] sm:$0xff]
  %v2809 = vld [vmem:[%s2796 + $0x60] sm:$0xff]
  %v2810 = vld [vmem:[%s2796 + $0x68] sm:$0xff]
  %v2811 = vld [vmem:[%s2796 + $0x70] sm:$0xff]
  %v2812 = vld [vmem:[%s2796 + $0x78] sm:$0xff]
  %v2813 = vld [vmem:[%s2796 + $0x80] sm:$0xff]
  %v2814 = vld [vmem:[%s2796 + $0x88] sm:$0xff]
  %v2815 = vld [vmem:[%s2796 + $0x90] sm:$0xff]
  %v2816 = vld [vmem:[%s2796 + $0x98] sm:$0xff]
  %s2817 = scalar_lea.vmem %s2, 480
  %v2818 = vld [vmem:[%s2817] sm:$0xff]
  %v2819 = vld [vmem:[%s2817 + $0x8] sm:$0xff]
  %v2820 = vld [vmem:[%s2817 + $0x10] sm:$0xff]
  %v2821 = vld [vmem:[%s2817 + $0x18] sm:$0xff]
  %v2822 = vld [vmem:[%s2817 + $0x20] sm:$0xff]
  %v2823 = vld [vmem:[%s2817 + $0x28] sm:$0xff]
  %v2824 = vld [vmem:[%s2817 + $0x30] sm:$0xff]
  %v2825 = vld [vmem:[%s2817 + $0x38] sm:$0xff]
  %v2826 = vld [vmem:[%s2817 + $0x40] sm:$0xff]
  %v2827 = vld [vmem:[%s2817 + $0x48] sm:$0xff]
  %v2828 = vld [vmem:[%s2817 + $0x50] sm:$0xff]
  %v2829 = vld [vmem:[%s2817 + $0x58] sm:$0xff]
  %v2830 = vld [vmem:[%s2817 + $0x60] sm:$0xff]
  %v2831 = vld [vmem:[%s2817 + $0x68] sm:$0xff]
  %v2832 = vld [vmem:[%s2817 + $0x70] sm:$0xff]
  %v2833 = vld [vmem:[%s2817 + $0x78] sm:$0xff]
  %v2834 = vld [vmem:[%s2817 + $0x80] sm:$0xff]
  %v2835 = vld [vmem:[%s2817 + $0x88] sm:$0xff]
  %v2836 = vld [vmem:[%s2817 + $0x90] sm:$0xff]
  %v2837 = vld [vmem:[%s2817 + $0x98] sm:$0xff]
  %2839 = vset.pattern.permute.xlu0 0
  %2840 = vperm.xlu0 %2839, %v2818
  %v2841 = vpop.permute.xlu0 %2840
  %2844 = vset.pattern.permute.xlu0 0
  %2845 = vperm.xlu0 %2844, %v2819
  %v2846 = vpop.permute.xlu0 %2845
  %2849 = vset.pattern.permute.xlu0 0
  %2850 = vperm.xlu0 %2849, %v2820
  %v2851 = vpop.permute.xlu0 %2850
  %2854 = vset.pattern.permute.xlu0 0
  %2855 = vperm.xlu0 %2854, %v2821
  %v2856 = vpop.permute.xlu0 %2855
  %2859 = vset.pattern.permute.xlu0 0
  %2860 = vperm.xlu0 %2859, %v2822
  %v2861 = vpop.permute.xlu0 %2860
  %2864 = vset.pattern.permute.xlu0 0
  %2865 = vperm.xlu0 %2864, %v2823
  %v2866 = vpop.permute.xlu0 %2865
  %2869 = vset.pattern.permute.xlu0 0
  %2870 = vperm.xlu0 %2869, %v2824
  %v2871 = vpop.permute.xlu0 %2870
  %2874 = vset.pattern.permute.xlu0 0
  %2875 = vperm.xlu0 %2874, %v2825
  %v2876 = vpop.permute.xlu0 %2875
  %2879 = vset.pattern.permute.xlu0 0
  %2880 = vperm.xlu0 %2879, %v2826
  %v2881 = vpop.permute.xlu0 %2880
  %2884 = vset.pattern.permute.xlu0 0
  %2885 = vperm.xlu0 %2884, %v2827
  %v2886 = vpop.permute.xlu0 %2885
  %2889 = vset.pattern.permute.xlu0 0
  %2890 = vperm.xlu0 %2889, %v2828
  %v2891 = vpop.permute.xlu0 %2890
  %2894 = vset.pattern.permute.xlu0 0
  %2895 = vperm.xlu0 %2894, %v2829
  %v2896 = vpop.permute.xlu0 %2895
  %2899 = vset.pattern.permute.xlu0 0
  %2900 = vperm.xlu0 %2899, %v2830
  %v2901 = vpop.permute.xlu0 %2900
  %2904 = vset.pattern.permute.xlu0 0
  %2905 = vperm.xlu0 %2904, %v2831
  %v2906 = vpop.permute.xlu0 %2905
  %2909 = vset.pattern.permute.xlu0 0
  %2910 = vperm.xlu0 %2909, %v2832
  %v2911 = vpop.permute.xlu0 %2910
  %2914 = vset.pattern.permute.xlu0 0
  %2915 = vperm.xlu0 %2914, %v2833
  %v2916 = vpop.permute.xlu0 %2915
  %2919 = vset.pattern.permute.xlu0 0
  %2920 = vperm.xlu0 %2919, %v2834
  %v2921 = vpop.permute.xlu0 %2920
  %2924 = vset.pattern.permute.xlu0 0
  %2925 = vperm.xlu0 %2924, %v2835
  %v2926 = vpop.permute.xlu0 %2925
  %2929 = vset.pattern.permute.xlu0 0
  %2930 = vperm.xlu0 %2929, %v2836
  %v2931 = vpop.permute.xlu0 %2930
  %2934 = vset.pattern.permute.xlu0 0
  %2935 = vperm.xlu0 %2934, %v2837
  %v2936 = vpop.permute.xlu0 %2935
  %v2939 = vsel %vm340, %v2797, 0
  %v2942 = vsel %vm340, %v2798, 0
  %v2945 = vsel %vm340, %v2799, 0
  %v2948 = vsel %vm340, %v2800, 0
  %v2951 = vsel %vm340, %v2801, 0
  %v2954 = vsel %vm340, %v2802, 0
  %v2957 = vsel %vm340, %v2803, 0
  %v2960 = vsel %vm340, %v2804, 0
  %v2963 = vsel %vm340, %v2805, 0
  %v2966 = vsel %vm340, %v2806, 0
  %v2969 = vsel %vm340, %v2807, 0
  %v2972 = vsel %vm340, %v2808, 0
  %v2975 = vsel %vm340, %v2809, 0
  %v2978 = vsel %vm340, %v2810, 0
  %v2981 = vsel %vm340, %v2811, 0
  %v2984 = vsel %vm340, %v2812, 0
  %v2987 = vsel %vm340, %v2813, 0
  %v2990 = vsel %vm340, %v2814, 0
  %v2993 = vsel %vm340, %v2815, 0
  %v2996 = vsel %vm340, %v2816, 0
  %2998 = vmatprep.subr.mxu0 %v2781
  %2999 = vmatpush1.msra.mxu0 %v2780
  %3000 = vmatprep.subr.mxu0 %v2783
  %3001 = vmatpush1.msra.mxu0 %v2782
  %3002 = vmatprep.subr.mxu0 %v2785
  %3003 = vmatpush1.msra.mxu0 %v2784
  %3004 = vmatprep.subr.mxu0 %v2787
  %3005 = vmatpush1.msra.mxu0 %v2786
  %3006 = vmatprep.subr.mxu0 %v2789
  %3007 = vmatpush1.msra.mxu0 %v2788
  %3008 = vmatprep.subr.mxu0 %v2791
  %3009 = vmatpush1.msra.mxu0 %v2790
  %3010 = vmatprep.subr.mxu0 %v2793
  %3011 = vmatpush1.msra.mxu0 %v2792
  %3012 = vmatprep.subr.mxu0 %v2795
  %3013 = vmatpush1.msra.mxu0 %v2794
  %3014 = vmatprep.subr.mxu0 0.0
  %3015 = vmatpush1.msra.mxu0 0.0
  %3016 = vmatprep.subr.mxu0 0.0
  %3017 = vmatpush1.msra.mxu0 0.0
  %3018 = vmatprep.subr.mxu0 0.0
  %3019 = vmatpush1.msra.mxu0 0.0
  %3020 = vmatprep.subr.mxu0 0.0
  %3021 = vmatpush1.msra.mxu0 0.0
  %3022 = vmatprep.subr.mxu0 0.0
  %3023 = vmatpush1.msra.mxu0 0.0
  %3024 = vmatprep.subr.mxu0 0.0
  %3025 = vmatpush1.msra.mxu0 0.0
  %3026 = vmatprep.subr.mxu0 0.0
  %3027 = vmatpush1.msra.mxu0 0.0
  %3028 = vmatprep.subr.mxu0 0.0
  %3029 = vmatpush1.msra.mxu0 0.0
  %3030 = vmatprep.subr.mxu0 0.0
  %3031 = vmatpush1.msra.mxu0 0.0
  %3032 = vmatprep.subr.mxu0 0.0
  %3033 = vmatpush1.msra.mxu0 0.0
  %3034 = vmatprep.subr.mxu0 0.0
  %3035 = vmatpush1.msra.mxu0 0.0
  %3036 = vmatprep.subr.mxu0 0.0
  %3037 = vmatpush1.msra.mxu0 0.0
  %3038 = vmatprep.subr.mxu0 0.0
  %3039 = vmatpush1.msra.mxu0 0.0
  %3040 = vmatprep.subr.mxu0 0.0
  %3041 = vmatpush1.msra.mxu0 0.0
  %3042 = vmatprep.subr.mxu0 0.0
  %3043 = vmatpush1.msra.mxu0 0.0
  %3044 = vmatprep.subr.mxu0 0.0
  %3045 = vmatpush1.msra.mxu0 0.0
  %3046 = vmatprep.subr.mxu0 0.0
  %3047 = vmatpush1.msra.mxu0 0.0
  %3048 = vmatprep.subr.mxu0 0.0
  %3049 = vmatpush1.msra.mxu0 0.0
  %3050 = vmatprep.subr.mxu0 0.0
  %3051 = vmatpush1.msra.mxu0 0.0
  %3052 = vmatprep.subr.mxu0 0.0
  %3053 = vmatpush1.msra.mxu0 0.0
  %3054 = vmatprep.subr.mxu0 0.0
  %3055 = vmatpush1.msra.mxu0 0.0
  %3056 = vmatprep.subr.mxu0 0.0
  %3057 = vmatpush1.msra.mxu0 0.0
  %3058 = vmatprep.subr.mxu0 0.0
  %3059 = vmatpush1.msra.mxu0 0.0
  %3060 = vmatprep.subr.mxu0 0.0
  %3061 = vmatpush1.msra.mxu0 0.0
  %3062 = vmatprep.mubr.f32.mxu0 0.0
  %3063 = vmatmul.mubr.f32.gmra.mrb[0].mxu0 %v2939
  %v3064 = vpop.f32.mrb[0].mxu0
  %v3065 = vadd.f32 %v2841, %v3064
  %v3066 = vpop.f32.mrb[0].mxu0
  %v3067 = vadd.f32 %v2841, %v3066
  %3068 = vmatprep.mubr.f32.mxu0 0.0
  %3069 = vmatmul.mubr.f32.gmra.mrb[0].mxu0 %v2942
  %v3070 = vpop.f32.mrb[0].mxu0
  %v3071 = vadd.f32 %v2846, %v3070
  %v3072 = vpop.f32.mrb[0].mxu0
  %v3073 = vadd.f32 %v2846, %v3072
  %3074 = vmatprep.mubr.f32.mxu0 0.0
  %3075 = vmatmul.mubr.f32.gmra.mrb[0].mxu0 %v2945
  %v3076 = vpop.f32.mrb[0].mxu0
  %v3077 = vadd.f32 %v2851, %v3076
  %v3078 = vpop.f32.mrb[0].mxu0
  %v3079 = vadd.f32 %v2851, %v3078
  %3080 = vmatprep.mubr.f32.mxu0 0.0
  %3081 = vmatmul.mubr.f32.gmra.mrb[0].mxu0 %v2948
  %v3082 = vpop.f32.mrb[0].mxu0
  %v3083 = vadd.f32 %v2856, %v3082
  %v3084 = vpop.f32.mrb[0].mxu0
  %v3085 = vadd.f32 %v2856, %v3084
  %3086 = vmatprep.mubr.f32.mxu0 0.0
  %3087 = vmatmul.mubr.f32.gmra.mrb[0].mxu0 %v2951
  %v3088 = vpop.f32.mrb[0].mxu0
  %v3089 = vadd.f32 %v2861, %v3088
  %v3090 = vpop.f32.mrb[0].mxu0
  %v3091 = vadd.f32 %v2861, %v3090
  %3092 = vmatprep.mubr.f32.mxu0 0.0
  %3093 = vmatmul.mubr.f32.gmra.mrb[0].mxu0 %v2954
  %v3094 = vpop.f32.mrb[0].mxu0
  %v3095 = vadd.f32 %v2866, %v3094
  %v3096 = vpop.f32.mrb[0].mxu0
  %v3097 = vadd.f32 %v2866, %v3096
  %3098 = vmatprep.mubr.f32.mxu0 0.0
  %3099 = vmatmul.mubr.f32.gmra.mrb[0].mxu0 %v2957
  %v3100 = vpop.f32.mrb[0].mxu0
  %v3101 = vadd.f32 %v2871, %v3100
  %v3102 = vpop.f32.mrb[0].mxu0
  %v3103 = vadd.f32 %v2871, %v3102
  %3104 = vmatprep.mubr.f32.mxu0 0.0
  %3105 = vmatmul.mubr.f32.gmra.mrb[0].mxu0 %v2960
  %v3106 = vpop.f32.mrb[0].mxu0
  %v3107 = vadd.f32 %v2876, %v3106
  %v3108 = vpop.f32.mrb[0].mxu0
  %v3109 = vadd.f32 %v2876, %v3108
  %3110 = vmatprep.mubr.f32.mxu0 0.0
  %3111 = vmatmul.mubr.f32.gmra.mrb[0].mxu0 %v2963
  %v3112 = vpop.f32.mrb[0].mxu0
  %v3113 = vadd.f32 %v2881, %v3112
  %v3114 = vpop.f32.mrb[0].mxu0
  %v3115 = vadd.f32 %v2881, %v3114
  %3116 = vmatprep.mubr.f32.mxu0 0.0
  %3117 = vmatmul.mubr.f32.gmra.mrb[0].mxu0 %v2966
  %v3118 = vpop.f32.mrb[0].mxu0
  %v3119 = vadd.f32 %v2886, %v3118
  %v3120 = vpop.f32.mrb[0].mxu0
  %v3121 = vadd.f32 %v2886, %v3120
  %3122 = vmatprep.mubr.f32.mxu0 0.0
  %3123 = vmatmul.mubr.f32.gmra.mrb[0].mxu0 %v2969
  %v3124 = vpop.f32.mrb[0].mxu0
  %v3125 = vadd.f32 %v2891, %v3124
  %v3126 = vpop.f32.mrb[0].mxu0
  %v3127 = vadd.f32 %v2891, %v3126
  %3128 = vmatprep.mubr.f32.mxu0 0.0
  %3129 = vmatmul.mubr.f32.gmra.mrb[0].mxu0 %v2972
  %v3130 = vpop.f32.mrb[0].mxu0
  %v3131 = vadd.f32 %v2896, %v3130
  %v3132 = vpop.f32.mrb[0].mxu0
  %v3133 = vadd.f32 %v2896, %v3132
  %3134 = vmatprep.mubr.f32.mxu0 0.0
  %3135 = vmatmul.mubr.f32.gmra.mrb[0].mxu0 %v2975
  %v3136 = vpop.f32.mrb[0].mxu0
  %v3137 = vadd.f32 %v2901, %v3136
  %v3138 = vpop.f32.mrb[0].mxu0
  %v3139 = vadd.f32 %v2901, %v3138
  %3140 = vmatprep.mubr.f32.mxu0 0.0
  %3141 = vmatmul.mubr.f32.gmra.mrb[0].mxu0 %v2978
  %v3142 = vpop.f32.mrb[0].mxu0
  %v3143 = vadd.f32 %v2906, %v3142
  %v3144 = vpop.f32.mrb[0].mxu0
  %v3145 = vadd.f32 %v2906, %v3144
  %3146 = vmatprep.mubr.f32.mxu0 0.0
  %3147 = vmatmul.mubr.f32.gmra.mrb[0].mxu0 %v2981
  %v3148 = vpop.f32.mrb[0].mxu0
  %v3149 = vadd.f32 %v2911, %v3148
  %v3150 = vpop.f32.mrb[0].mxu0
  %v3151 = vadd.f32 %v2911, %v3150
  %3152 = vmatprep.mubr.f32.mxu0 0.0
  %3153 = vmatmul.mubr.f32.gmra.mrb[0].mxu0 %v2984
  %v3154 = vpop.f32.mrb[0].mxu0
  %v3155 = vadd.f32 %v2916, %v3154
  %v3156 = vpop.f32.mrb[0].mxu0
  %v3157 = vadd.f32 %v2916, %v3156
  %3158 = vmatprep.mubr.f32.mxu0 0.0
  %3159 = vmatmul.mubr.f32.gmra.mrb[0].mxu0 %v2987
  %v3160 = vpop.f32.mrb[0].mxu0
  %v3161 = vadd.f32 %v2921, %v3160
  %v3162 = vpop.f32.mrb[0].mxu0
  %v3163 = vadd.f32 %v2921, %v3162
  %3164 = vmatprep.mubr.f32.mxu0 0.0
  %3165 = vmatmul.mubr.f32.gmra.mrb[0].mxu0 %v2990
  %v3166 = vpop.f32.mrb[0].mxu0
  %v3167 = vadd.f32 %v2926, %v3166
  %v3168 = vpop.f32.mrb[0].mxu0
  %v3169 = vadd.f32 %v2926, %v3168
  %3170 = vmatprep.mubr.f32.mxu0 0.0
  %3171 = vmatmul.mubr.f32.gmra.mrb[0].mxu0 %v2993
  %v3172 = vpop.f32.mrb[0].mxu0
  %v3173 = vadd.f32 %v2931, %v3172
  %v3174 = vpop.f32.mrb[0].mxu0
  %v3175 = vadd.f32 %v2931, %v3174
  %3176 = vmatprep.mubr.f32.mxu0 0.0
  %3177 = vmatmul.mubr.f32.gmra.mrb[0].mxu0 %v2996
  %v3178 = vpop.f32.mrb[0].mxu0
  %v3179 = vadd.f32 %v2936, %v3178
  %v3180 = vpop.f32.mrb[0].mxu0
  %v3181 = vadd.f32 %v2936, %v3180
  %3182 = vdwg.mxu0
  %vm3183 = vcmp.ge.f32.partialorder %v3065, 0.0
  %vm3184 = vcmp.ge.f32.partialorder %v3067, 0.0
  %vm3185 = vcmp.ge.f32.partialorder %v3071, 0.0
  %vm3186 = vcmp.ge.f32.partialorder %v3073, 0.0
  %vm3187 = vcmp.ge.f32.partialorder %v3077, 0.0
  %vm3188 = vcmp.ge.f32.partialorder %v3079, 0.0
  %vm3189 = vcmp.ge.f32.partialorder %v3083, 0.0
  %vm3190 = vcmp.ge.f32.partialorder %v3085, 0.0
  %vm3191 = vcmp.ge.f32.partialorder %v3089, 0.0
  %vm3192 = vcmp.ge.f32.partialorder %v3091, 0.0
  %vm3193 = vcmp.ge.f32.partialorder %v3095, 0.0
  %vm3194 = vcmp.ge.f32.partialorder %v3097, 0.0
  %vm3195 = vcmp.ge.f32.partialorder %v3101, 0.0
  %vm3196 = vcmp.ge.f32.partialorder %v3103, 0.0
  %vm3197 = vcmp.ge.f32.partialorder %v3107, 0.0
  %vm3198 = vcmp.ge.f32.partialorder %v3109, 0.0
  %vm3199 = vcmp.ge.f32.partialorder %v3113, 0.0
  %vm3200 = vcmp.ge.f32.partialorder %v3115, 0.0
  %vm3201 = vcmp.ge.f32.partialorder %v3119, 0.0
  %vm3202 = vcmp.ge.f32.partialorder %v3121, 0.0
  %vm3203 = vcmp.ge.f32.partialorder %v3125, 0.0
  %vm3204 = vcmp.ge.f32.partialorder %v3127, 0.0
  %vm3205 = vcmp.ge.f32.partialorder %v3131, 0.0
  %vm3206 = vcmp.ge.f32.partialorder %v3133, 0.0
  %vm3207 = vcmp.ge.f32.partialorder %v3137, 0.0
  %vm3208 = vcmp.ge.f32.partialorder %v3139, 0.0
  %vm3209 = vcmp.ge.f32.partialorder %v3143, 0.0
  %vm3210 = vcmp.ge.f32.partialorder %v3145, 0.0
  %vm3211 = vcmp.ge.f32.partialorder %v3149, 0.0
  %vm3212 = vcmp.ge.f32.partialorder %v3151, 0.0
  %vm3213 = vcmp.ge.f32.partialorder %v3155, 0.0
  %vm3214 = vcmp.ge.f32.partialorder %v3157, 0.0
  %vm3215 = vcmp.ge.f32.partialorder %v3161, 0.0
  %vm3216 = vcmp.ge.f32.partialorder %v3163, 0.0
  %vm3217 = vcmp.ge.f32.partialorder %v3167, 0.0
  %vm3218 = vcmp.ge.f32.partialorder %v3169, 0.0
  %vm3219 = vcmp.ge.f32.partialorder %v3173, 0.0
  %vm3220 = vcmp.ge.f32.partialorder %v3175, 0.0
  %vm3221 = vcmp.ge.f32.partialorder %v3179, 0.0
  %vm3222 = vcmp.ge.f32.partialorder %v3181, 0.0
  %v3223 = vmul.f32 %v3065, 0.01
  %v3224 = vmul.f32 %v3067, 0.01
  %v3225 = vmul.f32 %v3071, 0.01
  %v3226 = vmul.f32 %v3073, 0.01
  %v3227 = vmul.f32 %v3077, 0.01
  %v3228 = vmul.f32 %v3079, 0.01
  %v3229 = vmul.f32 %v3083, 0.01
  %v3230 = vmul.f32 %v3085, 0.01
  %v3231 = vmul.f32 %v3089, 0.01
  %v3232 = vmul.f32 %v3091, 0.01
  %v3233 = vmul.f32 %v3095, 0.01
  %v3234 = vmul.f32 %v3097, 0.01
  %v3235 = vmul.f32 %v3101, 0.01
  %v3236 = vmul.f32 %v3103, 0.01
  %v3237 = vmul.f32 %v3107, 0.01
  %v3238 = vmul.f32 %v3109, 0.01
  %v3239 = vmul.f32 %v3113, 0.01
  %v3240 = vmul.f32 %v3115, 0.01
  %v3241 = vmul.f32 %v3119, 0.01
  %v3242 = vmul.f32 %v3121, 0.01
  %v3243 = vmul.f32 %v3125, 0.01
  %v3244 = vmul.f32 %v3127, 0.01
  %v3245 = vmul.f32 %v3131, 0.01
  %v3246 = vmul.f32 %v3133, 0.01
  %v3247 = vmul.f32 %v3137, 0.01
  %v3248 = vmul.f32 %v3139, 0.01
  %v3249 = vmul.f32 %v3143, 0.01
  %v3250 = vmul.f32 %v3145, 0.01
  %v3251 = vmul.f32 %v3149, 0.01
  %v3252 = vmul.f32 %v3151, 0.01
  %v3253 = vmul.f32 %v3155, 0.01
  %v3254 = vmul.f32 %v3157, 0.01
  %v3255 = vmul.f32 %v3161, 0.01
  %v3256 = vmul.f32 %v3163, 0.01
  %v3257 = vmul.f32 %v3167, 0.01
  %v3258 = vmul.f32 %v3169, 0.01
  %v3259 = vmul.f32 %v3173, 0.01
  %v3260 = vmul.f32 %v3175, 0.01
  %v3261 = vmul.f32 %v3179, 0.01
  %v3262 = vmul.f32 %v3181, 0.01
  %v3263 = vsel %vm3183, %v3065, %v3223
  %v3264 = vsel %vm3184, %v3067, %v3224
  %v3265 = vsel %vm3185, %v3071, %v3225
  %v3266 = vsel %vm3186, %v3073, %v3226
  %v3267 = vsel %vm3187, %v3077, %v3227
  %v3268 = vsel %vm3188, %v3079, %v3228
  %v3269 = vsel %vm3189, %v3083, %v3229
  %v3270 = vsel %vm3190, %v3085, %v3230
  %v3271 = vsel %vm3191, %v3089, %v3231
  %v3272 = vsel %vm3192, %v3091, %v3232
  %v3273 = vsel %vm3193, %v3095, %v3233
  %v3274 = vsel %vm3194, %v3097, %v3234
  %v3275 = vsel %vm3195, %v3101, %v3235
  %v3276 = vsel %vm3196, %v3103, %v3236
  %v3277 = vsel %vm3197, %v3107, %v3237
  %v3278 = vsel %vm3198, %v3109, %v3238
  %v3279 = vsel %vm3199, %v3113, %v3239
  %v3280 = vsel %vm3200, %v3115, %v3240
  %v3281 = vsel %vm3201, %v3119, %v3241
  %v3282 = vsel %vm3202, %v3121, %v3242
  %v3283 = vsel %vm3203, %v3125, %v3243
  %v3284 = vsel %vm3204, %v3127, %v3244
  %v3285 = vsel %vm3205, %v3131, %v3245
  %v3286 = vsel %vm3206, %v3133, %v3246
  %v3287 = vsel %vm3207, %v3137, %v3247
  %v3288 = vsel %vm3208, %v3139, %v3248
  %v3289 = vsel %vm3209, %v3143, %v3249
  %v3290 = vsel %vm3210, %v3145, %v3250
  %v3291 = vsel %vm3211, %v3149, %v3251
  %v3292 = vsel %vm3212, %v3151, %v3252
  %v3293 = vsel %vm3213, %v3155, %v3253
  %v3294 = vsel %vm3214, %v3157, %v3254
  %v3295 = vsel %vm3215, %v3161, %v3255
  %v3296 = vsel %vm3216, %v3163, %v3256
  %v3297 = vsel %vm3217, %v3167, %v3257
  %v3298 = vsel %vm3218, %v3169, %v3258
  %v3299 = vsel %vm3219, %v3173, %v3259
  %v3300 = vsel %vm3220, %v3175, %v3260
  %v3301 = vsel %vm3221, %v3179, %v3261
  %v3302 = vsel %vm3222, %v3181, %v3262
  %s3303 = scalar_lea.vmem %s3, 384
  %v3304 = vld [vmem:[%s3303] sm:$0xff]
  %v3305 = vld [vmem:[%s3303 + $0x8] sm:$0xff]
  %v3306 = vld [vmem:[%s3303 + $0x10] sm:$0xff]
  %v3307 = vld [vmem:[%s3303 + $0x18] sm:$0xff]
  %v3308 = vld [vmem:[%s3303 + $0x20] sm:$0xff]
  %v3309 = vld [vmem:[%s3303 + $0x28] sm:$0xff]
  %v3310 = vld [vmem:[%s3303 + $0x30] sm:$0xff]
  %v3311 = vld [vmem:[%s3303 + $0x38] sm:$0xff]
  %v3312 = vld [vmem:[%s3303 + $0x40] sm:$0xff]
  %v3313 = vld [vmem:[%s3303 + $0x48] sm:$0xff]
  %v3314 = vld [vmem:[%s3303 + $0x50] sm:$0xff]
  %v3315 = vld [vmem:[%s3303 + $0x58] sm:$0xff]
  %v3316 = vld [vmem:[%s3303 + $0x60] sm:$0xff]
  %v3317 = vld [vmem:[%s3303 + $0x68] sm:$0xff]
  %v3318 = vld [vmem:[%s3303 + $0x70] sm:$0xff]
  %v3319 = vld [vmem:[%s3303 + $0x78] sm:$0xff]
  %s3320 = scalar_lea.vmem %s4, 256
  %v3321 = vld [vmem:[%s3320] sm:$0xff]
  %v3322 = vld [vmem:[%s3320 + $0x8] sm:$0xff]
  %v3323 = vld [vmem:[%s3320 + $0x10] sm:$0xff]
  %v3324 = vld [vmem:[%s3320 + $0x18] sm:$0xff]
  %v3325 = vld [vmem:[%s3320 + $0x20] sm:$0xff]
  %v3326 = vld [vmem:[%s3320 + $0x28] sm:$0xff]
  %v3327 = vld [vmem:[%s3320 + $0x30] sm:$0xff]
  %v3328 = vld [vmem:[%s3320 + $0x38] sm:$0xff]
  %3330 = vset.pattern.permute.xlu0 0
  %3331 = vperm.xlu0 %3330, %v3321
  %v3332 = vpop.permute.xlu0 %3331
  %3335 = vset.pattern.permute.xlu0 0
  %3336 = vperm.xlu0 %3335, %v3322
  %v3337 = vpop.permute.xlu0 %3336
  %3340 = vset.pattern.permute.xlu0 0
  %3341 = vperm.xlu0 %3340, %v3323
  %v3342 = vpop.permute.xlu0 %3341
  %3345 = vset.pattern.permute.xlu0 0
  %3346 = vperm.xlu0 %3345, %v3324
  %v3347 = vpop.permute.xlu0 %3346
  %3350 = vset.pattern.permute.xlu0 0
  %3351 = vperm.xlu0 %3350, %v3325
  %v3352 = vpop.permute.xlu0 %3351
  %3355 = vset.pattern.permute.xlu0 0
  %3356 = vperm.xlu0 %3355, %v3326
  %v3357 = vpop.permute.xlu0 %3356
  %3360 = vset.pattern.permute.xlu0 0
  %3361 = vperm.xlu0 %3360, %v3327
  %v3362 = vpop.permute.xlu0 %3361
  %3365 = vset.pattern.permute.xlu0 0
  %3366 = vperm.xlu0 %3365, %v3328
  %v3367 = vpop.permute.xlu0 %3366
  %v3370 = vsel %vm770, %v3305, 0
  %v3373 = vsel %vm770, %v3307, 0
  %v3376 = vsel %vm770, %v3309, 0
  %v3379 = vsel %vm770, %v3311, 0
  %v3382 = vsel %vm770, %v3313, 0
  %v3385 = vsel %vm770, %v3315, 0
  %v3388 = vsel %vm770, %v3317, 0
  %v3391 = vsel %vm770, %v3319, 0
  %3393 = vmatprep.subr.mxu0 %v3264
  %3394 = vmatpush1.msra.mxu0 %v3263
  %3395 = vmatprep.subr.mxu0 %v3266
  %3396 = vmatpush1.msra.mxu0 %v3265
  %3397 = vmatprep.subr.mxu0 %v3268
  %3398 = vmatpush1.msra.mxu0 %v3267
  %3399 = vmatprep.subr.mxu0 %v3270
  %3400 = vmatpush1.msra.mxu0 %v3269
  %3401 = vmatprep.subr.mxu0 %v3272
  %3402 = vmatpush1.msra.mxu0 %v3271
  %3403 = vmatprep.subr.mxu0 %v3274
  %3404 = vmatpush1.msra.mxu0 %v3273
  %3405 = vmatprep.subr.mxu0 %v3276
  %3406 = vmatpush1.msra.mxu0 %v3275
  %3407 = vmatprep.subr.mxu0 %v3278
  %3408 = vmatpush1.msra.mxu0 %v3277
  %3409 = vmatprep.subr.mxu0 %v3280
  %3410 = vmatpush1.msra.mxu0 %v3279
  %3411 = vmatprep.subr.mxu0 %v3282
  %3412 = vmatpush1.msra.mxu0 %v3281
  %3413 = vmatprep.subr.mxu0 %v3284
  %3414 = vmatpush1.msra.mxu0 %v3283
  %3415 = vmatprep.subr.mxu0 %v3286
  %3416 = vmatpush1.msra.mxu0 %v3285
  %3417 = vmatprep.subr.mxu0 %v3288
  %3418 = vmatpush1.msra.mxu0 %v3287
  %3419 = vmatprep.subr.mxu0 %v3290
  %3420 = vmatpush1.msra.mxu0 %v3289
  %3421 = vmatprep.subr.mxu0 %v3292
  %3422 = vmatpush1.msra.mxu0 %v3291
  %3423 = vmatprep.subr.mxu0 %v3294
  %3424 = vmatpush1.msra.mxu0 %v3293
  %3425 = vmatprep.subr.mxu0 %v3296
  %3426 = vmatpush1.msra.mxu0 %v3295
  %3427 = vmatprep.subr.mxu0 %v3298
  %3428 = vmatpush1.msra.mxu0 %v3297
  %3429 = vmatprep.subr.mxu0 %v3300
  %3430 = vmatpush1.msra.mxu0 %v3299
  %3431 = vmatprep.subr.mxu0 %v3302
  %3432 = vmatpush1.msra.mxu0 %v3301
  %3433 = vmatprep.subr.mxu0 0.0
  %3434 = vmatpush1.msra.mxu0 0.0
  %3435 = vmatprep.subr.mxu0 0.0
  %3436 = vmatpush1.msra.mxu0 0.0
  %3437 = vmatprep.subr.mxu0 0.0
  %3438 = vmatpush1.msra.mxu0 0.0
  %3439 = vmatprep.subr.mxu0 0.0
  %3440 = vmatpush1.msra.mxu0 0.0
  %3441 = vmatprep.subr.mxu0 0.0
  %3442 = vmatpush1.msra.mxu0 0.0
  %3443 = vmatprep.subr.mxu0 0.0
  %3444 = vmatpush1.msra.mxu0 0.0
  %3445 = vmatprep.subr.mxu0 0.0
  %3446 = vmatpush1.msra.mxu0 0.0
  %3447 = vmatprep.subr.mxu0 0.0
  %3448 = vmatpush1.msra.mxu0 0.0
  %3449 = vmatprep.subr.mxu0 0.0
  %3450 = vmatpush1.msra.mxu0 0.0
  %3451 = vmatprep.subr.mxu0 0.0
  %3452 = vmatpush1.msra.mxu0 0.0
  %3453 = vmatprep.subr.mxu0 0.0
  %3454 = vmatpush1.msra.mxu0 0.0
  %3455 = vmatprep.subr.mxu0 0.0
  %3456 = vmatpush1.msra.mxu0 0.0
  %3457 = vmatprep.mubr.f32.mxu0 %v3370
  %3458 = vmatmul.mubr.f32.gmra.mrb[0].mxu0 %v3304
  %v3459 = vpop.f32.mrb[0].mxu0
  %v3460 = vadd.f32 %v3332, %v3459
  %v3461 = vpop.f32.mrb[0].mxu0
  %v3462 = vadd.f32 %v3332, %v3461
  %3463 = vmatprep.mubr.f32.mxu0 %v3373
  %3464 = vmatmul.mubr.f32.gmra.mrb[0].mxu0 %v3306
  %v3465 = vpop.f32.mrb[0].mxu0
  %v3466 = vadd.f32 %v3337, %v3465
  %v3467 = vpop.f32.mrb[0].mxu0
  %v3468 = vadd.f32 %v3337, %v3467
  %3469 = vmatprep.mubr.f32.mxu0 %v3376
  %3470 = vmatmul.mubr.f32.gmra.mrb[0].mxu0 %v3308
  %v3471 = vpop.f32.mrb[0].mxu0
  %v3472 = vadd.f32 %v3342, %v3471
  %v3473 = vpop.f32.mrb[0].mxu0
  %v3474 = vadd.f32 %v3342, %v3473
  %3475 = vmatprep.mubr.f32.mxu0 %v3379
  %3476 = vmatmul.mubr.f32.gmra.mrb[0].mxu0 %v3310
  %v3477 = vpop.f32.mrb[0].mxu0
  %v3478 = vadd.f32 %v3347, %v3477
  %v3479 = vpop.f32.mrb[0].mxu0
  %v3480 = vadd.f32 %v3347, %v3479
  %3481 = vmatprep.mubr.f32.mxu0 %v3382
  %3482 = vmatmul.mubr.f32.gmra.mrb[0].mxu0 %v3312
  %v3483 = vpop.f32.mrb[0].mxu0
  %v3484 = vadd.f32 %v3352, %v3483
  %v3485 = vpop.f32.mrb[0].mxu0
  %v3486 = vadd.f32 %v3352, %v3485
  %3487 = vmatprep.mubr.f32.mxu0 %v3385
  %3488 = vmatmul.mubr.f32.gmra.mrb[0].mxu0 %v3314
  %v3489 = vpop.f32.mrb[0].mxu0
  %v3490 = vadd.f32 %v3357, %v3489
  %v3491 = vpop.f32.mrb[0].mxu0
  %v3492 = vadd.f32 %v3357, %v3491
  %3493 = vmatprep.mubr.f32.mxu0 %v3388
  %3494 = vmatmul.mubr.f32.gmra.mrb[0].mxu0 %v3316
  %v3495 = vpop.f32.mrb[0].mxu0
  %v3496 = vadd.f32 %v3362, %v3495
  %v3497 = vpop.f32.mrb[0].mxu0
  %v3498 = vadd.f32 %v3362, %v3497
  %3499 = vmatprep.mubr.f32.mxu0 %v3391
  %3500 = vmatmul.mubr.f32.gmra.mrb[0].mxu0 %v3318
  %v3501 = vpop.f32.mrb[0].mxu0
  %v3502 = vadd.f32 %v3367, %v3501
  %v3503 = vpop.f32.mrb[0].mxu0
  %v3504 = vadd.f32 %v3367, %v3503
  %3505 = vdwg.mxu0
  %v3506 = vtanh.pop %v3460
  %v3507 = vtanh.pop %v3462
  %v3508 = vtanh.pop %v3466
  %v3509 = vtanh.pop %v3468
  %v3510 = vtanh.pop %v3472
  %v3511 = vtanh.pop %v3474
  %v3512 = vtanh.pop %v3478
  %v3513 = vtanh.pop %v3480
  %v3514 = vtanh.pop %v3484
  %v3515 = vtanh.pop %v3486
  %v3516 = vtanh.pop %v3490
  %v3517 = vtanh.pop %v3492
  %v3518 = vtanh.pop %v3496
  %v3519 = vtanh.pop %v3498
  %v3520 = vtanh.pop %v3502
  %v3521 = vtanh.pop %v3504
  %s3522 = scalar_lea.vmem %s5, 64
  %v3523 = vld [vmem:[%s3522] sm:$0xff]
  %v3524 = vld [vmem:[%s3522 + $0x8] sm:$0xff]
  %v3525 = vld [vmem:[%s3522 + $0x10] sm:$0xff]
  %v3526 = vld [vmem:[%s3522 + $0x18] sm:$0xff]
  %v3527 = vld [vmem:[%s3522 + $0x20] sm:$0xff]
  %v3528 = vld [vmem:[%s3522 + $0x28] sm:$0xff]
  %v3529 = vld [vmem:[%s3522 + $0x30] sm:$0xff]
  %v3530 = vld [vmem:[%s3522 + $0x38] sm:$0xff]
  %s3531 = scalar_lea.vmem %s4, 320
  %v3532 = vld [vmem:[%s3531] sm:$0xff]
  %v3533 = vld [vmem:[%s3531 + $0x8] sm:$0xff]
  %v3534 = vld [vmem:[%s3531 + $0x10] sm:$0xff]
  %v3535 = vld [vmem:[%s3531 + $0x18] sm:$0xff]
  %v3536 = vld [vmem:[%s3531 + $0x20] sm:$0xff]
  %v3537 = vld [vmem:[%s3531 + $0x28] sm:$0xff]
  %v3538 = vld [vmem:[%s3531 + $0x30] sm:$0xff]
  %v3539 = vld [vmem:[%s3531 + $0x38] sm:$0xff]
  %3541 = vset.pattern.permute.xlu0 0
  %3542 = vperm.xlu0 %3541, %v3532
  %v3543 = vpop.permute.xlu0 %3542
  %3546 = vset.pattern.permute.xlu0 0
  %3547 = vperm.xlu0 %3546, %v3533
  %v3548 = vpop.permute.xlu0 %3547
  %3551 = vset.pattern.permute.xlu0 0
  %3552 = vperm.xlu0 %3551, %v3534
  %v3553 = vpop.permute.xlu0 %3552
  %3556 = vset.pattern.permute.xlu0 0
  %3557 = vperm.xlu0 %3556, %v3535
  %v3558 = vpop.permute.xlu0 %3557
  %3561 = vset.pattern.permute.xlu0 0
  %3562 = vperm.xlu0 %3561, %v3536
  %v3563 = vpop.permute.xlu0 %3562
  %3566 = vset.pattern.permute.xlu0 0
  %3567 = vperm.xlu0 %3566, %v3537
  %v3568 = vpop.permute.xlu0 %3567
  %3571 = vset.pattern.permute.xlu0 0
  %3572 = vperm.xlu0 %3571, %v3538
  %v3573 = vpop.permute.xlu0 %3572
  %3576 = vset.pattern.permute.xlu0 0
  %3577 = vperm.xlu0 %3576, %v3539
  %v3578 = vpop.permute.xlu0 %3577
  %3580 = vmatprep.subr.mxu0 %v2781
  %3581 = vmatpush1.msra.mxu0 %v2780
  %3582 = vmatprep.subr.mxu0 %v2783
  %3583 = vmatpush1.msra.mxu0 %v2782
  %3584 = vmatprep.subr.mxu0 %v2785
  %3585 = vmatpush1.msra.mxu0 %v2784
  %3586 = vmatprep.subr.mxu0 %v2787
  %3587 = vmatpush1.msra.mxu0 %v2786
  %3588 = vmatprep.subr.mxu0 %v2789
  %3589 = vmatpush1.msra.mxu0 %v2788
  %3590 = vmatprep.subr.mxu0 %v2791
  %3591 = vmatpush1.msra.mxu0 %v2790
  %3592 = vmatprep.subr.mxu0 %v2793
  %3593 = vmatpush1.msra.mxu0 %v2792
  %3594 = vmatprep.subr.mxu0 %v2795
  %3595 = vmatpush1.msra.mxu0 %v2794
  %3596 = vmatprep.subr.mxu0 %v3507
  %3597 = vmatpush1.msra.mxu0 %v3506
  %3598 = vmatprep.subr.mxu0 %v3509
  %3599 = vmatpush1.msra.mxu0 %v3508
  %3600 = vmatprep.subr.mxu0 %v3511
  %3601 = vmatpush1.msra.mxu0 %v3510
  %3602 = vmatprep.subr.mxu0 %v3513
  %3603 = vmatpush1.msra.mxu0 %v3512
  %3604 = vmatprep.subr.mxu0 %v3515
  %3605 = vmatpush1.msra.mxu0 %v3514
  %3606 = vmatprep.subr.mxu0 %v3517
  %3607 = vmatpush1.msra.mxu0 %v3516
  %3608 = vmatprep.subr.mxu0 %v3519
  %3609 = vmatpush1.msra.mxu0 %v3518
  %3610 = vmatprep.subr.mxu0 %v3521
  %3611 = vmatpush1.msra.mxu0 %v3520
  %3612 = vmatprep.subr.mxu0 0.0
  %3613 = vmatpush1.msra.mxu0 0.0
  %3614 = vmatprep.subr.mxu0 0.0
  %3615 = vmatpush1.msra.mxu0 0.0
  %3616 = vmatprep.subr.mxu0 0.0
  %3617 = vmatpush1.msra.mxu0 0.0
  %3618 = vmatprep.subr.mxu0 0.0
  %3619 = vmatpush1.msra.mxu0 0.0
  %3620 = vmatprep.subr.mxu0 0.0
  %3621 = vmatpush1.msra.mxu0 0.0
  %3622 = vmatprep.subr.mxu0 0.0
  %3623 = vmatpush1.msra.mxu0 0.0
  %3624 = vmatprep.subr.mxu0 0.0
  %3625 = vmatpush1.msra.mxu0 0.0
  %3626 = vmatprep.subr.mxu0 0.0
  %3627 = vmatpush1.msra.mxu0 0.0
  %3628 = vmatprep.subr.mxu0 0.0
  %3629 = vmatpush1.msra.mxu0 0.0
  %3630 = vmatprep.subr.mxu0 0.0
  %3631 = vmatpush1.msra.mxu0 0.0
  %3632 = vmatprep.subr.mxu0 0.0
  %3633 = vmatpush1.msra.mxu0 0.0
  %3634 = vmatprep.subr.mxu0 0.0
  %3635 = vmatpush1.msra.mxu0 0.0
  %3636 = vmatprep.subr.mxu0 0.0
  %3637 = vmatpush1.msra.mxu0 0.0
  %3638 = vmatprep.subr.mxu0 0.0
  %3639 = vmatpush1.msra.mxu0 0.0
  %3640 = vmatprep.subr.mxu0 0.0
  %3641 = vmatpush1.msra.mxu0 0.0
  %3642 = vmatprep.subr.mxu0 0.0
  %3643 = vmatpush1.msra.mxu0 0.0
  %3644 = vmatprep.mubr.f32.mxu0 0.0
  %3645 = vmatmul.mubr.f32.gmra.mrb[0].mxu0 %v3523
  %v3646 = vpop.f32.mrb[0].mxu0
  %v3647 = vadd.f32 %v3543, %v3646
  %v3648 = vpop.f32.mrb[0].mxu0
  %v3649 = vadd.f32 %v3543, %v3648
  %3650 = vmatprep.mubr.f32.mxu0 0.0
  %3651 = vmatmul.mubr.f32.gmra.mrb[0].mxu0 %v3524
  %v3652 = vpop.f32.mrb[0].mxu0
  %v3653 = vadd.f32 %v3548, %v3652
  %v3654 = vpop.f32.mrb[0].mxu0
  %v3655 = vadd.f32 %v3548, %v3654
  %3656 = vmatprep.mubr.f32.mxu0 0.0
  %3657 = vmatmul.mubr.f32.gmra.mrb[0].mxu0 %v3525
  %v3658 = vpop.f32.mrb[0].mxu0
  %v3659 = vadd.f32 %v3553, %v3658
  %v3660 = vpop.f32.mrb[0].mxu0
  %v3661 = vadd.f32 %v3553, %v3660
  %3662 = vmatprep.mubr.f32.mxu0 0.0
  %3663 = vmatmul.mubr.f32.gmra.mrb[0].mxu0 %v3526
  %v3664 = vpop.f32.mrb[0].mxu0
  %v3665 = vadd.f32 %v3558, %v3664
  %v3666 = vpop.f32.mrb[0].mxu0
  %v3667 = vadd.f32 %v3558, %v3666
  %3668 = vmatprep.mubr.f32.mxu0 0.0
  %3669 = vmatmul.mubr.f32.gmra.mrb[0].mxu0 %v3527
  %v3670 = vpop.f32.mrb[0].mxu0
  %v3671 = vadd.f32 %v3563, %v3670
  %v3672 = vpop.f32.mrb[0].mxu0
  %v3673 = vadd.f32 %v3563, %v3672
  %3674 = vmatprep.mubr.f32.mxu0 0.0
  %3675 = vmatmul.mubr.f32.gmra.mrb[0].mxu0 %v3528
  %v3676 = vpop.f32.mrb[0].mxu0
  %v3677 = vadd.f32 %v3568, %v3676
  %v3678 = vpop.f32.mrb[0].mxu0
  %v3679 = vadd.f32 %v3568, %v3678
  %3680 = vmatprep.mubr.f32.mxu0 0.0
  %3681 = vmatmul.mubr.f32.gmra.mrb[0].mxu0 %v3529
  %v3682 = vpop.f32.mrb[0].mxu0
  %v3683 = vadd.f32 %v3573, %v3682
  %v3684 = vpop.f32.mrb[0].mxu0
  %v3685 = vadd.f32 %v3573, %v3684
  %3686 = vmatprep.mubr.f32.mxu0 0.0
  %3687 = vmatmul.mubr.f32.gmra.mrb[0].mxu0 %v3530
  %v3688 = vpop.f32.mrb[0].mxu0
  %v3689 = vadd.f32 %v3578, %v3688
  %v3690 = vpop.f32.mrb[0].mxu0
  %v3691 = vadd.f32 %v3578, %v3690
  %3692 = vdwg.mxu0
  %v3693 = vld [vmem:[%s8] sm:$0xff]
  %v3694 = vld [vmem:[%s8 + $0x8] sm:$0xff]
  %v3695 = vld [vmem:[%s8 + $0x10] sm:$0xff]
  %v3696 = vld [vmem:[%s8 + $0x18] sm:$0xff]
  %v3697 = vld [vmem:[%s8 + $0x20] sm:$0xff]
  %v3698 = vld [vmem:[%s8 + $0x28] sm:$0xff]
  %v3699 = vld [vmem:[%s8 + $0x30] sm:$0xff]
  %v3700 = vld [vmem:[%s8 + $0x38] sm:$0xff]
  %v3701 = vld [vmem:[%s8 + $0x40] sm:$0xff]
  %v3702 = vld [vmem:[%s8 + $0x48] sm:$0xff]
  %v3703 = vld [vmem:[%s8 + $0x50] sm:$0xff]
  %v3704 = vld [vmem:[%s8 + $0x58] sm:$0xff]
  %v3705 = vld [vmem:[%s8 + $0x60] sm:$0xff]
  %v3706 = vld [vmem:[%s8 + $0x68] sm:$0xff]
  %v3707 = vld [vmem:[%s8 + $0x70] sm:$0xff]
  %v3708 = vld [vmem:[%s8 + $0x78] sm:$0xff]
  %v3709 = vld [vmem:[%s8 + $0x80] sm:$0xff]
  %v3710 = vld [vmem:[%s8 + $0x88] sm:$0xff]
  %v3711 = vld [vmem:[%s8 + $0x90] sm:$0xff]
  %v3712 = vld [vmem:[%s8 + $0x98] sm:$0xff]
  %v3713 = vld [vmem:[%s8 + $0xa0] sm:$0xff]
  %v3714 = vld [vmem:[%s8 + $0xa8] sm:$0xff]
  %v3716 = vsel %vm62, %v3694, 0
  %v3719 = vsel %vm62, %v3696, 0
  %v3722 = vsel %vm62, %v3698, 0
  %v3725 = vsel %vm62, %v3700, 0
  %v3728 = vsel %vm62, %v3702, 0
  %v3731 = vsel %vm62, %v3704, 0
  %v3734 = vsel %vm62, %v3706, 0
  %v3737 = vsel %vm62, %v3708, 0
  %v3740 = vsel %vm62, %v3710, 0
  %v3743 = vsel %vm62, %v3712, 0
  %v3746 = vsel %vm62, %v3714, 0
  %3748 = vmatprep.subr.mxu0 %v3649
  %3749 = vmatpush1.msra.mxu0 %v3647
  %3750 = vmatprep.subr.mxu0 %v3655
  %3751 = vmatpush1.msra.mxu0 %v3653
  %3752 = vmatprep.subr.mxu0 %v3661
  %3753 = vmatpush1.msra.mxu0 %v3659
  %3754 = vmatprep.subr.mxu0 %v3667
  %3755 = vmatpush1.msra.mxu0 %v3665
  %3756 = vmatprep.subr.mxu0 %v3673
  %3757 = vmatpush1.msra.mxu0 %v3671
  %3758 = vmatprep.subr.mxu0 %v3679
  %3759 = vmatpush1.msra.mxu0 %v3677
  %3760 = vmatprep.subr.mxu0 %v3685
  %3761 = vmatpush1.msra.mxu0 %v3683
  %3762 = vmatprep.subr.mxu0 %v3691
  %3763 = vmatpush1.msra.mxu0 %v3689
  %3764 = vmatprep.subr.mxu0 %v1824
  %3765 = vmatpush1.msra.mxu0 %v1822
  %3766 = vmatprep.subr.mxu0 %v1830
  %3767 = vmatpush1.msra.mxu0 %v1828
  %3768 = vmatprep.subr.mxu0 %v1836
  %3769 = vmatpush1.msra.mxu0 %v1834
  %3770 = vmatprep.subr.mxu0 %v1842
  %3771 = vmatpush1.msra.mxu0 %v1840
  %3772 = vmatprep.subr.mxu0 %v1848
  %3773 = vmatpush1.msra.mxu0 %v1846
  %3774 = vmatprep.subr.mxu0 %v1854
  %3775 = vmatpush1.msra.mxu0 %v1852
  %3776 = vmatprep.subr.mxu0 %v1860
  %3777 = vmatpush1.msra.mxu0 %v1858
  %3778 = vmatprep.subr.mxu0 %v1866
  %3779 = vmatpush1.msra.mxu0 %v1864
  %3780 = vmatprep.subr.mxu0 %v33
  %3781 = vmatpush1.msra.mxu0 %v32
  %3782 = vmatprep.subr.mxu0 %v35
  %3783 = vmatpush1.msra.mxu0 %v34
  %3784 = vmatprep.subr.mxu0 %v37
  %3785 = vmatpush1.msra.mxu0 %v36
  %3786 = vmatprep.subr.mxu0 %v39
  %3787 = vmatpush1.msra.mxu0 %v38
  %3788 = vmatprep.subr.mxu0 %v41
  %3789 = vmatpush1.msra.mxu0 %v40
  %3790 = vmatprep.subr.mxu0 %v43
  %3791 = vmatpush1.msra.mxu0 %v42
  %3792 = vmatprep.subr.mxu0 %v45
  %3793 = vmatpush1.msra.mxu0 %v44
  %3794 = vmatprep.subr.mxu0 %v47
  %3795 = vmatpush1.msra.mxu0 %v46
  %3796 = vmatprep.subr.mxu0 %v49
  %3797 = vmatpush1.msra.mxu0 %v48
  %3798 = vmatprep.subr.mxu0 %v51
  %3799 = vmatpush1.msra.mxu0 %v50
  %3800 = vmatprep.subr.mxu0 %v53
  %3801 = vmatpush1.msra.mxu0 %v52
  %3802 = vmatprep.subr.mxu0 0.0
  %3803 = vmatpush1.msra.mxu0 0.0
  %3804 = vmatprep.subr.mxu0 0.0
  %3805 = vmatpush1.msra.mxu0 0.0
  %3806 = vmatprep.subr.mxu0 0.0
  %3807 = vmatpush1.msra.mxu0 0.0
  %3808 = vmatprep.subr.mxu0 0.0
  %3809 = vmatpush1.msra.mxu0 0.0
  %3810 = vmatprep.subr.mxu0 0.0
  %3811 = vmatpush1.msra.mxu0 0.0
  %3812 = vmatprep.mubr.f32.mxu0 %v3716
  %3813 = vmatmul.mubr.f32.gmra.mrb[0].mxu0 %v3693
  %v3814 = vpop.f32.mrb[0].mxu0
  %v3815 = vadd.f32 0.0, %v3814
  %v3816 = vpop.f32.mrb[0].mxu0
  %v3817 = vadd.f32 0.0, %v3816
  %3818 = vmatprep.mubr.f32.mxu0 %v3719
  %3819 = vmatmul.mubr.f32.gmra.mrb[0].mxu0 %v3695
  %v3820 = vpop.f32.mrb[0].mxu0
  %v3821 = vadd.f32 0.0, %v3820
  %v3822 = vpop.f32.mrb[0].mxu0
  %v3823 = vadd.f32 0.0, %v3822
  %3824 = vmatprep.mubr.f32.mxu0 %v3722
  %3825 = vmatmul.mubr.f32.gmra.mrb[0].mxu0 %v3697
  %v3826 = vpop.f32.mrb[0].mxu0
  %v3827 = vadd.f32 0.0, %v3826
  %v3828 = vpop.f32.mrb[0].mxu0
  %v3829 = vadd.f32 0.0, %v3828
  %3830 = vmatprep.mubr.f32.mxu0 %v3725
  %3831 = vmatmul.mubr.f32.gmra.mrb[0].mxu0 %v3699
  %v3832 = vpop.f32.mrb[0].mxu0
  %v3833 = vadd.f32 0.0, %v3832
  %v3834 = vpop.f32.mrb[0].mxu0
  %v3835 = vadd.f32 0.0, %v3834
  %3836 = vmatprep.mubr.f32.mxu0 %v3728
  %3837 = vmatmul.mubr.f32.gmra.mrb[0].mxu0 %v3701
  %v3838 = vpop.f32.mrb[0].mxu0
  %v3839 = vadd.f32 0.0, %v3838
  %v3840 = vpop.f32.mrb[0].mxu0
  %v3841 = vadd.f32 0.0, %v3840
  %3842 = vmatprep.mubr.f32.mxu0 %v3731
  %3843 = vmatmul.mubr.f32.gmra.mrb[0].mxu0 %v3703
  %v3844 = vpop.f32.mrb[0].mxu0
  %v3845 = vadd.f32 0.0, %v3844
  %v3846 = vpop.f32.mrb[0].mxu0
  %v3847 = vadd.f32 0.0, %v3846
  %3848 = vmatprep.mubr.f32.mxu0 %v3734
  %3849 = vmatmul.mubr.f32.gmra.mrb[0].mxu0 %v3705
  %v3850 = vpop.f32.mrb[0].mxu0
  %v3851 = vadd.f32 0.0, %v3850
  %v3852 = vpop.f32.mrb[0].mxu0
  %v3853 = vadd.f32 0.0, %v3852
  %3854 = vmatprep.mubr.f32.mxu0 %v3737
  %3855 = vmatmul.mubr.f32.gmra.mrb[0].mxu0 %v3707
  %v3856 = vpop.f32.mrb[0].mxu0
  %v3857 = vadd.f32 0.0, %v3856
  %v3858 = vpop.f32.mrb[0].mxu0
  %v3859 = vadd.f32 0.0, %v3858
  %3860 = vmatprep.mubr.f32.mxu0 %v3740
  %3861 = vmatmul.mubr.f32.gmra.mrb[0].mxu0 %v3709
  %v3862 = vpop.f32.mrb[0].mxu0
  %v3863 = vadd.f32 0.0, %v3862
  %v3864 = vpop.f32.mrb[0].mxu0
  %v3865 = vadd.f32 0.0, %v3864
  %3866 = vmatprep.mubr.f32.mxu0 %v3743
  %3867 = vmatmul.mubr.f32.gmra.mrb[0].mxu0 %v3711
  %v3868 = vpop.f32.mrb[0].mxu0
  %v3869 = vadd.f32 0.0, %v3868
  %v3870 = vpop.f32.mrb[0].mxu0
  %v3871 = vadd.f32 0.0, %v3870
  %3872 = vmatprep.mubr.f32.mxu0 %v3746
  %3873 = vmatmul.mubr.f32.gmra.mrb[0].mxu0 %v3713
  %v3874 = vpop.f32.mrb[0].mxu0
  %v3875 = vadd.f32 0.0, %v3874
  %v3876 = vpop.f32.mrb[0].mxu0
  %v3877 = vadd.f32 0.0, %v3876
  %3878 = vdwg.mxu0
  %3879 = vst [vmem:[%s9] sm:$0xff] %v3815
  %3880 = vst [vmem:[%s9 + $0x8] sm:$0xff] %v3817
  %3881 = vst [vmem:[%s9 + $0x10] sm:$0xff] %v3821
  %3882 = vst [vmem:[%s9 + $0x18] sm:$0xff] %v3823
  %3883 = vst [vmem:[%s9 + $0x20] sm:$0xff] %v3827
  %3884 = vst [vmem:[%s9 + $0x28] sm:$0xff] %v3829
  %3885 = vst [vmem:[%s9 + $0x30] sm:$0xff] %v3833
  %3886 = vst [vmem:[%s9 + $0x38] sm:$0xff] %v3835
  %3887 = vst [vmem:[%s9 + $0x40] sm:$0xff] %v3839
  %3888 = vst [vmem:[%s9 + $0x48] sm:$0xff] %v3841
  %3889 = vst [vmem:[%s9 + $0x50] sm:$0xff] %v3845
  %3890 = vst [vmem:[%s9 + $0x58] sm:$0xff] %v3847
  %3891 = vst [vmem:[%s9 + $0x60] sm:$0xff] %v3851
  %3892 = vst [vmem:[%s9 + $0x68] sm:$0xff] %v3853
  %3893 = vst [vmem:[%s9 + $0x70] sm:$0xff] %v3857
  %3894 = vst [vmem:[%s9 + $0x78] sm:$0xff] %v3859
  %3895 = vst [vmem:[%s9 + $0x80] sm:$0xff] %v3863
  %3896 = vst [vmem:[%s9 + $0x88] sm:$0xff] %v3865
  %3897 = vst [vmem:[%s9 + $0x90] sm:$0xff] %v3869
  %3898 = vst [vmem:[%s9 + $0x98] sm:$0xff] %v3871
  %3899 = vst [vmem:[%s9 + $0xa0] sm:$0xff] %v3875
  %3900 = vst [vmem:[%s9 + $0xa8] sm:$0xff] %v3877
  // Predicated region
  $region38: #{encoder_tree_forward.1} parent=0 // pred_check
    _
  $region39: #{encoder_tree_forward.1} parent=0 // pred_check_branch
    %3902 = sbr.rel (0) target = $region41
  $region40: #{encoder_tree_forward.1} parent=0 // pred_region
    _
  $region41: #{encoder_tree_forward.1} parent=0 // pred_fallthru
    _
  // Predicated region
  $region42: #{encoder_tree_forward.1} parent=0 // pred_check
    _
  $region43: #{encoder_tree_forward.1} parent=0 // pred_check_branch
    %3904 = sbr.rel (0) target = $region45
  $region44: #{encoder_tree_forward.1} parent=0 // pred_region
    _
  $region45: #{encoder_tree_forward.1} parent=0 // pred_fallthru
    _

</llo_original>
